<compile_context>
chip_gen: v6e
topology: v6e:2x2x1
jax: 0.10.0
libtpu: 0.0.40
codegen_flags: <defaults>
</compile_context>

<pallas_src>
import jax
import jax.numpy as jnp
from jax import lax
from jax.experimental import pallas as pl
from jax.experimental.pallas import tpu as pltpu

N, C_IN, H, W = 2, 512, 7, 7
C_MID = 2048
C_OUT = 1000
EPS = 1e-5
HW = H * W
ROWS = N * HW            # 98 "pixel" rows
TILE_C = 512             # channel tile of C_MID -> 4 grid steps
INV_ROWS = 1.0 / ROWS


def mini50_fused_kernel(x_ref, w_ref, g_ref, b_ref, p_ref, fcw_ref, fcb_ref, o_ref):
    # x_ref:   (ROWS, C_IN)      pixel matrix (resident across the grid)
    # w_ref:   (TILE_C, C_IN)    conv weight slice, native (O, I) layout
    # g_ref:   (1, TILE_C)       BN gamma slice
    # b_ref:   (1, TILE_C)       BN beta slice
    # p_ref:   (N, ROWS)         avg-pool matrix (resident)
    # fcw_ref: (C_OUT, TILE_C)   FC weight slice, native (out, in) layout
    # fcb_ref: (1, C_OUT)        FC bias (resident)
    # o_ref:   (N, C_OUT)        output block, doubles as the FC accumulator
    j = pl.program_id(0)

    @pl.when(j == 0)
    def _():
        o_ref[...] = jnp.zeros_like(o_ref)

    # 1x1 conv == matmul; contract on the rhs minor dim (weight is (O, I)).
    y = lax.dot_general(
        x_ref[...], w_ref[...],
        dimension_numbers=(((1,), (1,)), ((), ())),
        preferred_element_type=jnp.float32,
    )  # (ROWS, TILE_C)

    # BatchNorm2d, training-mode batch statistics over N*H*W, one pass:
    s1 = jnp.sum(y, axis=0, keepdims=True)        # (1, TILE_C)
    s2 = jnp.sum(y * y, axis=0, keepdims=True)    # (1, TILE_C)
    mean = s1 * INV_ROWS
    var = s2 * INV_ROWS - mean * mean             # biased variance
    scale = g_ref[...] * lax.rsqrt(var + EPS)
    shift = b_ref[...] - mean * scale
    y = jnp.maximum(y * scale + shift, 0.0)       # folded BN affine + ReLU

    # AvgPool2d(7) over the 7x7 extent: (N, ROWS) @ (ROWS, TILE_C) -> (N, TILE_C)
    pooled = jnp.dot(p_ref[...], y, preferred_element_type=jnp.float32)

    # FC partial product for this channel tile (fc_w is (out, in)): contract TILE_C.
    o_ref[...] += lax.dot_general(
        pooled, fcw_ref[...],
        dimension_numbers=(((1,), (1,)), ((), ())),
        preferred_element_type=jnp.float32,
    )  # (N, C_OUT)

    @pl.when(j == pl.num_programs(0) - 1)
    def _():
        o_ref[...] = o_ref[...] + fcb_ref[...]


@jax.jit
def mini50_forward(x_nchw, conv_w, bn_gamma, bn_beta, fc_w, fc_b):
    # NCHW -> NHWC -> (N*H*W, C_IN) pixel matrix (input is only ~200 KiB).
    x_rows = jnp.transpose(x_nchw, (0, 2, 3, 1)).reshape(ROWS, C_IN)
    w_conv = conv_w.reshape(C_MID, C_IN)       # free reshape, keeps native (O, I)
    gamma = bn_gamma.reshape(1, C_MID)
    beta = bn_beta.reshape(1, C_MID)
    fcb = fc_b.reshape(1, C_OUT)

    # Pooling matrix: row n averages the HW pixels belonging to batch element n.
    row_batch = jnp.arange(ROWS, dtype=jnp.int32) // HW
    pmat = (jnp.arange(N, dtype=jnp.int32)[:, None] == row_batch[None, :]).astype(
        jnp.float32
    ) * (1.0 / HW)                             # (N, ROWS), tiny constant

    return pl.pallas_call(
        mini50_fused_kernel,
        out_shape=jax.ShapeDtypeStruct((N, C_OUT), jnp.float32),
        grid=(C_MID // TILE_C,),
        in_specs=[
            pl.BlockSpec((ROWS, C_IN), lambda j: (0, 0)),     # x (resident)
            pl.BlockSpec((TILE_C, C_IN), lambda j: (j, 0)),   # conv weight stream
            pl.BlockSpec((1, TILE_C), lambda j: (0, j)),      # gamma slice
            pl.BlockSpec((1, TILE_C), lambda j: (0, j)),      # beta slice
            pl.BlockSpec((N, ROWS), lambda j: (0, 0)),        # pool matrix (resident)
            pl.BlockSpec((C_OUT, TILE_C), lambda j: (0, j)),  # fc weight stream
            pl.BlockSpec((1, C_OUT), lambda j: (0, 0)),       # fc bias (resident)
        ],
        out_specs=pl.BlockSpec((N, C_OUT), lambda j: (0, 0)), # resident accumulator
        compiler_params=pltpu.CompilerParams(
            dimension_semantics=("arbitrary",),               # C_MID is a reduction
        ),
    )(x_rows, w_conv, gamma, beta, pmat, fc_w, fcb)


def mini50_reference(x_nchw, conv_w, bn_gamma, bn_beta, fc_w, fc_b):
    # Pure-JAX reference of the same semantics, for a sanity check.
    y = jnp.einsum("nchw,oc->nohw", x_nchw, conv_w.reshape(C_MID, C_IN))
    mean = jnp.mean(y, axis=(0, 2, 3), keepdims=True)
    var = jnp.mean((y - mean) ** 2, axis=(0, 2, 3), keepdims=True)
    y = (y - mean) / jnp.sqrt(var + EPS)
    y = y * bn_gamma[None, :, None, None] + bn_beta[None, :, None, None]
    y = jnp.maximum(y, 0.0)
    y = jnp.mean(y, axis=(2, 3))               # AvgPool2d(7) on 7x7 -> (N, C_MID)
    return y @ fc_w.T + fc_b


if __name__ == "__main__":
    key = jax.random.PRNGKey(0)
    k_x, k_cw, k_g, k_b, k_fw, k_fb = jax.random.split(key, 6)

    x = jax.random.normal(k_x, (N, C_IN, H, W), dtype=jnp.float32)
    conv_w = jax.random.normal(k_cw, (C_MID, C_IN, 1, 1), dtype=jnp.float32) * 0.02
    bn_gamma = 1.0 + 0.1 * jax.random.normal(k_g, (C_MID,), dtype=jnp.float32)
    bn_beta = 0.1 * jax.random.normal(k_b, (C_MID,), dtype=jnp.float32)
    fc_w = jax.random.normal(k_fw, (C_OUT, C_MID), dtype=jnp.float32) * 0.02
    fc_b = 0.1 * jax.random.normal(k_fb, (C_OUT,), dtype=jnp.float32)

    out = mini50_forward(x, conv_w, bn_gamma, bn_beta, fc_w, fc_b)
    out = jax.block_until_ready(out)
    assert out.shape == (N, C_OUT) and out.dtype == jnp.float32

    ref = mini50_reference(x, conv_w, bn_gamma, bn_beta, fc_w, fc_b)
    assert jnp.allclose(out, ref, rtol=2e-3, atol=2e-3), "mismatch vs JAX reference"

    print("KERNEL_OK")
</pallas_src>

<mosaic_0001>
module attributes {stable_mosaic.version = 11 : i64} {
  func.func @mini50_fused_kernel(%arg0: i32, %arg1: memref<98x512xf32, #tpu.memory_space<vmem>>, %arg2: memref<512x512xf32, #tpu.memory_space<vmem>>, %arg3: memref<1x512xf32, #tpu.memory_space<vmem>>, %arg4: memref<1x512xf32, #tpu.memory_space<vmem>>, %arg5: memref<2x98xf32, #tpu.memory_space<vmem>>, %arg6: memref<1000x512xf32, #tpu.memory_space<vmem>>, %arg7: memref<1x1000xf32, #tpu.memory_space<vmem>>, %arg8: memref<2x1000xf32, #tpu.memory_space<vmem>>) attributes {dimension_semantics = [#tpu.dimension_semantics<arbitrary>], iteration_bounds = array<i64: 4>, scalar_prefetch = 0 : i64, scratch_operands = 0 : i64, tpu.core_type = #tpu.core_type<tc>, window_params = [{pipeline_mode = #tpu.pipeline_mode<synchronous>, transform_indices = @transform_0, window_bounds = array<i64: 98, 512>}, {transform_indices = @transform_1, window_bounds = array<i64: 512, 512>}, {transform_indices = @transform_2, window_bounds = array<i64: 1, 512>}, {transform_indices = @transform_3, window_bounds = array<i64: 1, 512>}, {pipeline_mode = #tpu.pipeline_mode<synchronous>, transform_indices = @transform_4, window_bounds = array<i64: 2, 98>}, {transform_indices = @transform_5, window_bounds = array<i64: 1000, 512>}, {pipeline_mode = #tpu.pipeline_mode<synchronous>, transform_indices = @transform_6, window_bounds = array<i64: 1, 1000>}, {pipeline_mode = #tpu.pipeline_mode<synchronous>, transform_indices = @transform_7, window_bounds = array<i64: 2, 1000>}]} {
    %c0_i32 = arith.constant 0 : i32
    %0 = arith.cmpi eq, %arg0, %c0_i32 : i32
    %1 = arith.extui %0 : i1 to i32
    %c0_i32_0 = arith.constant 0 : i32
    %2 = arith.cmpi ne, %1, %c0_i32_0 : i32
    scf.if %2 {
      %cst_25 = arith.constant 0.000000e+00 : f32
      %41 = vector.broadcast %cst_25 : f32 to vector<2x1000xf32>
      %c0_26 = arith.constant 0 : index
      %c0_27 = arith.constant 0 : index
      %42 = vector.load %arg8[%c0_26, %c0_27] : memref<2x1000xf32, #tpu.memory_space<vmem>>, vector<2x1000xf32>
      tpu.vector_store %arg8[%c0_26, %c0_27], %41 {strides = array<i32>} : memref<2x1000xf32, #tpu.memory_space<vmem>>, vector<2x1000xf32>,
    } else {
    }
    %c0 = arith.constant 0 : index
    %c0_1 = arith.constant 0 : index
    %3 = vector.load %arg1[%c0, %c0_1] : memref<98x512xf32, #tpu.memory_space<vmem>>, vector<98x512xf32>
    %c0_2 = arith.constant 0 : index
    %c0_3 = arith.constant 0 : index
    %4 = vector.load %arg2[%c0_2, %c0_3] : memref<512x512xf32, #tpu.memory_space<vmem>>, vector<512x512xf32>
    %cst = arith.constant dense<0.000000e+00> : vector<98x512xf32>
    %5 = tpu.matmul %3, %4, %cst {dimension_numbers = #tpu.dot_dimension_numbers<[1], [1], [0], [0], [0, 0, 1, 0], [], []>} : vector<98x512xf32>, vector<512x512xf32>, vector<98x512xf32> -> vector<98x512xf32>
    %cst_4 = arith.constant dense<0.000000e+00> : vector<512xf32>
    %6 = vector.multi_reduction <add>, %5, %cst_4 [0] : vector<98x512xf32> to vector<512xf32>
    %7 = vector.shape_cast %6 : vector<512xf32> to vector<1x512xf32>
    %8 = arith.mulf %5, %5 : vector<98x512xf32>
    %cst_5 = arith.constant dense<0.000000e+00> : vector<512xf32>
    %9 = vector.multi_reduction <add>, %8, %cst_5 [0] : vector<98x512xf32> to vector<512xf32>
    %10 = vector.shape_cast %9 : vector<512xf32> to vector<1x512xf32>
    %cst_6 = arith.constant 0.0102040814 : f32
    %11 = vector.broadcast %cst_6 : f32 to vector<1x512xf32>
    %12 = arith.mulf %7, %11 : vector<1x512xf32>
    %cst_7 = arith.constant 0.0102040814 : f32
    %13 = vector.broadcast %cst_7 : f32 to vector<1x512xf32>
    %14 = arith.mulf %10, %13 : vector<1x512xf32>
    %15 = arith.mulf %12, %12 : vector<1x512xf32>
    %16 = arith.subf %14, %15 : vector<1x512xf32>
    %c0_8 = arith.constant 0 : index
    %c0_9 = arith.constant 0 : index
    %17 = vector.load %arg3[%c0_8, %c0_9] : memref<1x512xf32, #tpu.memory_space<vmem>>, vector<1x512xf32>
    %cst_10 = arith.constant 9.99999974E-6 : f32
    %18 = vector.broadcast %cst_10 : f32 to vector<1x512xf32>
    %19 = arith.addf %16, %18 : vector<1x512xf32>
    %20 = math.rsqrt %19 : vector<1x512xf32>
    %21 = arith.mulf %17, %20 : vector<1x512xf32>
    %c0_11 = arith.constant 0 : index
    %c0_12 = arith.constant 0 : index
    %22 = vector.load %arg4[%c0_11, %c0_12] : memref<1x512xf32, #tpu.memory_space<vmem>>, vector<1x512xf32>
    %23 = arith.mulf %12, %21 : vector<1x512xf32>
    %24 = arith.subf %22, %23 : vector<1x512xf32>
    %25 = vector.broadcast %21 : vector<1x512xf32> to vector<98x512xf32>
    %26 = arith.mulf %5, %25 : vector<98x512xf32>
    %27 = vector.broadcast %24 : vector<1x512xf32> to vector<98x512xf32>
    %28 = arith.addf %26, %27 : vector<98x512xf32>
    %cst_13 = arith.constant 0.000000e+00 : f32
    %29 = vector.broadcast %cst_13 : f32 to vector<98x512xf32>
    %30 = arith.maximumf %28, %29 : vector<98x512xf32>
    %c0_14 = arith.constant 0 : index
    %c0_15 = arith.constant 0 : index
    %31 = vector.load %arg5[%c0_14, %c0_15] : memref<2x98xf32, #tpu.memory_space<vmem>>, vector<2x98xf32>
    %cst_16 = arith.constant dense<0.000000e+00> : vector<2x512xf32>
    %32 = tpu.matmul %31, %30, %cst_16 {dimension_numbers = #tpu.dot_dimension_numbers<[1], [0], [0], [1], [0, 0, 1, 1], [], []>} : vector<2x98xf32>, vector<98x512xf32>, vector<2x512xf32> -> vector<2x512xf32>
    %c0_17 = arith.constant 0 : index
    %c0_18 = arith.constant 0 : index
    %33 = vector.load %arg8[%c0_17, %c0_18] : memref<2x1000xf32, #tpu.memory_space<vmem>>, vector<2x1000xf32>
    %c0_19 = arith.constant 0 : index
    %c0_20 = arith.constant 0 : index
    %34 = vector.load %arg6[%c0_19, %c0_20] : memref<1000x512xf32, #tpu.memory_space<vmem>>, vector<1000x512xf32>
    %cst_21 = arith.constant dense<0.000000e+00> : vector<2x1000xf32>
    %35 = tpu.matmul %32, %34, %cst_21 {dimension_numbers = #tpu.dot_dimension_numbers<[1], [1], [0], [0], [0, 0, 1, 0], [], []>} : vector<2x512xf32>, vector<1000x512xf32>, vector<2x1000xf32> -> vector<2x1000xf32>
    %36 = arith.addf %33, %35 : vector<2x1000xf32>
    %c0_22 = arith.constant 0 : index
    %c0_23 = arith.constant 0 : index
    %37 = vector.load %arg8[%c0_22, %c0_23] : memref<2x1000xf32, #tpu.memory_space<vmem>>, vector<2x1000xf32>
    tpu.vector_store %arg8[%c0_22, %c0_23], %36 {strides = array<i32>} : memref<2x1000xf32, #tpu.memory_space<vmem>>, vector<2x1000xf32>,
    %c3_i32 = arith.constant 3 : i32
    %38 = arith.cmpi eq, %arg0, %c3_i32 : i32
    %39 = arith.extui %38 : i1 to i32
    %c0_i32_24 = arith.constant 0 : i32
    %40 = arith.cmpi ne, %39, %c0_i32_24 : i32
    scf.if %40 {
      %c0_25 = arith.constant 0 : index
      %c0_26 = arith.constant 0 : index
      %41 = vector.load %arg8[%c0_25, %c0_26] : memref<2x1000xf32, #tpu.memory_space<vmem>>, vector<2x1000xf32>
      %c0_27 = arith.constant 0 : index
      %c0_28 = arith.constant 0 : index
      %42 = vector.load %arg7[%c0_27, %c0_28] : memref<1x1000xf32, #tpu.memory_space<vmem>>, vector<1x1000xf32>
      %43 = vector.broadcast %42 : vector<1x1000xf32> to vector<2x1000xf32>
      %44 = arith.addf %41, %43 : vector<2x1000xf32>
      %c0_29 = arith.constant 0 : index
      %c0_30 = arith.constant 0 : index
      %45 = vector.load %arg8[%c0_29, %c0_30] : memref<2x1000xf32, #tpu.memory_space<vmem>>, vector<2x1000xf32>
      tpu.vector_store %arg8[%c0_29, %c0_30], %44 {strides = array<i32>} : memref<2x1000xf32, #tpu.memory_space<vmem>>, vector<2x1000xf32>,
    } else {
    }
    return
  }
  func.func @transform_0(%arg0: i32) -> (i32, i32) {
    %c0_i32 = arith.constant 0 : i32
    %c0_i32_0 = arith.constant 0 : i32
    %c0_i32_1 = arith.constant 0 : i32
    return %c0_i32, %c0_i32_0 : i32, i32
  }
  func.func @transform_1(%arg0: i32) -> (i32, i32) {
    %c0_i32 = arith.constant 0 : i32
    %c0_i32_0 = arith.constant 0 : i32
    return %arg0, %c0_i32 : i32, i32
  }
  func.func @transform_2(%arg0: i32) -> (i32, i32) {
    %c0_i32 = arith.constant 0 : i32
    %c0_i32_0 = arith.constant 0 : i32
    return %c0_i32, %arg0 : i32, i32
  }
  func.func @transform_3(%arg0: i32) -> (i32, i32) {
    %c0_i32 = arith.constant 0 : i32
    %c0_i32_0 = arith.constant 0 : i32
    return %c0_i32, %arg0 : i32, i32
  }
  func.func @transform_4(%arg0: i32) -> (i32, i32) {
    %c0_i32 = arith.constant 0 : i32
    %c0_i32_0 = arith.constant 0 : i32
    %c0_i32_1 = arith.constant 0 : i32
    return %c0_i32, %c0_i32_0 : i32, i32
  }
  func.func @transform_5(%arg0: i32) -> (i32, i32) {
    %c0_i32 = arith.constant 0 : i32
    %c0_i32_0 = arith.constant 0 : i32
    return %c0_i32, %arg0 : i32, i32
  }
  func.func @transform_6(%arg0: i32) -> (i32, i32) {
    %c0_i32 = arith.constant 0 : i32
    %c0_i32_0 = arith.constant 0 : i32
    %c0_i32_1 = arith.constant 0 : i32
    return %c0_i32, %c0_i32_0 : i32, i32
  }
  func.func @transform_7(%arg0: i32) -> (i32, i32) {
    %c0_i32 = arith.constant 0 : i32
    %c0_i32_0 = arith.constant 0 : i32
    %c0_i32_1 = arith.constant 0 : i32
    return %c0_i32, %c0_i32_0 : i32, i32
  }
}

</mosaic_0001>

<llo_original>
// kernel: mini50_forward.1
$region0: #{mini50_forward.1}
  #allocation0 [shape = 'u32[]', space=smem, size = 0x4, offset = 0x4, fixed_abs, tag = 'smem constant byte address 0x4 - core index']
  #allocation1 [shape = 'u32[144,128]{1,0:T(1,128)}', space=vmem, size = 0x12000, scoped, tag = 'internal scratch']
  %s0 = inlined_call_operand.vmem [shape: f32[98,512], index: 0, kind: input, shape index: {}]
  %s1 = inlined_call_operand.vmem [shape: f32[2048,512], index: 1, kind: input, shape index: {}]
  %s2 = inlined_call_operand.vmem [shape: f32[1,2048], index: 2, kind: input, shape index: {}]
  %s3 = inlined_call_operand.vmem [shape: f32[1,2048], index: 3, kind: input, shape index: {}]
  %s4 = inlined_call_operand.vmem [shape: f32[2,98], index: 4, kind: input, shape index: {}]
  %s5 = inlined_call_operand.vmem [shape: f32[1000,2048], index: 5, kind: input, shape index: {}]
  %s6 = inlined_call_operand.vmem [shape: f32[1,1000], index: 6, kind: input, shape index: {}]
  %s7 = inlined_call_operand.hbm [shape: f32[2,1000], index: 7, kind: output, shape index: {}]
  %s8 = sld [smem:[#allocation0]]
  $region92: #{mini50_forward.1} parent=0
    _
  %s10 = ssub.s32 1, %s8
  %s11 = scalar_select 0, %s10, %s8
  $region1: #{mini50_forward.1} parent=0
    #allocation2 [shape = 'u8[4096000]{0}', space=vmem, size = 0x3e8000, scoped, tag = 'input window, operand 5']
    #allocation3 [shape = 'u8[8192]{0}', space=vmem, size = 0x2000, scoped, tag = 'output window, operand 0, single buffered']
    #allocation4 [shape = 's32[2]{0}', space=sflag, size = 0x8, scoped, tag = 'scoped memory for mini50_forward.1']
    %12 = vsyncpa [#allocation4], 0
    loop: start=0, step=1, limit=6
    $region2: #{mini50_forward.1} parent=1 // loop_pre_header
      _
    $region3: #{mini50_forward.1} parent=1 // loop_header
      %s14 = sphi 0, %s18
      %p15 = scmp.ge.s32.totalorder %s14, 6
      %s22 = sphi 0, %s22
      %s24 = sphi 0, %s22
      %s25 = sphi 0, %s24
      %s39 = sphi 0, %s25
      %s45 = sphi 0, %s47
      %s48 = sphi 0, %s45
      %s49 = sphi 0, %s48
      %s65 = sphi 0, %s49
      %s71 = sphi 0, %s73
      %s74 = sphi 0, %s71
      %s75 = sphi 0, %s74
      %s91 = sphi 0, %s75
      %s97 = sphi 0, %s99
      %s100 = sphi 0, %s97
      %s101 = sphi 0, %s100
      %s117 = sphi 0, %s101
      %s121 = sphi 0, %s121
      %s123 = sphi 0, %s121
      %s124 = sphi 0, %s123
      %s138 = sphi 0, %s124
      %s144 = sphi 0, %s146
      %s147 = sphi 0, %s144
      %s148 = sphi 0, %s147
      %s164 = sphi 0, %s148
      %s168 = sphi 0, %s168
      %s170 = sphi 0, %s168
      %s171 = sphi 0, %s170
      %s185 = sphi 0, %s171
      %s189 = sphi 0, %s189
      %s191 = sphi 0, %s189
      %s192 = sphi 0, %s191
      %s206 = sphi 0, %s192
    $region4: #{mini50_forward.1} parent=1 // loop_header_branch
      %17 = sbr.rel (%p15) target = $region8
    $region5: #{mini50_forward.1} parent=1 // loop_body
      %s19 = ssub.s32 %s14, 1
      %s20 = ssub.s32 %s14, 2
      %s21 = sadd.s32 %s14, 1
      %s23 = sadd.s32 %s22, 1
      %p26 = scmp.eq.s32.totalorder %s14, 3
      %p27 = scmp.ne.s32.totalorder %s22, %s24
      %p28 = scmp.eq.s32.totalorder %s14, 0
      %p29 = por %p27, %p28
      %p30 = scmp.ne.s32.totalorder %s22, %s24
      %p31 = scmp.eq.s32.totalorder %s19, 3
      %p32 = por %p30, %p31
      %p33 = scmp.ne.s32.totalorder %s24, %s25
      %p34 = scmp.eq.s32.totalorder %s19, 0
      %p35 = por %p33, %p34
      %p36 = scmp.ne.s32.totalorder %s24, %s25
      %p37 = scmp.eq.s32.totalorder %s20, 3
      %p38 = por %p36, %p37
      %p40 = scmp.ne.s32.totalorder %s25, %s39
      %p41 = scmp.eq.s32.totalorder %s20, 0
      %p42 = por %p40, %p41
      %s43 = ssub.s32 %s14, %s21
      %p44 = scmp.eq.s32.totalorder %s43, 0
      %s46 = sadd.s32 %s45, 1
      %s47 = scalar_select %p44, %s45, %s46
      %p50 = pneg %p44
      %p51 = scmp.eq.s32.totalorder %s14, 3
      %p52 = por %p50, %p51
      %p53 = scmp.ne.s32.totalorder %s45, %s48
      %p54 = scmp.eq.s32.totalorder %s14, 0
      %p55 = por %p53, %p54
      %p56 = scmp.ne.s32.totalorder %s45, %s48
      %p57 = scmp.eq.s32.totalorder %s19, 3
      %p58 = por %p56, %p57
      %p59 = scmp.ne.s32.totalorder %s48, %s49
      %p60 = scmp.eq.s32.totalorder %s19, 0
      %p61 = por %p59, %p60
      %p62 = scmp.ne.s32.totalorder %s48, %s49
      %p63 = scmp.eq.s32.totalorder %s20, 3
      %p64 = por %p62, %p63
      %p66 = scmp.ne.s32.totalorder %s49, %s65
      %p67 = scmp.eq.s32.totalorder %s20, 0
      %p68 = por %p66, %p67
      %s69 = ssub.s32 %s14, %s21
      %p70 = scmp.eq.s32.totalorder %s69, 0
      %s72 = sadd.s32 %s71, 1
      %s73 = scalar_select %p70, %s71, %s72
      %p76 = pneg %p70
      %p77 = scmp.eq.s32.totalorder %s14, 3
      %p78 = por %p76, %p77
      %p79 = scmp.ne.s32.totalorder %s71, %s74
      %p80 = scmp.eq.s32.totalorder %s14, 0
      %p81 = por %p79, %p80
      %p82 = scmp.ne.s32.totalorder %s71, %s74
      %p83 = scmp.eq.s32.totalorder %s19, 3
      %p84 = por %p82, %p83
      %p85 = scmp.ne.s32.totalorder %s74, %s75
      %p86 = scmp.eq.s32.totalorder %s19, 0
      %p87 = por %p85, %p86
      %p88 = scmp.ne.s32.totalorder %s74, %s75
      %p89 = scmp.eq.s32.totalorder %s20, 3
      %p90 = por %p88, %p89
      %p92 = scmp.ne.s32.totalorder %s75, %s91
      %p93 = scmp.eq.s32.totalorder %s20, 0
      %p94 = por %p92, %p93
      %s95 = ssub.s32 %s14, %s21
      %p96 = scmp.eq.s32.totalorder %s95, 0
      %s98 = sadd.s32 %s97, 1
      %s99 = scalar_select %p96, %s97, %s98
      %p102 = pneg %p96
      %p103 = scmp.eq.s32.totalorder %s14, 3
      %p104 = por %p102, %p103
      %p105 = scmp.ne.s32.totalorder %s97, %s100
      %p106 = scmp.eq.s32.totalorder %s14, 0
      %p107 = por %p105, %p106
      %p108 = scmp.ne.s32.totalorder %s97, %s100
      %p109 = scmp.eq.s32.totalorder %s19, 3
      %p110 = por %p108, %p109
      %p111 = scmp.ne.s32.totalorder %s100, %s101
      %p112 = scmp.eq.s32.totalorder %s19, 0
      %p113 = por %p111, %p112
      %p114 = scmp.ne.s32.totalorder %s100, %s101
      %p115 = scmp.eq.s32.totalorder %s20, 3
      %p116 = por %p114, %p115
      %p118 = scmp.ne.s32.totalorder %s101, %s117
      %p119 = scmp.eq.s32.totalorder %s20, 0
      %p120 = por %p118, %p119
      %s122 = sadd.s32 %s121, 1
      %p125 = scmp.eq.s32.totalorder %s14, 3
      %p126 = scmp.ne.s32.totalorder %s121, %s123
      %p127 = scmp.eq.s32.totalorder %s14, 0
      %p128 = por %p126, %p127
      %p129 = scmp.ne.s32.totalorder %s121, %s123
      %p130 = scmp.eq.s32.totalorder %s19, 3
      %p131 = por %p129, %p130
      %p132 = scmp.ne.s32.totalorder %s123, %s124
      %p133 = scmp.eq.s32.totalorder %s19, 0
      %p134 = por %p132, %p133
      %p135 = scmp.ne.s32.totalorder %s123, %s124
      %p136 = scmp.eq.s32.totalorder %s20, 3
      %p137 = por %p135, %p136
      %p139 = scmp.ne.s32.totalorder %s124, %s138
      %p140 = scmp.eq.s32.totalorder %s20, 0
      %p141 = por %p139, %p140
      %s142 = ssub.s32 %s14, %s21
      %p143 = scmp.eq.s32.totalorder %s142, 0
      %s145 = sadd.s32 %s144, 1
      %s146 = scalar_select %p143, %s144, %s145
      %p149 = pneg %p143
      %p150 = scmp.eq.s32.totalorder %s14, 3
      %p151 = por %p149, %p150
      %p152 = scmp.ne.s32.totalorder %s144, %s147
      %p153 = scmp.eq.s32.totalorder %s14, 0
      %p154 = por %p152, %p153
      %p155 = scmp.ne.s32.totalorder %s144, %s147
      %p156 = scmp.eq.s32.totalorder %s19, 3
      %p157 = por %p155, %p156
      %p158 = scmp.ne.s32.totalorder %s147, %s148
      %p159 = scmp.eq.s32.totalorder %s19, 0
      %p160 = por %p158, %p159
      %p161 = scmp.ne.s32.totalorder %s147, %s148
      %p162 = scmp.eq.s32.totalorder %s20, 3
      %p163 = por %p161, %p162
      %p165 = scmp.ne.s32.totalorder %s148, %s164
      %p166 = scmp.eq.s32.totalorder %s20, 0
      %p167 = por %p165, %p166
      %s169 = sadd.s32 %s168, 1
      %p172 = scmp.eq.s32.totalorder %s14, 3
      %p173 = scmp.ne.s32.totalorder %s168, %s170
      %p174 = scmp.eq.s32.totalorder %s14, 0
      %p175 = por %p173, %p174
      %p176 = scmp.ne.s32.totalorder %s168, %s170
      %p177 = scmp.eq.s32.totalorder %s19, 3
      %p178 = por %p176, %p177
      %p179 = scmp.ne.s32.totalorder %s170, %s171
      %p180 = scmp.eq.s32.totalorder %s19, 0
      %p181 = por %p179, %p180
      %p182 = scmp.ne.s32.totalorder %s170, %s171
      %p183 = scmp.eq.s32.totalorder %s20, 3
      %p184 = por %p182, %p183
      %p186 = scmp.ne.s32.totalorder %s171, %s185
      %p187 = scmp.eq.s32.totalorder %s20, 0
      %p188 = por %p186, %p187
      %s190 = sadd.s32 %s189, 1
      %p193 = scmp.eq.s32.totalorder %s14, 3
      %p194 = scmp.ne.s32.totalorder %s189, %s191
      %p195 = scmp.eq.s32.totalorder %s14, 0
      %p196 = por %p194, %p195
      %p197 = scmp.ne.s32.totalorder %s189, %s191
      %p198 = scmp.eq.s32.totalorder %s19, 3
      %p199 = por %p197, %p198
      %p200 = scmp.ne.s32.totalorder %s191, %s192
      %p201 = scmp.eq.s32.totalorder %s19, 0
      %p202 = por %p200, %p201
      %p203 = scmp.ne.s32.totalorder %s191, %s192
      %p204 = scmp.eq.s32.totalorder %s20, 3
      %p205 = por %p203, %p204
      %p207 = scmp.ne.s32.totalorder %s192, %s206
      %p208 = scmp.eq.s32.totalorder %s20, 0
      %p209 = por %p207, %p208
      %p210 = scmp.le.s32.totalorder 1, %s14
      %p211 = scmp.lt.s32.totalorder %s14, 5
      %p212 = pnand %p210, %p211
      %p213 = pneg %p212
      // Predicated region
      $region9: #{mini50_forward.1} parent=5 // pred_check
        _
      $region10: #{mini50_forward.1} parent=5 // pred_check_branch
        %215 = sbr.rel (%p212) target = $region12
      $region11: #{mini50_forward.1} parent=5 // pred_region
        %s216 = ssub.s32 %s14, 1
        // Predicated region
        $region13: #{mini50_forward.1} parent=11 // pred_check
          %p217 = pneg %p35
        $region14: #{mini50_forward.1} parent=11 // pred_check_branch
          %219 = sbr.rel (%p217) target = $region16
        $region15: #{mini50_forward.1} parent=11 // pred_region
          _
        $region16: #{mini50_forward.1} parent=11 // pred_fallthru
          _
        // Predicated region
        $region17: #{mini50_forward.1} parent=11 // pred_check
          %p220 = pneg %p134
        $region18: #{mini50_forward.1} parent=11 // pred_check_branch
          %222 = sbr.rel (%p220) target = $region20
        $region19: #{mini50_forward.1} parent=11 // pred_region
          _
        $region20: #{mini50_forward.1} parent=11 // pred_fallthru
          _
        // Predicated region
        $region21: #{mini50_forward.1} parent=11 // pred_check
          %p223 = pneg %p181
        $region22: #{mini50_forward.1} parent=11 // pred_check_branch
          %225 = sbr.rel (%p223) target = $region24
        $region23: #{mini50_forward.1} parent=11 // pred_region
          _
        $region24: #{mini50_forward.1} parent=11 // pred_fallthru
          _
      $region12: #{mini50_forward.1} parent=5 // pred_fallthru
        _
      %p226 = scmp.lt.s32.totalorder %s14, 4
      // Predicated region
      $region25: #{mini50_forward.1} parent=5 // pred_check
        %p227 = pneg %p226
      $region26: #{mini50_forward.1} parent=5 // pred_check_branch
        %229 = sbr.rel (%p227) target = $region28
      $region27: #{mini50_forward.1} parent=5 // pred_region
        // Predicated region
        $region29: #{mini50_forward.1} parent=27 // pred_check
          %p230 = pneg %p55
        $region30: #{mini50_forward.1} parent=27 // pred_check_branch
          %232 = sbr.rel (%p230) target = $region32
        $region31: #{mini50_forward.1} parent=27 // pred_region
          %s233 = smul.u32 64, %s14
          %p234 = scmp.lt.s32.totalorder %s233, 255
          %s235 = scalar_select %p234, %s233, 255
          %s236 = smul.addr %s235, 4
          %s237 = smul.addr %s236, 8
          %s238 = scalar_lea.vmem %s1, %s237
          %s239 = smul.u32 64, %s14
        $region32: #{mini50_forward.1} parent=27 // pred_fallthru
          _
        // Predicated region
        $region33: #{mini50_forward.1} parent=27 // pred_check
          %p240 = pneg %p81
        $region34: #{mini50_forward.1} parent=27 // pred_check_branch
          %242 = sbr.rel (%p240) target = $region36
        $region35: #{mini50_forward.1} parent=27 // pred_region
          %s243 = smul.u32 4, %s14
          %p244 = scmp.lt.s32.totalorder %s243, 15
          %s245 = scalar_select %p244, %s243, 15
          %s246 = scalar_lea.vmem %s2, %s245
          %s247 = smul.u32 4, %s14
        $region36: #{mini50_forward.1} parent=27 // pred_fallthru
          _
        // Predicated region
        $region37: #{mini50_forward.1} parent=27 // pred_check
          %p248 = pneg %p107
        $region38: #{mini50_forward.1} parent=27 // pred_check_branch
          %250 = sbr.rel (%p248) target = $region40
        $region39: #{mini50_forward.1} parent=27 // pred_region
          %s251 = smul.u32 4, %s14
          %p252 = scmp.lt.s32.totalorder %s251, 15
          %s253 = scalar_select %p252, %s251, 15
          %s254 = scalar_lea.vmem %s3, %s253
          %s255 = smul.u32 4, %s14
        $region40: #{mini50_forward.1} parent=27 // pred_fallthru
          _
        // Predicated region
        $region41: #{mini50_forward.1} parent=27 // pred_check
          %p256 = pneg %p154
        $region42: #{mini50_forward.1} parent=27 // pred_check_branch
          %258 = sbr.rel (%p256) target = $region44
        $region43: #{mini50_forward.1} parent=27 // pred_region
          %s259 = sand.u32 %s144, 1
          %s260 = sand.u32 %s144, 1
          %s261 = smul.addr %s260, 4000
          %s262 = scalar_lea.vmem [#allocation2], %s261
          %s263 = smul.u32 4, %s14
          %s264 = smul.addr %s263, 8
          %s265 = scalar_lea.vmem %s5, %s264
          // Predicated region
          $region45: #{mini50_forward.1} parent=43 // pred_check
            _
          $region46: #{mini50_forward.1} parent=43 // pred_check_branch
            %267 = sbr.rel (0) target = $region48
          $region47: #{mini50_forward.1} parent=43 // pred_region
            // Predicated region
            $region49: #{mini50_forward.1} parent=47 // pred_check
              _
            $region50: #{mini50_forward.1} parent=47 // pred_check_branch
              %269 = sbr.rel (0) target = $region52
            $region51: #{mini50_forward.1} parent=47 // pred_region
              loop: start=0, step=1, limit=1
              $region53: #{mini50_forward.1} parent=51 // loop_pre_header
                _
              $region54: #{mini50_forward.1} parent=51 // loop_header
                %s271 = sphi 0, %s275
                %p272 = scmp.ge.s32.totalorder %s271, 1
                %s276 = sphi %s265, %s265
                %s277 = sphi %s262, %s262
              $region55: #{mini50_forward.1} parent=51 // loop_header_branch
                %274 = sbr.rel (%p272) target = $region59
              $region56: #{mini50_forward.1} parent=51 // loop_body
                %v278 = vld [vmem:[%s276] sm:$0xff]
                %279 = vst [vmem:[%s277] sm:$0xff] %v278
                %v280 = vld [vmem:[%s276 + $0x8] sm:$0xff]
                %281 = vst [vmem:[%s277 + $0x8] sm:$0xff] %v280
                %v282 = vld [vmem:[%s276 + $0x10] sm:$0xff]
                %283 = vst [vmem:[%s277 + $0x10] sm:$0xff] %v282
                %v284 = vld [vmem:[%s276 + $0x18] sm:$0xff]
                %285 = vst [vmem:[%s277 + $0x18] sm:$0xff] %v284
                %v286 = vld [vmem:[%s276 + $0x80] sm:$0xff]
                %287 = vst [vmem:[%s277 + $0x20] sm:$0xff] %v286
                %v288 = vld [vmem:[%s276 + $0x88] sm:$0xff]
                %289 = vst [vmem:[%s277 + $0x28] sm:$0xff] %v288
                %v290 = vld [vmem:[%s276 + $0x90] sm:$0xff]
                %291 = vst [vmem:[%s277 + $0x30] sm:$0xff] %v290
                %v292 = vld [vmem:[%s276 + $0x98] sm:$0xff]
                %293 = vst [vmem:[%s277 + $0x38] sm:$0xff] %v292
                %v294 = vld [vmem:[%s276 + $0x100] sm:$0xff]
                %295 = vst [vmem:[%s277 + $0x40] sm:$0xff] %v294
                %v296 = vld [vmem:[%s276 + $0x108] sm:$0xff]
                %297 = vst [vmem:[%s277 + $0x48] sm:$0xff] %v296
                %v298 = vld [vmem:[%s276 + $0x110] sm:$0xff]
                %299 = vst [vmem:[%s277 + $0x50] sm:$0xff] %v298
                %v300 = vld [vmem:[%s276 + $0x118] sm:$0xff]
                %301 = vst [vmem:[%s277 + $0x58] sm:$0xff] %v300
                %v302 = vld [vmem:[%s276 + $0x180] sm:$0xff]
                %303 = vst [vmem:[%s277 + $0x60] sm:$0xff] %v302
                %v304 = vld [vmem:[%s276 + $0x188] sm:$0xff]
                %305 = vst [vmem:[%s277 + $0x68] sm:$0xff] %v304
                %v306 = vld [vmem:[%s276 + $0x190] sm:$0xff]
                %307 = vst [vmem:[%s277 + $0x70] sm:$0xff] %v306
                %v308 = vld [vmem:[%s276 + $0x198] sm:$0xff]
                %309 = vst [vmem:[%s277 + $0x78] sm:$0xff] %v308
                %v310 = vld [vmem:[%s276 + $0x200] sm:$0xff]
                %311 = vst [vmem:[%s277 + $0x80] sm:$0xff] %v310
                %v312 = vld [vmem:[%s276 + $0x208] sm:$0xff]
                %313 = vst [vmem:[%s277 + $0x88] sm:$0xff] %v312
                %v314 = vld [vmem:[%s276 + $0x210] sm:$0xff]
                %315 = vst [vmem:[%s277 + $0x90] sm:$0xff] %v314
                %v316 = vld [vmem:[%s276 + $0x218] sm:$0xff]
                %317 = vst [vmem:[%s277 + $0x98] sm:$0xff] %v316
                %v318 = vld [vmem:[%s276 + $0x280] sm:$0xff]
                %319 = vst [vmem:[%s277 + $0xa0] sm:$0xff] %v318
                %v320 = vld [vmem:[%s276 + $0x288] sm:$0xff]
                %321 = vst [vmem:[%s277 + $0xa8] sm:$0xff] %v320
                %v322 = vld [vmem:[%s276 + $0x290] sm:$0xff]
                %323 = vst [vmem:[%s277 + $0xb0] sm:$0xff] %v322
                %v324 = vld [vmem:[%s276 + $0x298] sm:$0xff]
                %325 = vst [vmem:[%s277 + $0xb8] sm:$0xff] %v324
                %v326 = vld [vmem:[%s276 + $0x300] sm:$0xff]
                %327 = vst [vmem:[%s277 + $0xc0] sm:$0xff] %v326
                %v328 = vld [vmem:[%s276 + $0x308] sm:$0xff]
                %329 = vst [vmem:[%s277 + $0xc8] sm:$0xff] %v328
                %v330 = vld [vmem:[%s276 + $0x310] sm:$0xff]
                %331 = vst [vmem:[%s277 + $0xd0] sm:$0xff] %v330
                %v332 = vld [vmem:[%s276 + $0x318] sm:$0xff]
                %333 = vst [vmem:[%s277 + $0xd8] sm:$0xff] %v332
                %v334 = vld [vmem:[%s276 + $0x380] sm:$0xff]
                %335 = vst [vmem:[%s277 + $0xe0] sm:$0xff] %v334
                %v336 = vld [vmem:[%s276 + $0x388] sm:$0xff]
                %337 = vst [vmem:[%s277 + $0xe8] sm:$0xff] %v336
                %v338 = vld [vmem:[%s276 + $0x390] sm:$0xff]
                %339 = vst [vmem:[%s277 + $0xf0] sm:$0xff] %v338
                %v340 = vld [vmem:[%s276 + $0x398] sm:$0xff]
                %341 = vst [vmem:[%s277 + $0xf8] sm:$0xff] %v340
                %v342 = vld [vmem:[%s276 + $0x400] sm:$0xff]
                %343 = vst [vmem:[%s277 + $0x100] sm:$0xff] %v342
                %v344 = vld [vmem:[%s276 + $0x408] sm:$0xff]
                %345 = vst [vmem:[%s277 + $0x108] sm:$0xff] %v344
                %v346 = vld [vmem:[%s276 + $0x410] sm:$0xff]
                %347 = vst [vmem:[%s277 + $0x110] sm:$0xff] %v346
                %v348 = vld [vmem:[%s276 + $0x418] sm:$0xff]
                %349 = vst [vmem:[%s277 + $0x118] sm:$0xff] %v348
                %v350 = vld [vmem:[%s276 + $0x480] sm:$0xff]
                %351 = vst [vmem:[%s277 + $0x120] sm:$0xff] %v350
                %v352 = vld [vmem:[%s276 + $0x488] sm:$0xff]
                %353 = vst [vmem:[%s277 + $0x128] sm:$0xff] %v352
                %v354 = vld [vmem:[%s276 + $0x490] sm:$0xff]
                %355 = vst [vmem:[%s277 + $0x130] sm:$0xff] %v354
                %v356 = vld [vmem:[%s276 + $0x498] sm:$0xff]
                %357 = vst [vmem:[%s277 + $0x138] sm:$0xff] %v356
                %v358 = vld [vmem:[%s276 + $0x500] sm:$0xff]
                %359 = vst [vmem:[%s277 + $0x140] sm:$0xff] %v358
                %v360 = vld [vmem:[%s276 + $0x508] sm:$0xff]
                %361 = vst [vmem:[%s277 + $0x148] sm:$0xff] %v360
                %v362 = vld [vmem:[%s276 + $0x510] sm:$0xff]
                %363 = vst [vmem:[%s277 + $0x150] sm:$0xff] %v362
                %v364 = vld [vmem:[%s276 + $0x518] sm:$0xff]
                %365 = vst [vmem:[%s277 + $0x158] sm:$0xff] %v364
                %v366 = vld [vmem:[%s276 + $0x580] sm:$0xff]
                %367 = vst [vmem:[%s277 + $0x160] sm:$0xff] %v366
                %v368 = vld [vmem:[%s276 + $0x588] sm:$0xff]
                %369 = vst [vmem:[%s277 + $0x168] sm:$0xff] %v368
                %v370 = vld [vmem:[%s276 + $0x590] sm:$0xff]
                %371 = vst [vmem:[%s277 + $0x170] sm:$0xff] %v370
                %v372 = vld [vmem:[%s276 + $0x598] sm:$0xff]
                %373 = vst [vmem:[%s277 + $0x178] sm:$0xff] %v372
                %v374 = vld [vmem:[%s276 + $0x600] sm:$0xff]
                %375 = vst [vmem:[%s277 + $0x180] sm:$0xff] %v374
                %v376 = vld [vmem:[%s276 + $0x608] sm:$0xff]
                %377 = vst [vmem:[%s277 + $0x188] sm:$0xff] %v376
                %v378 = vld [vmem:[%s276 + $0x610] sm:$0xff]
                %379 = vst [vmem:[%s277 + $0x190] sm:$0xff] %v378
                %v380 = vld [vmem:[%s276 + $0x618] sm:$0xff]
                %381 = vst [vmem:[%s277 + $0x198] sm:$0xff] %v380
                %v382 = vld [vmem:[%s276 + $0x680] sm:$0xff]
                %383 = vst [vmem:[%s277 + $0x1a0] sm:$0xff] %v382
                %v384 = vld [vmem:[%s276 + $0x688] sm:$0xff]
                %385 = vst [vmem:[%s277 + $0x1a8] sm:$0xff] %v384
                %v386 = vld [vmem:[%s276 + $0x690] sm:$0xff]
                %387 = vst [vmem:[%s277 + $0x1b0] sm:$0xff] %v386
                %v388 = vld [vmem:[%s276 + $0x698] sm:$0xff]
                %389 = vst [vmem:[%s277 + $0x1b8] sm:$0xff] %v388
                %v390 = vld [vmem:[%s276 + $0x700] sm:$0xff]
                %391 = vst [vmem:[%s277 + $0x1c0] sm:$0xff] %v390
                %v392 = vld [vmem:[%s276 + $0x708] sm:$0xff]
                %393 = vst [vmem:[%s277 + $0x1c8] sm:$0xff] %v392
                %v394 = vld [vmem:[%s276 + $0x710] sm:$0xff]
                %395 = vst [vmem:[%s277 + $0x1d0] sm:$0xff] %v394
                %v396 = vld [vmem:[%s276 + $0x718] sm:$0xff]
                %397 = vst [vmem:[%s277 + $0x1d8] sm:$0xff] %v396
                %v398 = vld [vmem:[%s276 + $0x780] sm:$0xff]
                %399 = vst [vmem:[%s277 + $0x1e0] sm:$0xff] %v398
                %v400 = vld [vmem:[%s276 + $0x788] sm:$0xff]
                %401 = vst [vmem:[%s277 + $0x1e8] sm:$0xff] %v400
                %v402 = vld [vmem:[%s276 + $0x790] sm:$0xff]
                %403 = vst [vmem:[%s277 + $0x1f0] sm:$0xff] %v402
                %v404 = vld [vmem:[%s276 + $0x798] sm:$0xff]
                %405 = vst [vmem:[%s277 + $0x1f8] sm:$0xff] %v404
                %v406 = vld [vmem:[%s276 + $0x800] sm:$0xff]
                %407 = vst [vmem:[%s277 + $0x200] sm:$0xff] %v406
                %v408 = vld [vmem:[%s276 + $0x808] sm:$0xff]
                %409 = vst [vmem:[%s277 + $0x208] sm:$0xff] %v408
                %v410 = vld [vmem:[%s276 + $0x810] sm:$0xff]
                %411 = vst [vmem:[%s277 + $0x210] sm:$0xff] %v410
                %v412 = vld [vmem:[%s276 + $0x818] sm:$0xff]
                %413 = vst [vmem:[%s277 + $0x218] sm:$0xff] %v412
                %v414 = vld [vmem:[%s276 + $0x880] sm:$0xff]
                %415 = vst [vmem:[%s277 + $0x220] sm:$0xff] %v414
                %v416 = vld [vmem:[%s276 + $0x888] sm:$0xff]
                %417 = vst [vmem:[%s277 + $0x228] sm:$0xff] %v416
                %v418 = vld [vmem:[%s276 + $0x890] sm:$0xff]
                %419 = vst [vmem:[%s277 + $0x230] sm:$0xff] %v418
                %v420 = vld [vmem:[%s276 + $0x898] sm:$0xff]
                %421 = vst [vmem:[%s277 + $0x238] sm:$0xff] %v420
                %v422 = vld [vmem:[%s276 + $0x900] sm:$0xff]
                %423 = vst [vmem:[%s277 + $0x240] sm:$0xff] %v422
                %v424 = vld [vmem:[%s276 + $0x908] sm:$0xff]
                %425 = vst [vmem:[%s277 + $0x248] sm:$0xff] %v424
                %v426 = vld [vmem:[%s276 + $0x910] sm:$0xff]
                %427 = vst [vmem:[%s277 + $0x250] sm:$0xff] %v426
                %v428 = vld [vmem:[%s276 + $0x918] sm:$0xff]
                %429 = vst [vmem:[%s277 + $0x258] sm:$0xff] %v428
                %v430 = vld [vmem:[%s276 + $0x980] sm:$0xff]
                %431 = vst [vmem:[%s277 + $0x260] sm:$0xff] %v430
                %v432 = vld [vmem:[%s276 + $0x988] sm:$0xff]
                %433 = vst [vmem:[%s277 + $0x268] sm:$0xff] %v432
                %v434 = vld [vmem:[%s276 + $0x990] sm:$0xff]
                %435 = vst [vmem:[%s277 + $0x270] sm:$0xff] %v434
                %v436 = vld [vmem:[%s276 + $0x998] sm:$0xff]
                %437 = vst [vmem:[%s277 + $0x278] sm:$0xff] %v436
                %v438 = vld [vmem:[%s276 + $0xa00] sm:$0xff]
                %439 = vst [vmem:[%s277 + $0x280] sm:$0xff] %v438
                %v440 = vld [vmem:[%s276 + $0xa08] sm:$0xff]
                %441 = vst [vmem:[%s277 + $0x288] sm:$0xff] %v440
                %v442 = vld [vmem:[%s276 + $0xa10] sm:$0xff]
                %443 = vst [vmem:[%s277 + $0x290] sm:$0xff] %v442
                %v444 = vld [vmem:[%s276 + $0xa18] sm:$0xff]
                %445 = vst [vmem:[%s277 + $0x298] sm:$0xff] %v444
                %v446 = vld [vmem:[%s276 + $0xa80] sm:$0xff]
                %447 = vst [vmem:[%s277 + $0x2a0] sm:$0xff] %v446
                %v448 = vld [vmem:[%s276 + $0xa88] sm:$0xff]
                %449 = vst [vmem:[%s277 + $0x2a8] sm:$0xff] %v448
                %v450 = vld [vmem:[%s276 + $0xa90] sm:$0xff]
                %451 = vst [vmem:[%s277 + $0x2b0] sm:$0xff] %v450
                %v452 = vld [vmem:[%s276 + $0xa98] sm:$0xff]
                %453 = vst [vmem:[%s277 + $0x2b8] sm:$0xff] %v452
                %v454 = vld [vmem:[%s276 + $0xb00] sm:$0xff]
                %455 = vst [vmem:[%s277 + $0x2c0] sm:$0xff] %v454
                %v456 = vld [vmem:[%s276 + $0xb08] sm:$0xff]
                %457 = vst [vmem:[%s277 + $0x2c8] sm:$0xff] %v456
                %v458 = vld [vmem:[%s276 + $0xb10] sm:$0xff]
                %459 = vst [vmem:[%s277 + $0x2d0] sm:$0xff] %v458
                %v460 = vld [vmem:[%s276 + $0xb18] sm:$0xff]
                %461 = vst [vmem:[%s277 + $0x2d8] sm:$0xff] %v460
                %v462 = vld [vmem:[%s276 + $0xb80] sm:$0xff]
                %463 = vst [vmem:[%s277 + $0x2e0] sm:$0xff] %v462
                %v464 = vld [vmem:[%s276 + $0xb88] sm:$0xff]
                %465 = vst [vmem:[%s277 + $0x2e8] sm:$0xff] %v464
                %v466 = vld [vmem:[%s276 + $0xb90] sm:$0xff]
                %467 = vst [vmem:[%s277 + $0x2f0] sm:$0xff] %v466
                %v468 = vld [vmem:[%s276 + $0xb98] sm:$0xff]
                %469 = vst [vmem:[%s277 + $0x2f8] sm:$0xff] %v468
                %v470 = vld [vmem:[%s276 + $0xc00] sm:$0xff]
                %471 = vst [vmem:[%s277 + $0x300] sm:$0xff] %v470
                %v472 = vld [vmem:[%s276 + $0xc08] sm:$0xff]
                %473 = vst [vmem:[%s277 + $0x308] sm:$0xff] %v472
                %v474 = vld [vmem:[%s276 + $0xc10] sm:$0xff]
                %475 = vst [vmem:[%s277 + $0x310] sm:$0xff] %v474
                %v476 = vld [vmem:[%s276 + $0xc18] sm:$0xff]
                %477 = vst [vmem:[%s277 + $0x318] sm:$0xff] %v476
                %v478 = vld [vmem:[%s276 + $0xc80] sm:$0xff]
                %479 = vst [vmem:[%s277 + $0x320] sm:$0xff] %v478
                %v480 = vld [vmem:[%s276 + $0xc88] sm:$0xff]
                %481 = vst [vmem:[%s277 + $0x328] sm:$0xff] %v480
                %v482 = vld [vmem:[%s276 + $0xc90] sm:$0xff]
                %483 = vst [vmem:[%s277 + $0x330] sm:$0xff] %v482
                %v484 = vld [vmem:[%s276 + $0xc98] sm:$0xff]
                %485 = vst [vmem:[%s277 + $0x338] sm:$0xff] %v484
                %v486 = vld [vmem:[%s276 + $0xd00] sm:$0xff]
                %487 = vst [vmem:[%s277 + $0x340] sm:$0xff] %v486
                %v488 = vld [vmem:[%s276 + $0xd08] sm:$0xff]
                %489 = vst [vmem:[%s277 + $0x348] sm:$0xff] %v488
                %v490 = vld [vmem:[%s276 + $0xd10] sm:$0xff]
                %491 = vst [vmem:[%s277 + $0x350] sm:$0xff] %v490
                %v492 = vld [vmem:[%s276 + $0xd18] sm:$0xff]
                %493 = vst [vmem:[%s277 + $0x358] sm:$0xff] %v492
                %v494 = vld [vmem:[%s276 + $0xd80] sm:$0xff]
                %495 = vst [vmem:[%s277 + $0x360] sm:$0xff] %v494
                %v496 = vld [vmem:[%s276 + $0xd88] sm:$0xff]
                %497 = vst [vmem:[%s277 + $0x368] sm:$0xff] %v496
                %v498 = vld [vmem:[%s276 + $0xd90] sm:$0xff]
                %499 = vst [vmem:[%s277 + $0x370] sm:$0xff] %v498
                %v500 = vld [vmem:[%s276 + $0xd98] sm:$0xff]
                %501 = vst [vmem:[%s277 + $0x378] sm:$0xff] %v500
                %v502 = vld [vmem:[%s276 + $0xe00] sm:$0xff]
                %503 = vst [vmem:[%s277 + $0x380] sm:$0xff] %v502
                %v504 = vld [vmem:[%s276 + $0xe08] sm:$0xff]
                %505 = vst [vmem:[%s277 + $0x388] sm:$0xff] %v504
                %v506 = vld [vmem:[%s276 + $0xe10] sm:$0xff]
                %507 = vst [vmem:[%s277 + $0x390] sm:$0xff] %v506
                %v508 = vld [vmem:[%s276 + $0xe18] sm:$0xff]
                %509 = vst [vmem:[%s277 + $0x398] sm:$0xff] %v508
                %v510 = vld [vmem:[%s276 + $0xe80] sm:$0xff]
                %511 = vst [vmem:[%s277 + $0x3a0] sm:$0xff] %v510
                %v512 = vld [vmem:[%s276 + $0xe88] sm:$0xff]
                %513 = vst [vmem:[%s277 + $0x3a8] sm:$0xff] %v512
                %v514 = vld [vmem:[%s276 + $0xe90] sm:$0xff]
                %515 = vst [vmem:[%s277 + $0x3b0] sm:$0xff] %v514
                %v516 = vld [vmem:[%s276 + $0xe98] sm:$0xff]
                %517 = vst [vmem:[%s277 + $0x3b8] sm:$0xff] %v516
                %v518 = vld [vmem:[%s276 + $0xf00] sm:$0xff]
                %519 = vst [vmem:[%s277 + $0x3c0] sm:$0xff] %v518
                %v520 = vld [vmem:[%s276 + $0xf08] sm:$0xff]
                %521 = vst [vmem:[%s277 + $0x3c8] sm:$0xff] %v520
                %v522 = vld [vmem:[%s276 + $0xf10] sm:$0xff]
                %523 = vst [vmem:[%s277 + $0x3d0] sm:$0xff] %v522
                %v524 = vld [vmem:[%s276 + $0xf18] sm:$0xff]
                %525 = vst [vmem:[%s277 + $0x3d8] sm:$0xff] %v524
                %v526 = vld [vmem:[%s276 + $0xf80] sm:$0xff]
                %527 = vst [vmem:[%s277 + $0x3e0] sm:$0xff] %v526
                %v528 = vld [vmem:[%s276 + $0xf88] sm:$0xff]
                %529 = vst [vmem:[%s277 + $0x3e8] sm:$0xff] %v528
                %v530 = vld [vmem:[%s276 + $0xf90] sm:$0xff]
                %531 = vst [vmem:[%s277 + $0x3f0] sm:$0xff] %v530
                %v532 = vld [vmem:[%s276 + $0xf98] sm:$0xff]
                %533 = vst [vmem:[%s277 + $0x3f8] sm:$0xff] %v532
                %v534 = vld [vmem:[%s276 + $0x1000] sm:$0xff]
                %535 = vst [vmem:[%s277 + $0x400] sm:$0xff] %v534
                %v536 = vld [vmem:[%s276 + $0x1008] sm:$0xff]
                %537 = vst [vmem:[%s277 + $0x408] sm:$0xff] %v536
                %v538 = vld [vmem:[%s276 + $0x1010] sm:$0xff]
                %539 = vst [vmem:[%s277 + $0x410] sm:$0xff] %v538
                %v540 = vld [vmem:[%s276 + $0x1018] sm:$0xff]
                %541 = vst [vmem:[%s277 + $0x418] sm:$0xff] %v540
                %v542 = vld [vmem:[%s276 + $0x1080] sm:$0xff]
                %543 = vst [vmem:[%s277 + $0x420] sm:$0xff] %v542
                %v544 = vld [vmem:[%s276 + $0x1088] sm:$0xff]
                %545 = vst [vmem:[%s277 + $0x428] sm:$0xff] %v544
                %v546 = vld [vmem:[%s276 + $0x1090] sm:$0xff]
                %547 = vst [vmem:[%s277 + $0x430] sm:$0xff] %v546
                %v548 = vld [vmem:[%s276 + $0x1098] sm:$0xff]
                %549 = vst [vmem:[%s277 + $0x438] sm:$0xff] %v548
                %v550 = vld [vmem:[%s276 + $0x1100] sm:$0xff]
                %551 = vst [vmem:[%s277 + $0x440] sm:$0xff] %v550
                %v552 = vld [vmem:[%s276 + $0x1108] sm:$0xff]
                %553 = vst [vmem:[%s277 + $0x448] sm:$0xff] %v552
                %v554 = vld [vmem:[%s276 + $0x1110] sm:$0xff]
                %555 = vst [vmem:[%s277 + $0x450] sm:$0xff] %v554
                %v556 = vld [vmem:[%s276 + $0x1118] sm:$0xff]
                %557 = vst [vmem:[%s277 + $0x458] sm:$0xff] %v556
                %v558 = vld [vmem:[%s276 + $0x1180] sm:$0xff]
                %559 = vst [vmem:[%s277 + $0x460] sm:$0xff] %v558
                %v560 = vld [vmem:[%s276 + $0x1188] sm:$0xff]
                %561 = vst [vmem:[%s277 + $0x468] sm:$0xff] %v560
                %v562 = vld [vmem:[%s276 + $0x1190] sm:$0xff]
                %563 = vst [vmem:[%s277 + $0x470] sm:$0xff] %v562
                %v564 = vld [vmem:[%s276 + $0x1198] sm:$0xff]
                %565 = vst [vmem:[%s277 + $0x478] sm:$0xff] %v564
                %v566 = vld [vmem:[%s276 + $0x1200] sm:$0xff]
                %567 = vst [vmem:[%s277 + $0x480] sm:$0xff] %v566
                %v568 = vld [vmem:[%s276 + $0x1208] sm:$0xff]
                %569 = vst [vmem:[%s277 + $0x488] sm:$0xff] %v568
                %v570 = vld [vmem:[%s276 + $0x1210] sm:$0xff]
                %571 = vst [vmem:[%s277 + $0x490] sm:$0xff] %v570
                %v572 = vld [vmem:[%s276 + $0x1218] sm:$0xff]
                %573 = vst [vmem:[%s277 + $0x498] sm:$0xff] %v572
                %v574 = vld [vmem:[%s276 + $0x1280] sm:$0xff]
                %575 = vst [vmem:[%s277 + $0x4a0] sm:$0xff] %v574
                %v576 = vld [vmem:[%s276 + $0x1288] sm:$0xff]
                %577 = vst [vmem:[%s277 + $0x4a8] sm:$0xff] %v576
                %v578 = vld [vmem:[%s276 + $0x1290] sm:$0xff]
                %579 = vst [vmem:[%s277 + $0x4b0] sm:$0xff] %v578
                %v580 = vld [vmem:[%s276 + $0x1298] sm:$0xff]
                %581 = vst [vmem:[%s277 + $0x4b8] sm:$0xff] %v580
                %v582 = vld [vmem:[%s276 + $0x1300] sm:$0xff]
                %583 = vst [vmem:[%s277 + $0x4c0] sm:$0xff] %v582
                %v584 = vld [vmem:[%s276 + $0x1308] sm:$0xff]
                %585 = vst [vmem:[%s277 + $0x4c8] sm:$0xff] %v584
                %v586 = vld [vmem:[%s276 + $0x1310] sm:$0xff]
                %587 = vst [vmem:[%s277 + $0x4d0] sm:$0xff] %v586
                %v588 = vld [vmem:[%s276 + $0x1318] sm:$0xff]
                %589 = vst [vmem:[%s277 + $0x4d8] sm:$0xff] %v588
                %v590 = vld [vmem:[%s276 + $0x1380] sm:$0xff]
                %591 = vst [vmem:[%s277 + $0x4e0] sm:$0xff] %v590
                %v592 = vld [vmem:[%s276 + $0x1388] sm:$0xff]
                %593 = vst [vmem:[%s277 + $0x4e8] sm:$0xff] %v592
                %v594 = vld [vmem:[%s276 + $0x1390] sm:$0xff]
                %595 = vst [vmem:[%s277 + $0x4f0] sm:$0xff] %v594
                %v596 = vld [vmem:[%s276 + $0x1398] sm:$0xff]
                %597 = vst [vmem:[%s277 + $0x4f8] sm:$0xff] %v596
                %v598 = vld [vmem:[%s276 + $0x1400] sm:$0xff]
                %599 = vst [vmem:[%s277 + $0x500] sm:$0xff] %v598
                %v600 = vld [vmem:[%s276 + $0x1408] sm:$0xff]
                %601 = vst [vmem:[%s277 + $0x508] sm:$0xff] %v600
                %v602 = vld [vmem:[%s276 + $0x1410] sm:$0xff]
                %603 = vst [vmem:[%s277 + $0x510] sm:$0xff] %v602
                %v604 = vld [vmem:[%s276 + $0x1418] sm:$0xff]
                %605 = vst [vmem:[%s277 + $0x518] sm:$0xff] %v604
                %v606 = vld [vmem:[%s276 + $0x1480] sm:$0xff]
                %607 = vst [vmem:[%s277 + $0x520] sm:$0xff] %v606
                %v608 = vld [vmem:[%s276 + $0x1488] sm:$0xff]
                %609 = vst [vmem:[%s277 + $0x528] sm:$0xff] %v608
                %v610 = vld [vmem:[%s276 + $0x1490] sm:$0xff]
                %611 = vst [vmem:[%s277 + $0x530] sm:$0xff] %v610
                %v612 = vld [vmem:[%s276 + $0x1498] sm:$0xff]
                %613 = vst [vmem:[%s277 + $0x538] sm:$0xff] %v612
                %v614 = vld [vmem:[%s276 + $0x1500] sm:$0xff]
                %615 = vst [vmem:[%s277 + $0x540] sm:$0xff] %v614
                %v616 = vld [vmem:[%s276 + $0x1508] sm:$0xff]
                %617 = vst [vmem:[%s277 + $0x548] sm:$0xff] %v616
                %v618 = vld [vmem:[%s276 + $0x1510] sm:$0xff]
                %619 = vst [vmem:[%s277 + $0x550] sm:$0xff] %v618
                %v620 = vld [vmem:[%s276 + $0x1518] sm:$0xff]
                %621 = vst [vmem:[%s277 + $0x558] sm:$0xff] %v620
                %v622 = vld [vmem:[%s276 + $0x1580] sm:$0xff]
                %623 = vst [vmem:[%s277 + $0x560] sm:$0xff] %v622
                %v624 = vld [vmem:[%s276 + $0x1588] sm:$0xff]
                %625 = vst [vmem:[%s277 + $0x568] sm:$0xff] %v624
                %v626 = vld [vmem:[%s276 + $0x1590] sm:$0xff]
                %627 = vst [vmem:[%s277 + $0x570] sm:$0xff] %v626
                %v628 = vld [vmem:[%s276 + $0x1598] sm:$0xff]
                %629 = vst [vmem:[%s277 + $0x578] sm:$0xff] %v628
                %v630 = vld [vmem:[%s276 + $0x1600] sm:$0xff]
                %631 = vst [vmem:[%s277 + $0x580] sm:$0xff] %v630
                %v632 = vld [vmem:[%s276 + $0x1608] sm:$0xff]
                %633 = vst [vmem:[%s277 + $0x588] sm:$0xff] %v632
                %v634 = vld [vmem:[%s276 + $0x1610] sm:$0xff]
                %635 = vst [vmem:[%s277 + $0x590] sm:$0xff] %v634
                %v636 = vld [vmem:[%s276 + $0x1618] sm:$0xff]
                %637 = vst [vmem:[%s277 + $0x598] sm:$0xff] %v636
                %v638 = vld [vmem:[%s276 + $0x1680] sm:$0xff]
                %639 = vst [vmem:[%s277 + $0x5a0] sm:$0xff] %v638
                %v640 = vld [vmem:[%s276 + $0x1688] sm:$0xff]
                %641 = vst [vmem:[%s277 + $0x5a8] sm:$0xff] %v640
                %v642 = vld [vmem:[%s276 + $0x1690] sm:$0xff]
                %643 = vst [vmem:[%s277 + $0x5b0] sm:$0xff] %v642
                %v644 = vld [vmem:[%s276 + $0x1698] sm:$0xff]
                %645 = vst [vmem:[%s277 + $0x5b8] sm:$0xff] %v644
                %v646 = vld [vmem:[%s276 + $0x1700] sm:$0xff]
                %647 = vst [vmem:[%s277 + $0x5c0] sm:$0xff] %v646
                %v648 = vld [vmem:[%s276 + $0x1708] sm:$0xff]
                %649 = vst [vmem:[%s277 + $0x5c8] sm:$0xff] %v648
                %v650 = vld [vmem:[%s276 + $0x1710] sm:$0xff]
                %651 = vst [vmem:[%s277 + $0x5d0] sm:$0xff] %v650
                %v652 = vld [vmem:[%s276 + $0x1718] sm:$0xff]
                %653 = vst [vmem:[%s277 + $0x5d8] sm:$0xff] %v652
                %v654 = vld [vmem:[%s276 + $0x1780] sm:$0xff]
                %655 = vst [vmem:[%s277 + $0x5e0] sm:$0xff] %v654
                %v656 = vld [vmem:[%s276 + $0x1788] sm:$0xff]
                %657 = vst [vmem:[%s277 + $0x5e8] sm:$0xff] %v656
                %v658 = vld [vmem:[%s276 + $0x1790] sm:$0xff]
                %659 = vst [vmem:[%s277 + $0x5f0] sm:$0xff] %v658
                %v660 = vld [vmem:[%s276 + $0x1798] sm:$0xff]
                %661 = vst [vmem:[%s277 + $0x5f8] sm:$0xff] %v660
                %v662 = vld [vmem:[%s276 + $0x1800] sm:$0xff]
                %663 = vst [vmem:[%s277 + $0x600] sm:$0xff] %v662
                %v664 = vld [vmem:[%s276 + $0x1808] sm:$0xff]
                %665 = vst [vmem:[%s277 + $0x608] sm:$0xff] %v664
                %v666 = vld [vmem:[%s276 + $0x1810] sm:$0xff]
                %667 = vst [vmem:[%s277 + $0x610] sm:$0xff] %v666
                %v668 = vld [vmem:[%s276 + $0x1818] sm:$0xff]
                %669 = vst [vmem:[%s277 + $0x618] sm:$0xff] %v668
                %v670 = vld [vmem:[%s276 + $0x1880] sm:$0xff]
                %671 = vst [vmem:[%s277 + $0x620] sm:$0xff] %v670
                %v672 = vld [vmem:[%s276 + $0x1888] sm:$0xff]
                %673 = vst [vmem:[%s277 + $0x628] sm:$0xff] %v672
                %v674 = vld [vmem:[%s276 + $0x1890] sm:$0xff]
                %675 = vst [vmem:[%s277 + $0x630] sm:$0xff] %v674
                %v676 = vld [vmem:[%s276 + $0x1898] sm:$0xff]
                %677 = vst [vmem:[%s277 + $0x638] sm:$0xff] %v676
                %v678 = vld [vmem:[%s276 + $0x1900] sm:$0xff]
                %679 = vst [vmem:[%s277 + $0x640] sm:$0xff] %v678
                %v680 = vld [vmem:[%s276 + $0x1908] sm:$0xff]
                %681 = vst [vmem:[%s277 + $0x648] sm:$0xff] %v680
                %v682 = vld [vmem:[%s276 + $0x1910] sm:$0xff]
                %683 = vst [vmem:[%s277 + $0x650] sm:$0xff] %v682
                %v684 = vld [vmem:[%s276 + $0x1918] sm:$0xff]
                %685 = vst [vmem:[%s277 + $0x658] sm:$0xff] %v684
                %v686 = vld [vmem:[%s276 + $0x1980] sm:$0xff]
                %687 = vst [vmem:[%s277 + $0x660] sm:$0xff] %v686
                %v688 = vld [vmem:[%s276 + $0x1988] sm:$0xff]
                %689 = vst [vmem:[%s277 + $0x668] sm:$0xff] %v688
                %v690 = vld [vmem:[%s276 + $0x1990] sm:$0xff]
                %691 = vst [vmem:[%s277 + $0x670] sm:$0xff] %v690
                %v692 = vld [vmem:[%s276 + $0x1998] sm:$0xff]
                %693 = vst [vmem:[%s277 + $0x678] sm:$0xff] %v692
                %v694 = vld [vmem:[%s276 + $0x1a00] sm:$0xff]
                %695 = vst [vmem:[%s277 + $0x680] sm:$0xff] %v694
                %v696 = vld [vmem:[%s276 + $0x1a08] sm:$0xff]
                %697 = vst [vmem:[%s277 + $0x688] sm:$0xff] %v696
                %v698 = vld [vmem:[%s276 + $0x1a10] sm:$0xff]
                %699 = vst [vmem:[%s277 + $0x690] sm:$0xff] %v698
                %v700 = vld [vmem:[%s276 + $0x1a18] sm:$0xff]
                %701 = vst [vmem:[%s277 + $0x698] sm:$0xff] %v700
                %v702 = vld [vmem:[%s276 + $0x1a80] sm:$0xff]
                %703 = vst [vmem:[%s277 + $0x6a0] sm:$0xff] %v702
                %v704 = vld [vmem:[%s276 + $0x1a88] sm:$0xff]
                %705 = vst [vmem:[%s277 + $0x6a8] sm:$0xff] %v704
                %v706 = vld [vmem:[%s276 + $0x1a90] sm:$0xff]
                %707 = vst [vmem:[%s277 + $0x6b0] sm:$0xff] %v706
                %v708 = vld [vmem:[%s276 + $0x1a98] sm:$0xff]
                %709 = vst [vmem:[%s277 + $0x6b8] sm:$0xff] %v708
                %v710 = vld [vmem:[%s276 + $0x1b00] sm:$0xff]
                %711 = vst [vmem:[%s277 + $0x6c0] sm:$0xff] %v710
                %v712 = vld [vmem:[%s276 + $0x1b08] sm:$0xff]
                %713 = vst [vmem:[%s277 + $0x6c8] sm:$0xff] %v712
                %v714 = vld [vmem:[%s276 + $0x1b10] sm:$0xff]
                %715 = vst [vmem:[%s277 + $0x6d0] sm:$0xff] %v714
                %v716 = vld [vmem:[%s276 + $0x1b18] sm:$0xff]
                %717 = vst [vmem:[%s277 + $0x6d8] sm:$0xff] %v716
                %v718 = vld [vmem:[%s276 + $0x1b80] sm:$0xff]
                %719 = vst [vmem:[%s277 + $0x6e0] sm:$0xff] %v718
                %v720 = vld [vmem:[%s276 + $0x1b88] sm:$0xff]
                %721 = vst [vmem:[%s277 + $0x6e8] sm:$0xff] %v720
                %v722 = vld [vmem:[%s276 + $0x1b90] sm:$0xff]
                %723 = vst [vmem:[%s277 + $0x6f0] sm:$0xff] %v722
                %v724 = vld [vmem:[%s276 + $0x1b98] sm:$0xff]
                %725 = vst [vmem:[%s277 + $0x6f8] sm:$0xff] %v724
                %v726 = vld [vmem:[%s276 + $0x1c00] sm:$0xff]
                %727 = vst [vmem:[%s277 + $0x700] sm:$0xff] %v726
                %v728 = vld [vmem:[%s276 + $0x1c08] sm:$0xff]
                %729 = vst [vmem:[%s277 + $0x708] sm:$0xff] %v728
                %v730 = vld [vmem:[%s276 + $0x1c10] sm:$0xff]
                %731 = vst [vmem:[%s277 + $0x710] sm:$0xff] %v730
                %v732 = vld [vmem:[%s276 + $0x1c18] sm:$0xff]
                %733 = vst [vmem:[%s277 + $0x718] sm:$0xff] %v732
                %v734 = vld [vmem:[%s276 + $0x1c80] sm:$0xff]
                %735 = vst [vmem:[%s277 + $0x720] sm:$0xff] %v734
                %v736 = vld [vmem:[%s276 + $0x1c88] sm:$0xff]
                %737 = vst [vmem:[%s277 + $0x728] sm:$0xff] %v736
                %v738 = vld [vmem:[%s276 + $0x1c90] sm:$0xff]
                %739 = vst [vmem:[%s277 + $0x730] sm:$0xff] %v738
                %v740 = vld [vmem:[%s276 + $0x1c98] sm:$0xff]
                %741 = vst [vmem:[%s277 + $0x738] sm:$0xff] %v740
                %v742 = vld [vmem:[%s276 + $0x1d00] sm:$0xff]
                %743 = vst [vmem:[%s277 + $0x740] sm:$0xff] %v742
                %v744 = vld [vmem:[%s276 + $0x1d08] sm:$0xff]
                %745 = vst [vmem:[%s277 + $0x748] sm:$0xff] %v744
                %v746 = vld [vmem:[%s276 + $0x1d10] sm:$0xff]
                %747 = vst [vmem:[%s277 + $0x750] sm:$0xff] %v746
                %v748 = vld [vmem:[%s276 + $0x1d18] sm:$0xff]
                %749 = vst [vmem:[%s277 + $0x758] sm:$0xff] %v748
                %v750 = vld [vmem:[%s276 + $0x1d80] sm:$0xff]
                %751 = vst [vmem:[%s277 + $0x760] sm:$0xff] %v750
                %v752 = vld [vmem:[%s276 + $0x1d88] sm:$0xff]
                %753 = vst [vmem:[%s277 + $0x768] sm:$0xff] %v752
                %v754 = vld [vmem:[%s276 + $0x1d90] sm:$0xff]
                %755 = vst [vmem:[%s277 + $0x770] sm:$0xff] %v754
                %v756 = vld [vmem:[%s276 + $0x1d98] sm:$0xff]
                %757 = vst [vmem:[%s277 + $0x778] sm:$0xff] %v756
                %v758 = vld [vmem:[%s276 + $0x1e00] sm:$0xff]
                %759 = vst [vmem:[%s277 + $0x780] sm:$0xff] %v758
                %v760 = vld [vmem:[%s276 + $0x1e08] sm:$0xff]
                %761 = vst [vmem:[%s277 + $0x788] sm:$0xff] %v760
                %v762 = vld [vmem:[%s276 + $0x1e10] sm:$0xff]
                %763 = vst [vmem:[%s277 + $0x790] sm:$0xff] %v762
                %v764 = vld [vmem:[%s276 + $0x1e18] sm:$0xff]
                %765 = vst [vmem:[%s277 + $0x798] sm:$0xff] %v764
                %v766 = vld [vmem:[%s276 + $0x1e80] sm:$0xff]
                %767 = vst [vmem:[%s277 + $0x7a0] sm:$0xff] %v766
                %v768 = vld [vmem:[%s276 + $0x1e88] sm:$0xff]
                %769 = vst [vmem:[%s277 + $0x7a8] sm:$0xff] %v768
                %v770 = vld [vmem:[%s276 + $0x1e90] sm:$0xff]
                %771 = vst [vmem:[%s277 + $0x7b0] sm:$0xff] %v770
                %v772 = vld [vmem:[%s276 + $0x1e98] sm:$0xff]
                %773 = vst [vmem:[%s277 + $0x7b8] sm:$0xff] %v772
                %v774 = vld [vmem:[%s276 + $0x1f00] sm:$0xff]
                %775 = vst [vmem:[%s277 + $0x7c0] sm:$0xff] %v774
                %v776 = vld [vmem:[%s276 + $0x1f08] sm:$0xff]
                %777 = vst [vmem:[%s277 + $0x7c8] sm:$0xff] %v776
                %v778 = vld [vmem:[%s276 + $0x1f10] sm:$0xff]
                %779 = vst [vmem:[%s277 + $0x7d0] sm:$0xff] %v778
                %v780 = vld [vmem:[%s276 + $0x1f18] sm:$0xff]
                %781 = vst [vmem:[%s277 + $0x7d8] sm:$0xff] %v780
                %v782 = vld [vmem:[%s276 + $0x1f80] sm:$0xff]
                %783 = vst [vmem:[%s277 + $0x7e0] sm:$0xff] %v782
                %v784 = vld [vmem:[%s276 + $0x1f88] sm:$0xff]
                %785 = vst [vmem:[%s277 + $0x7e8] sm:$0xff] %v784
                %v786 = vld [vmem:[%s276 + $0x1f90] sm:$0xff]
                %787 = vst [vmem:[%s277 + $0x7f0] sm:$0xff] %v786
                %v788 = vld [vmem:[%s276 + $0x1f98] sm:$0xff]
                %789 = vst [vmem:[%s277 + $0x7f8] sm:$0xff] %v788
                %v790 = vld [vmem:[%s276 + $0x2000] sm:$0xff]
                %791 = vst [vmem:[%s277 + $0x800] sm:$0xff] %v790
                %v792 = vld [vmem:[%s276 + $0x2008] sm:$0xff]
                %793 = vst [vmem:[%s277 + $0x808] sm:$0xff] %v792
                %v794 = vld [vmem:[%s276 + $0x2010] sm:$0xff]
                %795 = vst [vmem:[%s277 + $0x810] sm:$0xff] %v794
                %v796 = vld [vmem:[%s276 + $0x2018] sm:$0xff]
                %797 = vst [vmem:[%s277 + $0x818] sm:$0xff] %v796
                %v798 = vld [vmem:[%s276 + $0x2080] sm:$0xff]
                %799 = vst [vmem:[%s277 + $0x820] sm:$0xff] %v798
                %v800 = vld [vmem:[%s276 + $0x2088] sm:$0xff]
                %801 = vst [vmem:[%s277 + $0x828] sm:$0xff] %v800
                %v802 = vld [vmem:[%s276 + $0x2090] sm:$0xff]
                %803 = vst [vmem:[%s277 + $0x830] sm:$0xff] %v802
                %v804 = vld [vmem:[%s276 + $0x2098] sm:$0xff]
                %805 = vst [vmem:[%s277 + $0x838] sm:$0xff] %v804
                %v806 = vld [vmem:[%s276 + $0x2100] sm:$0xff]
                %807 = vst [vmem:[%s277 + $0x840] sm:$0xff] %v806
                %v808 = vld [vmem:[%s276 + $0x2108] sm:$0xff]
                %809 = vst [vmem:[%s277 + $0x848] sm:$0xff] %v808
                %v810 = vld [vmem:[%s276 + $0x2110] sm:$0xff]
                %811 = vst [vmem:[%s277 + $0x850] sm:$0xff] %v810
                %v812 = vld [vmem:[%s276 + $0x2118] sm:$0xff]
                %813 = vst [vmem:[%s277 + $0x858] sm:$0xff] %v812
                %v814 = vld [vmem:[%s276 + $0x2180] sm:$0xff]
                %815 = vst [vmem:[%s277 + $0x860] sm:$0xff] %v814
                %v816 = vld [vmem:[%s276 + $0x2188] sm:$0xff]
                %817 = vst [vmem:[%s277 + $0x868] sm:$0xff] %v816
                %v818 = vld [vmem:[%s276 + $0x2190] sm:$0xff]
                %819 = vst [vmem:[%s277 + $0x870] sm:$0xff] %v818
                %v820 = vld [vmem:[%s276 + $0x2198] sm:$0xff]
                %821 = vst [vmem:[%s277 + $0x878] sm:$0xff] %v820
                %v822 = vld [vmem:[%s276 + $0x2200] sm:$0xff]
                %823 = vst [vmem:[%s277 + $0x880] sm:$0xff] %v822
                %v824 = vld [vmem:[%s276 + $0x2208] sm:$0xff]
                %825 = vst [vmem:[%s277 + $0x888] sm:$0xff] %v824
                %v826 = vld [vmem:[%s276 + $0x2210] sm:$0xff]
                %827 = vst [vmem:[%s277 + $0x890] sm:$0xff] %v826
                %v828 = vld [vmem:[%s276 + $0x2218] sm:$0xff]
                %829 = vst [vmem:[%s277 + $0x898] sm:$0xff] %v828
                %v830 = vld [vmem:[%s276 + $0x2280] sm:$0xff]
                %831 = vst [vmem:[%s277 + $0x8a0] sm:$0xff] %v830
                %v832 = vld [vmem:[%s276 + $0x2288] sm:$0xff]
                %833 = vst [vmem:[%s277 + $0x8a8] sm:$0xff] %v832
                %v834 = vld [vmem:[%s276 + $0x2290] sm:$0xff]
                %835 = vst [vmem:[%s277 + $0x8b0] sm:$0xff] %v834
                %v836 = vld [vmem:[%s276 + $0x2298] sm:$0xff]
                %837 = vst [vmem:[%s277 + $0x8b8] sm:$0xff] %v836
                %v838 = vld [vmem:[%s276 + $0x2300] sm:$0xff]
                %839 = vst [vmem:[%s277 + $0x8c0] sm:$0xff] %v838
                %v840 = vld [vmem:[%s276 + $0x2308] sm:$0xff]
                %841 = vst [vmem:[%s277 + $0x8c8] sm:$0xff] %v840
                %v842 = vld [vmem:[%s276 + $0x2310] sm:$0xff]
                %843 = vst [vmem:[%s277 + $0x8d0] sm:$0xff] %v842
                %v844 = vld [vmem:[%s276 + $0x2318] sm:$0xff]
                %845 = vst [vmem:[%s277 + $0x8d8] sm:$0xff] %v844
                %v846 = vld [vmem:[%s276 + $0x2380] sm:$0xff]
                %847 = vst [vmem:[%s277 + $0x8e0] sm:$0xff] %v846
                %v848 = vld [vmem:[%s276 + $0x2388] sm:$0xff]
                %849 = vst [vmem:[%s277 + $0x8e8] sm:$0xff] %v848
                %v850 = vld [vmem:[%s276 + $0x2390] sm:$0xff]
                %851 = vst [vmem:[%s277 + $0x8f0] sm:$0xff] %v850
                %v852 = vld [vmem:[%s276 + $0x2398] sm:$0xff]
                %853 = vst [vmem:[%s277 + $0x8f8] sm:$0xff] %v852
                %v854 = vld [vmem:[%s276 + $0x2400] sm:$0xff]
                %855 = vst [vmem:[%s277 + $0x900] sm:$0xff] %v854
                %v856 = vld [vmem:[%s276 + $0x2408] sm:$0xff]
                %857 = vst [vmem:[%s277 + $0x908] sm:$0xff] %v856
                %v858 = vld [vmem:[%s276 + $0x2410] sm:$0xff]
                %859 = vst [vmem:[%s277 + $0x910] sm:$0xff] %v858
                %v860 = vld [vmem:[%s276 + $0x2418] sm:$0xff]
                %861 = vst [vmem:[%s277 + $0x918] sm:$0xff] %v860
                %v862 = vld [vmem:[%s276 + $0x2480] sm:$0xff]
                %863 = vst [vmem:[%s277 + $0x920] sm:$0xff] %v862
                %v864 = vld [vmem:[%s276 + $0x2488] sm:$0xff]
                %865 = vst [vmem:[%s277 + $0x928] sm:$0xff] %v864
                %v866 = vld [vmem:[%s276 + $0x2490] sm:$0xff]
                %867 = vst [vmem:[%s277 + $0x930] sm:$0xff] %v866
                %v868 = vld [vmem:[%s276 + $0x2498] sm:$0xff]
                %869 = vst [vmem:[%s277 + $0x938] sm:$0xff] %v868
                %v870 = vld [vmem:[%s276 + $0x2500] sm:$0xff]
                %871 = vst [vmem:[%s277 + $0x940] sm:$0xff] %v870
                %v872 = vld [vmem:[%s276 + $0x2508] sm:$0xff]
                %873 = vst [vmem:[%s277 + $0x948] sm:$0xff] %v872
                %v874 = vld [vmem:[%s276 + $0x2510] sm:$0xff]
                %875 = vst [vmem:[%s277 + $0x950] sm:$0xff] %v874
                %v876 = vld [vmem:[%s276 + $0x2518] sm:$0xff]
                %877 = vst [vmem:[%s277 + $0x958] sm:$0xff] %v876
                %v878 = vld [vmem:[%s276 + $0x2580] sm:$0xff]
                %879 = vst [vmem:[%s277 + $0x960] sm:$0xff] %v878
                %v880 = vld [vmem:[%s276 + $0x2588] sm:$0xff]
                %881 = vst [vmem:[%s277 + $0x968] sm:$0xff] %v880
                %v882 = vld [vmem:[%s276 + $0x2590] sm:$0xff]
                %883 = vst [vmem:[%s277 + $0x970] sm:$0xff] %v882
                %v884 = vld [vmem:[%s276 + $0x2598] sm:$0xff]
                %885 = vst [vmem:[%s277 + $0x978] sm:$0xff] %v884
                %v886 = vld [vmem:[%s276 + $0x2600] sm:$0xff]
                %887 = vst [vmem:[%s277 + $0x980] sm:$0xff] %v886
                %v888 = vld [vmem:[%s276 + $0x2608] sm:$0xff]
                %889 = vst [vmem:[%s277 + $0x988] sm:$0xff] %v888
                %v890 = vld [vmem:[%s276 + $0x2610] sm:$0xff]
                %891 = vst [vmem:[%s277 + $0x990] sm:$0xff] %v890
                %v892 = vld [vmem:[%s276 + $0x2618] sm:$0xff]
                %893 = vst [vmem:[%s277 + $0x998] sm:$0xff] %v892
                %v894 = vld [vmem:[%s276 + $0x2680] sm:$0xff]
                %895 = vst [vmem:[%s277 + $0x9a0] sm:$0xff] %v894
                %v896 = vld [vmem:[%s276 + $0x2688] sm:$0xff]
                %897 = vst [vmem:[%s277 + $0x9a8] sm:$0xff] %v896
                %v898 = vld [vmem:[%s276 + $0x2690] sm:$0xff]
                %899 = vst [vmem:[%s277 + $0x9b0] sm:$0xff] %v898
                %v900 = vld [vmem:[%s276 + $0x2698] sm:$0xff]
                %901 = vst [vmem:[%s277 + $0x9b8] sm:$0xff] %v900
                %v902 = vld [vmem:[%s276 + $0x2700] sm:$0xff]
                %903 = vst [vmem:[%s277 + $0x9c0] sm:$0xff] %v902
                %v904 = vld [vmem:[%s276 + $0x2708] sm:$0xff]
                %905 = vst [vmem:[%s277 + $0x9c8] sm:$0xff] %v904
                %v906 = vld [vmem:[%s276 + $0x2710] sm:$0xff]
                %907 = vst [vmem:[%s277 + $0x9d0] sm:$0xff] %v906
                %v908 = vld [vmem:[%s276 + $0x2718] sm:$0xff]
                %909 = vst [vmem:[%s277 + $0x9d8] sm:$0xff] %v908
                %v910 = vld [vmem:[%s276 + $0x2780] sm:$0xff]
                %911 = vst [vmem:[%s277 + $0x9e0] sm:$0xff] %v910
                %v912 = vld [vmem:[%s276 + $0x2788] sm:$0xff]
                %913 = vst [vmem:[%s277 + $0x9e8] sm:$0xff] %v912
                %v914 = vld [vmem:[%s276 + $0x2790] sm:$0xff]
                %915 = vst [vmem:[%s277 + $0x9f0] sm:$0xff] %v914
                %v916 = vld [vmem:[%s276 + $0x2798] sm:$0xff]
                %917 = vst [vmem:[%s277 + $0x9f8] sm:$0xff] %v916
                %v918 = vld [vmem:[%s276 + $0x2800] sm:$0xff]
                %919 = vst [vmem:[%s277 + $0xa00] sm:$0xff] %v918
                %v920 = vld [vmem:[%s276 + $0x2808] sm:$0xff]
                %921 = vst [vmem:[%s277 + $0xa08] sm:$0xff] %v920
                %v922 = vld [vmem:[%s276 + $0x2810] sm:$0xff]
                %923 = vst [vmem:[%s277 + $0xa10] sm:$0xff] %v922
                %v924 = vld [vmem:[%s276 + $0x2818] sm:$0xff]
                %925 = vst [vmem:[%s277 + $0xa18] sm:$0xff] %v924
                %v926 = vld [vmem:[%s276 + $0x2880] sm:$0xff]
                %927 = vst [vmem:[%s277 + $0xa20] sm:$0xff] %v926
                %v928 = vld [vmem:[%s276 + $0x2888] sm:$0xff]
                %929 = vst [vmem:[%s277 + $0xa28] sm:$0xff] %v928
                %v930 = vld [vmem:[%s276 + $0x2890] sm:$0xff]
                %931 = vst [vmem:[%s277 + $0xa30] sm:$0xff] %v930
                %v932 = vld [vmem:[%s276 + $0x2898] sm:$0xff]
                %933 = vst [vmem:[%s277 + $0xa38] sm:$0xff] %v932
                %v934 = vld [vmem:[%s276 + $0x2900] sm:$0xff]
                %935 = vst [vmem:[%s277 + $0xa40] sm:$0xff] %v934
                %v936 = vld [vmem:[%s276 + $0x2908] sm:$0xff]
                %937 = vst [vmem:[%s277 + $0xa48] sm:$0xff] %v936
                %v938 = vld [vmem:[%s276 + $0x2910] sm:$0xff]
                %939 = vst [vmem:[%s277 + $0xa50] sm:$0xff] %v938
                %v940 = vld [vmem:[%s276 + $0x2918] sm:$0xff]
                %941 = vst [vmem:[%s277 + $0xa58] sm:$0xff] %v940
                %v942 = vld [vmem:[%s276 + $0x2980] sm:$0xff]
                %943 = vst [vmem:[%s277 + $0xa60] sm:$0xff] %v942
                %v944 = vld [vmem:[%s276 + $0x2988] sm:$0xff]
                %945 = vst [vmem:[%s277 + $0xa68] sm:$0xff] %v944
                %v946 = vld [vmem:[%s276 + $0x2990] sm:$0xff]
                %947 = vst [vmem:[%s277 + $0xa70] sm:$0xff] %v946
                %v948 = vld [vmem:[%s276 + $0x2998] sm:$0xff]
                %949 = vst [vmem:[%s277 + $0xa78] sm:$0xff] %v948
                %v950 = vld [vmem:[%s276 + $0x2a00] sm:$0xff]
                %951 = vst [vmem:[%s277 + $0xa80] sm:$0xff] %v950
                %v952 = vld [vmem:[%s276 + $0x2a08] sm:$0xff]
                %953 = vst [vmem:[%s277 + $0xa88] sm:$0xff] %v952
                %v954 = vld [vmem:[%s276 + $0x2a10] sm:$0xff]
                %955 = vst [vmem:[%s277 + $0xa90] sm:$0xff] %v954
                %v956 = vld [vmem:[%s276 + $0x2a18] sm:$0xff]
                %957 = vst [vmem:[%s277 + $0xa98] sm:$0xff] %v956
                %v958 = vld [vmem:[%s276 + $0x2a80] sm:$0xff]
                %959 = vst [vmem:[%s277 + $0xaa0] sm:$0xff] %v958
                %v960 = vld [vmem:[%s276 + $0x2a88] sm:$0xff]
                %961 = vst [vmem:[%s277 + $0xaa8] sm:$0xff] %v960
                %v962 = vld [vmem:[%s276 + $0x2a90] sm:$0xff]
                %963 = vst [vmem:[%s277 + $0xab0] sm:$0xff] %v962
                %v964 = vld [vmem:[%s276 + $0x2a98] sm:$0xff]
                %965 = vst [vmem:[%s277 + $0xab8] sm:$0xff] %v964
                %v966 = vld [vmem:[%s276 + $0x2b00] sm:$0xff]
                %967 = vst [vmem:[%s277 + $0xac0] sm:$0xff] %v966
                %v968 = vld [vmem:[%s276 + $0x2b08] sm:$0xff]
                %969 = vst [vmem:[%s277 + $0xac8] sm:$0xff] %v968
                %v970 = vld [vmem:[%s276 + $0x2b10] sm:$0xff]
                %971 = vst [vmem:[%s277 + $0xad0] sm:$0xff] %v970
                %v972 = vld [vmem:[%s276 + $0x2b18] sm:$0xff]
                %973 = vst [vmem:[%s277 + $0xad8] sm:$0xff] %v972
                %v974 = vld [vmem:[%s276 + $0x2b80] sm:$0xff]
                %975 = vst [vmem:[%s277 + $0xae0] sm:$0xff] %v974
                %v976 = vld [vmem:[%s276 + $0x2b88] sm:$0xff]
                %977 = vst [vmem:[%s277 + $0xae8] sm:$0xff] %v976
                %v978 = vld [vmem:[%s276 + $0x2b90] sm:$0xff]
                %979 = vst [vmem:[%s277 + $0xaf0] sm:$0xff] %v978
                %v980 = vld [vmem:[%s276 + $0x2b98] sm:$0xff]
                %981 = vst [vmem:[%s277 + $0xaf8] sm:$0xff] %v980
                %v982 = vld [vmem:[%s276 + $0x2c00] sm:$0xff]
                %983 = vst [vmem:[%s277 + $0xb00] sm:$0xff] %v982
                %v984 = vld [vmem:[%s276 + $0x2c08] sm:$0xff]
                %985 = vst [vmem:[%s277 + $0xb08] sm:$0xff] %v984
                %v986 = vld [vmem:[%s276 + $0x2c10] sm:$0xff]
                %987 = vst [vmem:[%s277 + $0xb10] sm:$0xff] %v986
                %v988 = vld [vmem:[%s276 + $0x2c18] sm:$0xff]
                %989 = vst [vmem:[%s277 + $0xb18] sm:$0xff] %v988
                %v990 = vld [vmem:[%s276 + $0x2c80] sm:$0xff]
                %991 = vst [vmem:[%s277 + $0xb20] sm:$0xff] %v990
                %v992 = vld [vmem:[%s276 + $0x2c88] sm:$0xff]
                %993 = vst [vmem:[%s277 + $0xb28] sm:$0xff] %v992
                %v994 = vld [vmem:[%s276 + $0x2c90] sm:$0xff]
                %995 = vst [vmem:[%s277 + $0xb30] sm:$0xff] %v994
                %v996 = vld [vmem:[%s276 + $0x2c98] sm:$0xff]
                %997 = vst [vmem:[%s277 + $0xb38] sm:$0xff] %v996
                %v998 = vld [vmem:[%s276 + $0x2d00] sm:$0xff]
                %999 = vst [vmem:[%s277 + $0xb40] sm:$0xff] %v998
                %v1000 = vld [vmem:[%s276 + $0x2d08] sm:$0xff]
                %1001 = vst [vmem:[%s277 + $0xb48] sm:$0xff] %v1000
                %v1002 = vld [vmem:[%s276 + $0x2d10] sm:$0xff]
                %1003 = vst [vmem:[%s277 + $0xb50] sm:$0xff] %v1002
                %v1004 = vld [vmem:[%s276 + $0x2d18] sm:$0xff]
                %1005 = vst [vmem:[%s277 + $0xb58] sm:$0xff] %v1004
                %v1006 = vld [vmem:[%s276 + $0x2d80] sm:$0xff]
                %1007 = vst [vmem:[%s277 + $0xb60] sm:$0xff] %v1006
                %v1008 = vld [vmem:[%s276 + $0x2d88] sm:$0xff]
                %1009 = vst [vmem:[%s277 + $0xb68] sm:$0xff] %v1008
                %v1010 = vld [vmem:[%s276 + $0x2d90] sm:$0xff]
                %1011 = vst [vmem:[%s277 + $0xb70] sm:$0xff] %v1010
                %v1012 = vld [vmem:[%s276 + $0x2d98] sm:$0xff]
                %1013 = vst [vmem:[%s277 + $0xb78] sm:$0xff] %v1012
                %v1014 = vld [vmem:[%s276 + $0x2e00] sm:$0xff]
                %1015 = vst [vmem:[%s277 + $0xb80] sm:$0xff] %v1014
                %v1016 = vld [vmem:[%s276 + $0x2e08] sm:$0xff]
                %1017 = vst [vmem:[%s277 + $0xb88] sm:$0xff] %v1016
                %v1018 = vld [vmem:[%s276 + $0x2e10] sm:$0xff]
                %1019 = vst [vmem:[%s277 + $0xb90] sm:$0xff] %v1018
                %v1020 = vld [vmem:[%s276 + $0x2e18] sm:$0xff]
                %1021 = vst [vmem:[%s277 + $0xb98] sm:$0xff] %v1020
                %v1022 = vld [vmem:[%s276 + $0x2e80] sm:$0xff]
                %1023 = vst [vmem:[%s277 + $0xba0] sm:$0xff] %v1022
                %v1024 = vld [vmem:[%s276 + $0x2e88] sm:$0xff]
                %1025 = vst [vmem:[%s277 + $0xba8] sm:$0xff] %v1024
                %v1026 = vld [vmem:[%s276 + $0x2e90] sm:$0xff]
                %1027 = vst [vmem:[%s277 + $0xbb0] sm:$0xff] %v1026
                %v1028 = vld [vmem:[%s276 + $0x2e98] sm:$0xff]
                %1029 = vst [vmem:[%s277 + $0xbb8] sm:$0xff] %v1028
                %v1030 = vld [vmem:[%s276 + $0x2f00] sm:$0xff]
                %1031 = vst [vmem:[%s277 + $0xbc0] sm:$0xff] %v1030
                %v1032 = vld [vmem:[%s276 + $0x2f08] sm:$0xff]
                %1033 = vst [vmem:[%s277 + $0xbc8] sm:$0xff] %v1032
                %v1034 = vld [vmem:[%s276 + $0x2f10] sm:$0xff]
                %1035 = vst [vmem:[%s277 + $0xbd0] sm:$0xff] %v1034
                %v1036 = vld [vmem:[%s276 + $0x2f18] sm:$0xff]
                %1037 = vst [vmem:[%s277 + $0xbd8] sm:$0xff] %v1036
                %v1038 = vld [vmem:[%s276 + $0x2f80] sm:$0xff]
                %1039 = vst [vmem:[%s277 + $0xbe0] sm:$0xff] %v1038
                %v1040 = vld [vmem:[%s276 + $0x2f88] sm:$0xff]
                %1041 = vst [vmem:[%s277 + $0xbe8] sm:$0xff] %v1040
                %v1042 = vld [vmem:[%s276 + $0x2f90] sm:$0xff]
                %1043 = vst [vmem:[%s277 + $0xbf0] sm:$0xff] %v1042
                %v1044 = vld [vmem:[%s276 + $0x2f98] sm:$0xff]
                %1045 = vst [vmem:[%s277 + $0xbf8] sm:$0xff] %v1044
                %v1046 = vld [vmem:[%s276 + $0x3000] sm:$0xff]
                %1047 = vst [vmem:[%s277 + $0xc00] sm:$0xff] %v1046
                %v1048 = vld [vmem:[%s276 + $0x3008] sm:$0xff]
                %1049 = vst [vmem:[%s277 + $0xc08] sm:$0xff] %v1048
                %v1050 = vld [vmem:[%s276 + $0x3010] sm:$0xff]
                %1051 = vst [vmem:[%s277 + $0xc10] sm:$0xff] %v1050
                %v1052 = vld [vmem:[%s276 + $0x3018] sm:$0xff]
                %1053 = vst [vmem:[%s277 + $0xc18] sm:$0xff] %v1052
                %v1054 = vld [vmem:[%s276 + $0x3080] sm:$0xff]
                %1055 = vst [vmem:[%s277 + $0xc20] sm:$0xff] %v1054
                %v1056 = vld [vmem:[%s276 + $0x3088] sm:$0xff]
                %1057 = vst [vmem:[%s277 + $0xc28] sm:$0xff] %v1056
                %v1058 = vld [vmem:[%s276 + $0x3090] sm:$0xff]
                %1059 = vst [vmem:[%s277 + $0xc30] sm:$0xff] %v1058
                %v1060 = vld [vmem:[%s276 + $0x3098] sm:$0xff]
                %1061 = vst [vmem:[%s277 + $0xc38] sm:$0xff] %v1060
                %v1062 = vld [vmem:[%s276 + $0x3100] sm:$0xff]
                %1063 = vst [vmem:[%s277 + $0xc40] sm:$0xff] %v1062
                %v1064 = vld [vmem:[%s276 + $0x3108] sm:$0xff]
                %1065 = vst [vmem:[%s277 + $0xc48] sm:$0xff] %v1064
                %v1066 = vld [vmem:[%s276 + $0x3110] sm:$0xff]
                %1067 = vst [vmem:[%s277 + $0xc50] sm:$0xff] %v1066
                %v1068 = vld [vmem:[%s276 + $0x3118] sm:$0xff]
                %1069 = vst [vmem:[%s277 + $0xc58] sm:$0xff] %v1068
                %v1070 = vld [vmem:[%s276 + $0x3180] sm:$0xff]
                %1071 = vst [vmem:[%s277 + $0xc60] sm:$0xff] %v1070
                %v1072 = vld [vmem:[%s276 + $0x3188] sm:$0xff]
                %1073 = vst [vmem:[%s277 + $0xc68] sm:$0xff] %v1072
                %v1074 = vld [vmem:[%s276 + $0x3190] sm:$0xff]
                %1075 = vst [vmem:[%s277 + $0xc70] sm:$0xff] %v1074
                %v1076 = vld [vmem:[%s276 + $0x3198] sm:$0xff]
                %1077 = vst [vmem:[%s277 + $0xc78] sm:$0xff] %v1076
                %v1078 = vld [vmem:[%s276 + $0x3200] sm:$0xff]
                %1079 = vst [vmem:[%s277 + $0xc80] sm:$0xff] %v1078
                %v1080 = vld [vmem:[%s276 + $0x3208] sm:$0xff]
                %1081 = vst [vmem:[%s277 + $0xc88] sm:$0xff] %v1080
                %v1082 = vld [vmem:[%s276 + $0x3210] sm:$0xff]
                %1083 = vst [vmem:[%s277 + $0xc90] sm:$0xff] %v1082
                %v1084 = vld [vmem:[%s276 + $0x3218] sm:$0xff]
                %1085 = vst [vmem:[%s277 + $0xc98] sm:$0xff] %v1084
                %v1086 = vld [vmem:[%s276 + $0x3280] sm:$0xff]
                %1087 = vst [vmem:[%s277 + $0xca0] sm:$0xff] %v1086
                %v1088 = vld [vmem:[%s276 + $0x3288] sm:$0xff]
                %1089 = vst [vmem:[%s277 + $0xca8] sm:$0xff] %v1088
                %v1090 = vld [vmem:[%s276 + $0x3290] sm:$0xff]
                %1091 = vst [vmem:[%s277 + $0xcb0] sm:$0xff] %v1090
                %v1092 = vld [vmem:[%s276 + $0x3298] sm:$0xff]
                %1093 = vst [vmem:[%s277 + $0xcb8] sm:$0xff] %v1092
                %v1094 = vld [vmem:[%s276 + $0x3300] sm:$0xff]
                %1095 = vst [vmem:[%s277 + $0xcc0] sm:$0xff] %v1094
                %v1096 = vld [vmem:[%s276 + $0x3308] sm:$0xff]
                %1097 = vst [vmem:[%s277 + $0xcc8] sm:$0xff] %v1096
                %v1098 = vld [vmem:[%s276 + $0x3310] sm:$0xff]
                %1099 = vst [vmem:[%s277 + $0xcd0] sm:$0xff] %v1098
                %v1100 = vld [vmem:[%s276 + $0x3318] sm:$0xff]
                %1101 = vst [vmem:[%s277 + $0xcd8] sm:$0xff] %v1100
                %v1102 = vld [vmem:[%s276 + $0x3380] sm:$0xff]
                %1103 = vst [vmem:[%s277 + $0xce0] sm:$0xff] %v1102
                %v1104 = vld [vmem:[%s276 + $0x3388] sm:$0xff]
                %1105 = vst [vmem:[%s277 + $0xce8] sm:$0xff] %v1104
                %v1106 = vld [vmem:[%s276 + $0x3390] sm:$0xff]
                %1107 = vst [vmem:[%s277 + $0xcf0] sm:$0xff] %v1106
                %v1108 = vld [vmem:[%s276 + $0x3398] sm:$0xff]
                %1109 = vst [vmem:[%s277 + $0xcf8] sm:$0xff] %v1108
                %v1110 = vld [vmem:[%s276 + $0x3400] sm:$0xff]
                %1111 = vst [vmem:[%s277 + $0xd00] sm:$0xff] %v1110
                %v1112 = vld [vmem:[%s276 + $0x3408] sm:$0xff]
                %1113 = vst [vmem:[%s277 + $0xd08] sm:$0xff] %v1112
                %v1114 = vld [vmem:[%s276 + $0x3410] sm:$0xff]
                %1115 = vst [vmem:[%s277 + $0xd10] sm:$0xff] %v1114
                %v1116 = vld [vmem:[%s276 + $0x3418] sm:$0xff]
                %1117 = vst [vmem:[%s277 + $0xd18] sm:$0xff] %v1116
                %v1118 = vld [vmem:[%s276 + $0x3480] sm:$0xff]
                %1119 = vst [vmem:[%s277 + $0xd20] sm:$0xff] %v1118
                %v1120 = vld [vmem:[%s276 + $0x3488] sm:$0xff]
                %1121 = vst [vmem:[%s277 + $0xd28] sm:$0xff] %v1120
                %v1122 = vld [vmem:[%s276 + $0x3490] sm:$0xff]
                %1123 = vst [vmem:[%s277 + $0xd30] sm:$0xff] %v1122
                %v1124 = vld [vmem:[%s276 + $0x3498] sm:$0xff]
                %1125 = vst [vmem:[%s277 + $0xd38] sm:$0xff] %v1124
                %v1126 = vld [vmem:[%s276 + $0x3500] sm:$0xff]
                %1127 = vst [vmem:[%s277 + $0xd40] sm:$0xff] %v1126
                %v1128 = vld [vmem:[%s276 + $0x3508] sm:$0xff]
                %1129 = vst [vmem:[%s277 + $0xd48] sm:$0xff] %v1128
                %v1130 = vld [vmem:[%s276 + $0x3510] sm:$0xff]
                %1131 = vst [vmem:[%s277 + $0xd50] sm:$0xff] %v1130
                %v1132 = vld [vmem:[%s276 + $0x3518] sm:$0xff]
                %1133 = vst [vmem:[%s277 + $0xd58] sm:$0xff] %v1132
                %v1134 = vld [vmem:[%s276 + $0x3580] sm:$0xff]
                %1135 = vst [vmem:[%s277 + $0xd60] sm:$0xff] %v1134
                %v1136 = vld [vmem:[%s276 + $0x3588] sm:$0xff]
                %1137 = vst [vmem:[%s277 + $0xd68] sm:$0xff] %v1136
                %v1138 = vld [vmem:[%s276 + $0x3590] sm:$0xff]
                %1139 = vst [vmem:[%s277 + $0xd70] sm:$0xff] %v1138
                %v1140 = vld [vmem:[%s276 + $0x3598] sm:$0xff]
                %1141 = vst [vmem:[%s277 + $0xd78] sm:$0xff] %v1140
                %v1142 = vld [vmem:[%s276 + $0x3600] sm:$0xff]
                %1143 = vst [vmem:[%s277 + $0xd80] sm:$0xff] %v1142
                %v1144 = vld [vmem:[%s276 + $0x3608] sm:$0xff]
                %1145 = vst [vmem:[%s277 + $0xd88] sm:$0xff] %v1144
                %v1146 = vld [vmem:[%s276 + $0x3610] sm:$0xff]
                %1147 = vst [vmem:[%s277 + $0xd90] sm:$0xff] %v1146
                %v1148 = vld [vmem:[%s276 + $0x3618] sm:$0xff]
                %1149 = vst [vmem:[%s277 + $0xd98] sm:$0xff] %v1148
                %v1150 = vld [vmem:[%s276 + $0x3680] sm:$0xff]
                %1151 = vst [vmem:[%s277 + $0xda0] sm:$0xff] %v1150
                %v1152 = vld [vmem:[%s276 + $0x3688] sm:$0xff]
                %1153 = vst [vmem:[%s277 + $0xda8] sm:$0xff] %v1152
                %v1154 = vld [vmem:[%s276 + $0x3690] sm:$0xff]
                %1155 = vst [vmem:[%s277 + $0xdb0] sm:$0xff] %v1154
                %v1156 = vld [vmem:[%s276 + $0x3698] sm:$0xff]
                %1157 = vst [vmem:[%s277 + $0xdb8] sm:$0xff] %v1156
                %v1158 = vld [vmem:[%s276 + $0x3700] sm:$0xff]
                %1159 = vst [vmem:[%s277 + $0xdc0] sm:$0xff] %v1158
                %v1160 = vld [vmem:[%s276 + $0x3708] sm:$0xff]
                %1161 = vst [vmem:[%s277 + $0xdc8] sm:$0xff] %v1160
                %v1162 = vld [vmem:[%s276 + $0x3710] sm:$0xff]
                %1163 = vst [vmem:[%s277 + $0xdd0] sm:$0xff] %v1162
                %v1164 = vld [vmem:[%s276 + $0x3718] sm:$0xff]
                %1165 = vst [vmem:[%s277 + $0xdd8] sm:$0xff] %v1164
                %v1166 = vld [vmem:[%s276 + $0x3780] sm:$0xff]
                %1167 = vst [vmem:[%s277 + $0xde0] sm:$0xff] %v1166
                %v1168 = vld [vmem:[%s276 + $0x3788] sm:$0xff]
                %1169 = vst [vmem:[%s277 + $0xde8] sm:$0xff] %v1168
                %v1170 = vld [vmem:[%s276 + $0x3790] sm:$0xff]
                %1171 = vst [vmem:[%s277 + $0xdf0] sm:$0xff] %v1170
                %v1172 = vld [vmem:[%s276 + $0x3798] sm:$0xff]
                %1173 = vst [vmem:[%s277 + $0xdf8] sm:$0xff] %v1172
                %v1174 = vld [vmem:[%s276 + $0x3800] sm:$0xff]
                %1175 = vst [vmem:[%s277 + $0xe00] sm:$0xff] %v1174
                %v1176 = vld [vmem:[%s276 + $0x3808] sm:$0xff]
                %1177 = vst [vmem:[%s277 + $0xe08] sm:$0xff] %v1176
                %v1178 = vld [vmem:[%s276 + $0x3810] sm:$0xff]
                %1179 = vst [vmem:[%s277 + $0xe10] sm:$0xff] %v1178
                %v1180 = vld [vmem:[%s276 + $0x3818] sm:$0xff]
                %1181 = vst [vmem:[%s277 + $0xe18] sm:$0xff] %v1180
                %v1182 = vld [vmem:[%s276 + $0x3880] sm:$0xff]
                %1183 = vst [vmem:[%s277 + $0xe20] sm:$0xff] %v1182
                %v1184 = vld [vmem:[%s276 + $0x3888] sm:$0xff]
                %1185 = vst [vmem:[%s277 + $0xe28] sm:$0xff] %v1184
                %v1186 = vld [vmem:[%s276 + $0x3890] sm:$0xff]
                %1187 = vst [vmem:[%s277 + $0xe30] sm:$0xff] %v1186
                %v1188 = vld [vmem:[%s276 + $0x3898] sm:$0xff]
                %1189 = vst [vmem:[%s277 + $0xe38] sm:$0xff] %v1188
                %v1190 = vld [vmem:[%s276 + $0x3900] sm:$0xff]
                %1191 = vst [vmem:[%s277 + $0xe40] sm:$0xff] %v1190
                %v1192 = vld [vmem:[%s276 + $0x3908] sm:$0xff]
                %1193 = vst [vmem:[%s277 + $0xe48] sm:$0xff] %v1192
                %v1194 = vld [vmem:[%s276 + $0x3910] sm:$0xff]
                %1195 = vst [vmem:[%s277 + $0xe50] sm:$0xff] %v1194
                %v1196 = vld [vmem:[%s276 + $0x3918] sm:$0xff]
                %1197 = vst [vmem:[%s277 + $0xe58] sm:$0xff] %v1196
                %v1198 = vld [vmem:[%s276 + $0x3980] sm:$0xff]
                %1199 = vst [vmem:[%s277 + $0xe60] sm:$0xff] %v1198
                %v1200 = vld [vmem:[%s276 + $0x3988] sm:$0xff]
                %1201 = vst [vmem:[%s277 + $0xe68] sm:$0xff] %v1200
                %v1202 = vld [vmem:[%s276 + $0x3990] sm:$0xff]
                %1203 = vst [vmem:[%s277 + $0xe70] sm:$0xff] %v1202
                %v1204 = vld [vmem:[%s276 + $0x3998] sm:$0xff]
                %1205 = vst [vmem:[%s277 + $0xe78] sm:$0xff] %v1204
                %v1206 = vld [vmem:[%s276 + $0x3a00] sm:$0xff]
                %1207 = vst [vmem:[%s277 + $0xe80] sm:$0xff] %v1206
                %v1208 = vld [vmem:[%s276 + $0x3a08] sm:$0xff]
                %1209 = vst [vmem:[%s277 + $0xe88] sm:$0xff] %v1208
                %v1210 = vld [vmem:[%s276 + $0x3a10] sm:$0xff]
                %1211 = vst [vmem:[%s277 + $0xe90] sm:$0xff] %v1210
                %v1212 = vld [vmem:[%s276 + $0x3a18] sm:$0xff]
                %1213 = vst [vmem:[%s277 + $0xe98] sm:$0xff] %v1212
                %v1214 = vld [vmem:[%s276 + $0x3a80] sm:$0xff]
                %1215 = vst [vmem:[%s277 + $0xea0] sm:$0xff] %v1214
                %v1216 = vld [vmem:[%s276 + $0x3a88] sm:$0xff]
                %1217 = vst [vmem:[%s277 + $0xea8] sm:$0xff] %v1216
                %v1218 = vld [vmem:[%s276 + $0x3a90] sm:$0xff]
                %1219 = vst [vmem:[%s277 + $0xeb0] sm:$0xff] %v1218
                %v1220 = vld [vmem:[%s276 + $0x3a98] sm:$0xff]
                %1221 = vst [vmem:[%s277 + $0xeb8] sm:$0xff] %v1220
                %v1222 = vld [vmem:[%s276 + $0x3b00] sm:$0xff]
                %1223 = vst [vmem:[%s277 + $0xec0] sm:$0xff] %v1222
                %v1224 = vld [vmem:[%s276 + $0x3b08] sm:$0xff]
                %1225 = vst [vmem:[%s277 + $0xec8] sm:$0xff] %v1224
                %v1226 = vld [vmem:[%s276 + $0x3b10] sm:$0xff]
                %1227 = vst [vmem:[%s277 + $0xed0] sm:$0xff] %v1226
                %v1228 = vld [vmem:[%s276 + $0x3b18] sm:$0xff]
                %1229 = vst [vmem:[%s277 + $0xed8] sm:$0xff] %v1228
                %v1230 = vld [vmem:[%s276 + $0x3b80] sm:$0xff]
                %1231 = vst [vmem:[%s277 + $0xee0] sm:$0xff] %v1230
                %v1232 = vld [vmem:[%s276 + $0x3b88] sm:$0xff]
                %1233 = vst [vmem:[%s277 + $0xee8] sm:$0xff] %v1232
                %v1234 = vld [vmem:[%s276 + $0x3b90] sm:$0xff]
                %1235 = vst [vmem:[%s277 + $0xef0] sm:$0xff] %v1234
                %v1236 = vld [vmem:[%s276 + $0x3b98] sm:$0xff]
                %1237 = vst [vmem:[%s277 + $0xef8] sm:$0xff] %v1236
                %v1238 = vld [vmem:[%s276 + $0x3c00] sm:$0xff]
                %1239 = vst [vmem:[%s277 + $0xf00] sm:$0xff] %v1238
                %v1240 = vld [vmem:[%s276 + $0x3c08] sm:$0xff]
                %1241 = vst [vmem:[%s277 + $0xf08] sm:$0xff] %v1240
                %v1242 = vld [vmem:[%s276 + $0x3c10] sm:$0xff]
                %1243 = vst [vmem:[%s277 + $0xf10] sm:$0xff] %v1242
                %v1244 = vld [vmem:[%s276 + $0x3c18] sm:$0xff]
                %1245 = vst [vmem:[%s277 + $0xf18] sm:$0xff] %v1244
                %v1246 = vld [vmem:[%s276 + $0x3c80] sm:$0xff]
                %1247 = vst [vmem:[%s277 + $0xf20] sm:$0xff] %v1246
                %v1248 = vld [vmem:[%s276 + $0x3c88] sm:$0xff]
                %1249 = vst [vmem:[%s277 + $0xf28] sm:$0xff] %v1248
                %v1250 = vld [vmem:[%s276 + $0x3c90] sm:$0xff]
                %1251 = vst [vmem:[%s277 + $0xf30] sm:$0xff] %v1250
                %v1252 = vld [vmem:[%s276 + $0x3c98] sm:$0xff]
                %1253 = vst [vmem:[%s277 + $0xf38] sm:$0xff] %v1252
                %v1254 = vld [vmem:[%s276 + $0x3d00] sm:$0xff]
                %1255 = vst [vmem:[%s277 + $0xf40] sm:$0xff] %v1254
                %v1256 = vld [vmem:[%s276 + $0x3d08] sm:$0xff]
                %1257 = vst [vmem:[%s277 + $0xf48] sm:$0xff] %v1256
                %v1258 = vld [vmem:[%s276 + $0x3d10] sm:$0xff]
                %1259 = vst [vmem:[%s277 + $0xf50] sm:$0xff] %v1258
                %v1260 = vld [vmem:[%s276 + $0x3d18] sm:$0xff]
                %1261 = vst [vmem:[%s277 + $0xf58] sm:$0xff] %v1260
                %v1262 = vld [vmem:[%s276 + $0x3d80] sm:$0xff]
                %1263 = vst [vmem:[%s277 + $0xf60] sm:$0xff] %v1262
                %v1264 = vld [vmem:[%s276 + $0x3d88] sm:$0xff]
                %1265 = vst [vmem:[%s277 + $0xf68] sm:$0xff] %v1264
                %v1266 = vld [vmem:[%s276 + $0x3d90] sm:$0xff]
                %1267 = vst [vmem:[%s277 + $0xf70] sm:$0xff] %v1266
                %v1268 = vld [vmem:[%s276 + $0x3d98] sm:$0xff]
                %1269 = vst [vmem:[%s277 + $0xf78] sm:$0xff] %v1268
                %v1270 = vld [vmem:[%s276 + $0x3e00] sm:$0xff]
                %1271 = vst [vmem:[%s277 + $0xf80] sm:$0xff] %v1270
                %v1272 = vld [vmem:[%s276 + $0x3e08] sm:$0xff]
                %1273 = vst [vmem:[%s277 + $0xf88] sm:$0xff] %v1272
                %v1274 = vld [vmem:[%s276 + $0x3e10] sm:$0xff]
                %1275 = vst [vmem:[%s277 + $0xf90] sm:$0xff] %v1274
                %v1276 = vld [vmem:[%s276 + $0x3e18] sm:$0xff]
                %1277 = vst [vmem:[%s277 + $0xf98] sm:$0xff] %v1276
              $region57: #{mini50_forward.1} parent=51 // loop_footer
                %s275 = sadd.s32 1, %s271
              $region58: #{mini50_forward.1} parent=51 // loop_footer_branch
                %270 = sbr.rel target = $region54
              $region59: #{mini50_forward.1} parent=51 // loop_exit
                _
            $region52: #{mini50_forward.1} parent=47 // pred_fallthru
              _
            // Predicated region
            $region60: #{mini50_forward.1} parent=47 // pred_check
              _
            $region61: #{mini50_forward.1} parent=47 // pred_check_branch
              %1279 = sbr.rel target = $region63
            $region62: #{mini50_forward.1} parent=47 // pred_region
              _
            $region63: #{mini50_forward.1} parent=47 // pred_fallthru
              _
          $region48: #{mini50_forward.1} parent=43 // pred_fallthru
            _
          %1280 = vnop
        $region44: #{mini50_forward.1} parent=27 // pred_fallthru
          _
      $region28: #{mini50_forward.1} parent=5 // pred_fallthru
        _
      %p1281 = scmp.le.s32.totalorder 1, %s14
      %p1282 = scmp.lt.s32.totalorder %s14, 5
      %p1283 = pnand %p1281, %p1282
      %p1284 = pneg %p1283
      // Predicated region
      $region64: #{mini50_forward.1} parent=5 // pred_check
        _
      $region65: #{mini50_forward.1} parent=5 // pred_check_branch
        %1286 = sbr.rel (%p1283) target = $region67
      $region66: #{mini50_forward.1} parent=5 // pred_region
        %s1287 = ssub.s32 %s14, 1
        %s1288 = sand.u32 %s147, 1
        %s1289 = sand.u32 %s147, 1
        %s1290 = smul.addr %s1289, 4000
        %s1291 = scalar_lea.vmem [#allocation2], %s1290
        // Predicated region
        $region68: #{mini50_forward.1} parent=66 // pred_check
          %p1292 = pneg %p160
        $region69: #{mini50_forward.1} parent=66 // pred_check_branch
          %1294 = sbr.rel (%p1292) target = $region71
        $region70: #{mini50_forward.1} parent=66 // pred_region
          _
        $region71: #{mini50_forward.1} parent=66 // pred_fallthru
          _
        %p1295 = pneg %p35
        %p1296 = pneg %p32
        %s1297 = smul.u32 64, %s19
        %p1298 = scmp.lt.s32.totalorder %s1297, 255
        %s1299 = scalar_select %p1298, %s1297, 255
        %s1300 = smul.addr %s1299, 4
        %s1301 = smul.addr %s1300, 8
        %s1302 = scalar_lea.vmem %s1, %s1301
        %p1303 = pneg %p61
        %p1304 = pneg %p58
        %s1305 = smul.u32 4, %s19
        %p1306 = scmp.lt.s32.totalorder %s1305, 15
        %s1307 = scalar_select %p1306, %s1305, 15
        %s1308 = scalar_lea.vmem %s2, %s1307
        %p1309 = pneg %p87
        %p1310 = pneg %p84
        %s1311 = smul.u32 4, %s19
        %p1312 = scmp.lt.s32.totalorder %s1311, 15
        %s1313 = scalar_select %p1312, %s1311, 15
        %s1314 = scalar_lea.vmem %s3, %s1313
        %p1315 = pneg %p113
        %p1316 = pneg %p110
        %p1317 = pneg %p134
        %p1318 = pneg %p131
        %s1319 = sand.u32 %s147, 1
        %s1320 = sand.u32 %s147, 1
        %s1321 = smul.addr %s1320, 4000
        %s1322 = scalar_lea.vmem [#allocation2], %s1321
        %p1323 = pneg %p160
        %p1324 = pneg %p157
        %p1325 = pneg %p181
        %p1326 = pneg %p178
        %p1327 = pneg %p202
        %p1328 = pneg %p199
        %s1329 = smul.u32 64, %s19
        %p1330 = scmp.lt.s32.totalorder %s1329, 255
        %s1331 = scalar_select %p1330, %s1329, 255
        %s1332 = smul.addr %s1331, 4
        %s1333 = smul.addr %s1332, 8
        %s1334 = scalar_lea.vmem %s1, %s1333
        %s1335 = smul.u32 64, %s19
        %s1336 = smul.u32 4, %s19
        %p1337 = scmp.lt.s32.totalorder %s1336, 15
        %s1338 = scalar_select %p1337, %s1336, 15
        %s1339 = scalar_lea.vmem %s2, %s1338
        %s1340 = smul.u32 4, %s19
        %s1341 = smul.u32 4, %s19
        %p1342 = scmp.lt.s32.totalorder %s1341, 15
        %s1343 = scalar_select %p1342, %s1341, 15
        %s1344 = scalar_lea.vmem %s3, %s1343
        %s1345 = smul.u32 4, %s19
        %s1346 = smul.u32 4, %s19
        %p1347 = scmp.eq.s32.totalorder %s19, 0
        // Predicated region
        $region72: #{mini50_forward.1} parent=66 // pred_check
          %p1348 = pneg %p1347
        $region73: #{mini50_forward.1} parent=66 // pred_check_branch
          %1350 = sbr.rel (%p1348) target = $region75
        $region74: #{mini50_forward.1} parent=66 // pred_region
          %1351 = vst [vmem:[#allocation3] sm:$0xff] 0.0
          %vm1352 = vcmask 1041408
          %vm1353 = vcmask 1043458
          %vm1354 = vmor %vm1353, %vm1352
          %vm1355 = vcmask 1045508
          %vm1356 = vmor %vm1355, %vm1354
          %vm1357 = vcmask 850950
          %vm1358 = vmor %vm1357, %vm1356
          %1359 = vst.msk [vmem:[#allocation3 + $0x8] sm:$0xff] %vm1358, 0.0
        $region75: #{mini50_forward.1} parent=66 // pred_fallthru
          _
        %v1360 = vld [vmem:[%s0] sm:$0xff]
        %v1361 = vld [vmem:[%s0 + $0x8] sm:$0xff]
        %v1362 = vld [vmem:[%s0 + $0x10] sm:$0xff]
        %v1363 = vld [vmem:[%s0 + $0x18] sm:$0xff]
        %v1364 = vld [vmem:[%s0 + $0x20] sm:$0xff]
        %v1365 = vld [vmem:[%s0 + $0x28] sm:$0xff]
        %v1366 = vld [vmem:[%s0 + $0x30] sm:$0xff]
        %v1367 = vld [vmem:[%s0 + $0x38] sm:$0xff]
        %v1368 = vld [vmem:[%s0 + $0x40] sm:$0xff]
        %v1369 = vld [vmem:[%s0 + $0x48] sm:$0xff]
        %v1370 = vld [vmem:[%s0 + $0x50] sm:$0xff]
        %v1371 = vld [vmem:[%s0 + $0x58] sm:$0xff]
        %v1372 = vld [vmem:[%s0 + $0x60] sm:$0xff]
        %v1373 = vld [vmem:[%s0 + $0x68] sm:$0xff]
        %v1374 = vld [vmem:[%s0 + $0x70] sm:$0xff]
        %v1375 = vld [vmem:[%s0 + $0x78] sm:$0xff]
        %v1376 = vld [vmem:[%s0 + $0x80] sm:$0xff]
        %v1377 = vld [vmem:[%s0 + $0x88] sm:$0xff]
        %v1378 = vld [vmem:[%s0 + $0x90] sm:$0xff]
        %v1379 = vld [vmem:[%s0 + $0x98] sm:$0xff]
        %v1380 = vld [vmem:[%s0 + $0xa0] sm:$0xff]
        %v1381 = vld [vmem:[%s0 + $0xa8] sm:$0xff]
        %v1382 = vld [vmem:[%s0 + $0xb0] sm:$0xff]
        %v1383 = vld [vmem:[%s0 + $0xb8] sm:$0xff]
        %v1384 = vld [vmem:[%s0 + $0xc0] sm:$0xff]
        %v1385 = vld [vmem:[%s0 + $0xc8] sm:$0xff]
        %v1386 = vld [vmem:[%s0 + $0xd0] sm:$0xff]
        %v1387 = vld [vmem:[%s0 + $0xd8] sm:$0xff]
        %v1388 = vld [vmem:[%s0 + $0xe0] sm:$0xff]
        %v1389 = vld [vmem:[%s0 + $0xe8] sm:$0xff]
        %v1390 = vld [vmem:[%s0 + $0xf0] sm:$0xff]
        %v1391 = vld [vmem:[%s0 + $0xf8] sm:$0xff]
        %v1392 = vld [vmem:[%s0 + $0x100] sm:$0xff]
        %v1393 = vld [vmem:[%s0 + $0x108] sm:$0xff]
        %v1394 = vld [vmem:[%s0 + $0x110] sm:$0xff]
        %v1395 = vld [vmem:[%s0 + $0x118] sm:$0xff]
        %v1396 = vld [vmem:[%s0 + $0x120] sm:$0xff]
        %v1397 = vld [vmem:[%s0 + $0x128] sm:$0xff]
        %v1398 = vld [vmem:[%s0 + $0x130] sm:$0xff]
        %v1399 = vld [vmem:[%s0 + $0x138] sm:$0xff]
        %v1400 = vld [vmem:[%s0 + $0x140] sm:$0xff]
        %v1401 = vld [vmem:[%s0 + $0x148] sm:$0xff]
        %v1402 = vld [vmem:[%s0 + $0x150] sm:$0xff]
        %v1403 = vld [vmem:[%s0 + $0x158] sm:$0xff]
        %v1404 = vld [vmem:[%s0 + $0x160] sm:$0xff]
        %v1405 = vld [vmem:[%s0 + $0x168] sm:$0xff]
        %v1406 = vld [vmem:[%s0 + $0x170] sm:$0xff]
        %v1407 = vld [vmem:[%s0 + $0x178] sm:$0xff]
        %v1408 = vld [vmem:[%s0 + $0x180] sm:$0x3]
        %v1409 = vld [vmem:[%s0 + $0x188] sm:$0x3]
        %v1410 = vld [vmem:[%s0 + $0x190] sm:$0x3]
        %v1411 = vld [vmem:[%s0 + $0x198] sm:$0x3]
        %v1412 = vld [vmem:[%s1334] sm:$0xff]
        %v1413 = vld [vmem:[%s1334 + $0x8] sm:$0xff]
        %v1414 = vld [vmem:[%s1334 + $0x10] sm:$0xff]
        %v1415 = vld [vmem:[%s1334 + $0x18] sm:$0xff]
        %v1416 = vld [vmem:[%s1334 + $0x20] sm:$0xff]
        %v1417 = vld [vmem:[%s1334 + $0x28] sm:$0xff]
        %v1418 = vld [vmem:[%s1334 + $0x30] sm:$0xff]
        %v1419 = vld [vmem:[%s1334 + $0x38] sm:$0xff]
        %v1420 = vld [vmem:[%s1334 + $0x40] sm:$0xff]
        %v1421 = vld [vmem:[%s1334 + $0x48] sm:$0xff]
        %v1422 = vld [vmem:[%s1334 + $0x50] sm:$0xff]
        %v1423 = vld [vmem:[%s1334 + $0x58] sm:$0xff]
        %v1424 = vld [vmem:[%s1334 + $0x60] sm:$0xff]
        %v1425 = vld [vmem:[%s1334 + $0x68] sm:$0xff]
        %v1426 = vld [vmem:[%s1334 + $0x70] sm:$0xff]
        %v1427 = vld [vmem:[%s1334 + $0x78] sm:$0xff]
        %v1428 = vld [vmem:[%s1334 + $0x80] sm:$0xff]
        %v1429 = vld [vmem:[%s1334 + $0x88] sm:$0xff]
        %v1430 = vld [vmem:[%s1334 + $0x90] sm:$0xff]
        %v1431 = vld [vmem:[%s1334 + $0x98] sm:$0xff]
        %v1432 = vld [vmem:[%s1334 + $0xa0] sm:$0xff]
        %v1433 = vld [vmem:[%s1334 + $0xa8] sm:$0xff]
        %v1434 = vld [vmem:[%s1334 + $0xb0] sm:$0xff]
        %v1435 = vld [vmem:[%s1334 + $0xb8] sm:$0xff]
        %v1436 = vld [vmem:[%s1334 + $0xc0] sm:$0xff]
        %v1437 = vld [vmem:[%s1334 + $0xc8] sm:$0xff]
        %v1438 = vld [vmem:[%s1334 + $0xd0] sm:$0xff]
        %v1439 = vld [vmem:[%s1334 + $0xd8] sm:$0xff]
        %v1440 = vld [vmem:[%s1334 + $0xe0] sm:$0xff]
        %v1441 = vld [vmem:[%s1334 + $0xe8] sm:$0xff]
        %v1442 = vld [vmem:[%s1334 + $0xf0] sm:$0xff]
        %v1443 = vld [vmem:[%s1334 + $0xf8] sm:$0xff]
        %v1444 = vld [vmem:[%s1334 + $0x100] sm:$0xff]
        %v1445 = vld [vmem:[%s1334 + $0x108] sm:$0xff]
        %v1446 = vld [vmem:[%s1334 + $0x110] sm:$0xff]
        %v1447 = vld [vmem:[%s1334 + $0x118] sm:$0xff]
        %v1448 = vld [vmem:[%s1334 + $0x120] sm:$0xff]
        %v1449 = vld [vmem:[%s1334 + $0x128] sm:$0xff]
        %v1450 = vld [vmem:[%s1334 + $0x130] sm:$0xff]
        %v1451 = vld [vmem:[%s1334 + $0x138] sm:$0xff]
        %v1452 = vld [vmem:[%s1334 + $0x140] sm:$0xff]
        %v1453 = vld [vmem:[%s1334 + $0x148] sm:$0xff]
        %v1454 = vld [vmem:[%s1334 + $0x150] sm:$0xff]
        %v1455 = vld [vmem:[%s1334 + $0x158] sm:$0xff]
        %v1456 = vld [vmem:[%s1334 + $0x160] sm:$0xff]
        %v1457 = vld [vmem:[%s1334 + $0x168] sm:$0xff]
        %v1458 = vld [vmem:[%s1334 + $0x170] sm:$0xff]
        %v1459 = vld [vmem:[%s1334 + $0x178] sm:$0xff]
        %v1460 = vld [vmem:[%s1334 + $0x180] sm:$0xff]
        %v1461 = vld [vmem:[%s1334 + $0x188] sm:$0xff]
        %v1462 = vld [vmem:[%s1334 + $0x190] sm:$0xff]
        %v1463 = vld [vmem:[%s1334 + $0x198] sm:$0xff]
        %v1464 = vld [vmem:[%s1334 + $0x1a0] sm:$0xff]
        %v1465 = vld [vmem:[%s1334 + $0x1a8] sm:$0xff]
        %v1466 = vld [vmem:[%s1334 + $0x1b0] sm:$0xff]
        %v1467 = vld [vmem:[%s1334 + $0x1b8] sm:$0xff]
        %v1468 = vld [vmem:[%s1334 + $0x1c0] sm:$0xff]
        %v1469 = vld [vmem:[%s1334 + $0x1c8] sm:$0xff]
        %v1470 = vld [vmem:[%s1334 + $0x1d0] sm:$0xff]
        %v1471 = vld [vmem:[%s1334 + $0x1d8] sm:$0xff]
        %v1472 = vld [vmem:[%s1334 + $0x1e0] sm:$0xff]
        %v1473 = vld [vmem:[%s1334 + $0x1e8] sm:$0xff]
        %v1474 = vld [vmem:[%s1334 + $0x1f0] sm:$0xff]
        %v1475 = vld [vmem:[%s1334 + $0x1f8] sm:$0xff]
        %v1476 = vld [vmem:[%s1334 + $0x200] sm:$0xff]
        %v1477 = vld [vmem:[%s1334 + $0x208] sm:$0xff]
        %v1478 = vld [vmem:[%s1334 + $0x210] sm:$0xff]
        %v1479 = vld [vmem:[%s1334 + $0x218] sm:$0xff]
        %v1480 = vld [vmem:[%s1334 + $0x220] sm:$0xff]
        %v1481 = vld [vmem:[%s1334 + $0x228] sm:$0xff]
        %v1482 = vld [vmem:[%s1334 + $0x230] sm:$0xff]
        %v1483 = vld [vmem:[%s1334 + $0x238] sm:$0xff]
        %v1484 = vld [vmem:[%s1334 + $0x240] sm:$0xff]
        %v1485 = vld [vmem:[%s1334 + $0x248] sm:$0xff]
        %v1486 = vld [vmem:[%s1334 + $0x250] sm:$0xff]
        %v1487 = vld [vmem:[%s1334 + $0x258] sm:$0xff]
        %v1488 = vld [vmem:[%s1334 + $0x260] sm:$0xff]
        %v1489 = vld [vmem:[%s1334 + $0x268] sm:$0xff]
        %v1490 = vld [vmem:[%s1334 + $0x270] sm:$0xff]
        %v1491 = vld [vmem:[%s1334 + $0x278] sm:$0xff]
        %v1492 = vld [vmem:[%s1334 + $0x280] sm:$0xff]
        %v1493 = vld [vmem:[%s1334 + $0x288] sm:$0xff]
        %v1494 = vld [vmem:[%s1334 + $0x290] sm:$0xff]
        %v1495 = vld [vmem:[%s1334 + $0x298] sm:$0xff]
        %v1496 = vld [vmem:[%s1334 + $0x2a0] sm:$0xff]
        %v1497 = vld [vmem:[%s1334 + $0x2a8] sm:$0xff]
        %v1498 = vld [vmem:[%s1334 + $0x2b0] sm:$0xff]
        %v1499 = vld [vmem:[%s1334 + $0x2b8] sm:$0xff]
        %v1500 = vld [vmem:[%s1334 + $0x2c0] sm:$0xff]
        %v1501 = vld [vmem:[%s1334 + $0x2c8] sm:$0xff]
        %v1502 = vld [vmem:[%s1334 + $0x2d0] sm:$0xff]
        %v1503 = vld [vmem:[%s1334 + $0x2d8] sm:$0xff]
        %v1504 = vld [vmem:[%s1334 + $0x2e0] sm:$0xff]
        %v1505 = vld [vmem:[%s1334 + $0x2e8] sm:$0xff]
        %v1506 = vld [vmem:[%s1334 + $0x2f0] sm:$0xff]
        %v1507 = vld [vmem:[%s1334 + $0x2f8] sm:$0xff]
        %v1508 = vld [vmem:[%s1334 + $0x300] sm:$0xff]
        %v1509 = vld [vmem:[%s1334 + $0x308] sm:$0xff]
        %v1510 = vld [vmem:[%s1334 + $0x310] sm:$0xff]
        %v1511 = vld [vmem:[%s1334 + $0x318] sm:$0xff]
        %v1512 = vld [vmem:[%s1334 + $0x320] sm:$0xff]
        %v1513 = vld [vmem:[%s1334 + $0x328] sm:$0xff]
        %v1514 = vld [vmem:[%s1334 + $0x330] sm:$0xff]
        %v1515 = vld [vmem:[%s1334 + $0x338] sm:$0xff]
        %v1516 = vld [vmem:[%s1334 + $0x340] sm:$0xff]
        %v1517 = vld [vmem:[%s1334 + $0x348] sm:$0xff]
        %v1518 = vld [vmem:[%s1334 + $0x350] sm:$0xff]
        %v1519 = vld [vmem:[%s1334 + $0x358] sm:$0xff]
        %v1520 = vld [vmem:[%s1334 + $0x360] sm:$0xff]
        %v1521 = vld [vmem:[%s1334 + $0x368] sm:$0xff]
        %v1522 = vld [vmem:[%s1334 + $0x370] sm:$0xff]
        %v1523 = vld [vmem:[%s1334 + $0x378] sm:$0xff]
        %v1524 = vld [vmem:[%s1334 + $0x380] sm:$0xff]
        %v1525 = vld [vmem:[%s1334 + $0x388] sm:$0xff]
        %v1526 = vld [vmem:[%s1334 + $0x390] sm:$0xff]
        %v1527 = vld [vmem:[%s1334 + $0x398] sm:$0xff]
        %v1528 = vld [vmem:[%s1334 + $0x3a0] sm:$0xff]
        %v1529 = vld [vmem:[%s1334 + $0x3a8] sm:$0xff]
        %v1530 = vld [vmem:[%s1334 + $0x3b0] sm:$0xff]
        %v1531 = vld [vmem:[%s1334 + $0x3b8] sm:$0xff]
        %v1532 = vld [vmem:[%s1334 + $0x3c0] sm:$0xff]
        %v1533 = vld [vmem:[%s1334 + $0x3c8] sm:$0xff]
        %v1534 = vld [vmem:[%s1334 + $0x3d0] sm:$0xff]
        %v1535 = vld [vmem:[%s1334 + $0x3d8] sm:$0xff]
        %v1536 = vld [vmem:[%s1334 + $0x3e0] sm:$0xff]
        %v1537 = vld [vmem:[%s1334 + $0x3e8] sm:$0xff]
        %v1538 = vld [vmem:[%s1334 + $0x3f0] sm:$0xff]
        %v1539 = vld [vmem:[%s1334 + $0x3f8] sm:$0xff]
        %v1540 = vld [vmem:[%s1334 + $0x400] sm:$0xff]
        %v1541 = vld [vmem:[%s1334 + $0x408] sm:$0xff]
        %v1542 = vld [vmem:[%s1334 + $0x410] sm:$0xff]
        %v1543 = vld [vmem:[%s1334 + $0x418] sm:$0xff]
        %v1544 = vld [vmem:[%s1334 + $0x420] sm:$0xff]
        %v1545 = vld [vmem:[%s1334 + $0x428] sm:$0xff]
        %v1546 = vld [vmem:[%s1334 + $0x430] sm:$0xff]
        %v1547 = vld [vmem:[%s1334 + $0x438] sm:$0xff]
        %v1548 = vld [vmem:[%s1334 + $0x440] sm:$0xff]
        %v1549 = vld [vmem:[%s1334 + $0x448] sm:$0xff]
        %v1550 = vld [vmem:[%s1334 + $0x450] sm:$0xff]
        %v1551 = vld [vmem:[%s1334 + $0x458] sm:$0xff]
        %v1552 = vld [vmem:[%s1334 + $0x460] sm:$0xff]
        %v1553 = vld [vmem:[%s1334 + $0x468] sm:$0xff]
        %v1554 = vld [vmem:[%s1334 + $0x470] sm:$0xff]
        %v1555 = vld [vmem:[%s1334 + $0x478] sm:$0xff]
        %v1556 = vld [vmem:[%s1334 + $0x480] sm:$0xff]
        %v1557 = vld [vmem:[%s1334 + $0x488] sm:$0xff]
        %v1558 = vld [vmem:[%s1334 + $0x490] sm:$0xff]
        %v1559 = vld [vmem:[%s1334 + $0x498] sm:$0xff]
        %v1560 = vld [vmem:[%s1334 + $0x4a0] sm:$0xff]
        %v1561 = vld [vmem:[%s1334 + $0x4a8] sm:$0xff]
        %v1562 = vld [vmem:[%s1334 + $0x4b0] sm:$0xff]
        %v1563 = vld [vmem:[%s1334 + $0x4b8] sm:$0xff]
        %v1564 = vld [vmem:[%s1334 + $0x4c0] sm:$0xff]
        %v1565 = vld [vmem:[%s1334 + $0x4c8] sm:$0xff]
        %v1566 = vld [vmem:[%s1334 + $0x4d0] sm:$0xff]
        %v1567 = vld [vmem:[%s1334 + $0x4d8] sm:$0xff]
        %v1568 = vld [vmem:[%s1334 + $0x4e0] sm:$0xff]
        %v1569 = vld [vmem:[%s1334 + $0x4e8] sm:$0xff]
        %v1570 = vld [vmem:[%s1334 + $0x4f0] sm:$0xff]
        %v1571 = vld [vmem:[%s1334 + $0x4f8] sm:$0xff]
        %v1572 = vld [vmem:[%s1334 + $0x500] sm:$0xff]
        %v1573 = vld [vmem:[%s1334 + $0x508] sm:$0xff]
        %v1574 = vld [vmem:[%s1334 + $0x510] sm:$0xff]
        %v1575 = vld [vmem:[%s1334 + $0x518] sm:$0xff]
        %v1576 = vld [vmem:[%s1334 + $0x520] sm:$0xff]
        %v1577 = vld [vmem:[%s1334 + $0x528] sm:$0xff]
        %v1578 = vld [vmem:[%s1334 + $0x530] sm:$0xff]
        %v1579 = vld [vmem:[%s1334 + $0x538] sm:$0xff]
        %v1580 = vld [vmem:[%s1334 + $0x540] sm:$0xff]
        %v1581 = vld [vmem:[%s1334 + $0x548] sm:$0xff]
        %v1582 = vld [vmem:[%s1334 + $0x550] sm:$0xff]
        %v1583 = vld [vmem:[%s1334 + $0x558] sm:$0xff]
        %v1584 = vld [vmem:[%s1334 + $0x560] sm:$0xff]
        %v1585 = vld [vmem:[%s1334 + $0x568] sm:$0xff]
        %v1586 = vld [vmem:[%s1334 + $0x570] sm:$0xff]
        %v1587 = vld [vmem:[%s1334 + $0x578] sm:$0xff]
        %v1588 = vld [vmem:[%s1334 + $0x580] sm:$0xff]
        %v1589 = vld [vmem:[%s1334 + $0x588] sm:$0xff]
        %v1590 = vld [vmem:[%s1334 + $0x590] sm:$0xff]
        %v1591 = vld [vmem:[%s1334 + $0x598] sm:$0xff]
        %v1592 = vld [vmem:[%s1334 + $0x5a0] sm:$0xff]
        %v1593 = vld [vmem:[%s1334 + $0x5a8] sm:$0xff]
        %v1594 = vld [vmem:[%s1334 + $0x5b0] sm:$0xff]
        %v1595 = vld [vmem:[%s1334 + $0x5b8] sm:$0xff]
        %v1596 = vld [vmem:[%s1334 + $0x5c0] sm:$0xff]
        %v1597 = vld [vmem:[%s1334 + $0x5c8] sm:$0xff]
        %v1598 = vld [vmem:[%s1334 + $0x5d0] sm:$0xff]
        %v1599 = vld [vmem:[%s1334 + $0x5d8] sm:$0xff]
        %v1600 = vld [vmem:[%s1334 + $0x5e0] sm:$0xff]
        %v1601 = vld [vmem:[%s1334 + $0x5e8] sm:$0xff]
        %v1602 = vld [vmem:[%s1334 + $0x5f0] sm:$0xff]
        %v1603 = vld [vmem:[%s1334 + $0x5f8] sm:$0xff]
        %v1604 = vld [vmem:[%s1334 + $0x600] sm:$0xff]
        %v1605 = vld [vmem:[%s1334 + $0x608] sm:$0xff]
        %v1606 = vld [vmem:[%s1334 + $0x610] sm:$0xff]
        %v1607 = vld [vmem:[%s1334 + $0x618] sm:$0xff]
        %v1608 = vld [vmem:[%s1334 + $0x620] sm:$0xff]
        %v1609 = vld [vmem:[%s1334 + $0x628] sm:$0xff]
        %v1610 = vld [vmem:[%s1334 + $0x630] sm:$0xff]
        %v1611 = vld [vmem:[%s1334 + $0x638] sm:$0xff]
        %v1612 = vld [vmem:[%s1334 + $0x640] sm:$0xff]
        %v1613 = vld [vmem:[%s1334 + $0x648] sm:$0xff]
        %v1614 = vld [vmem:[%s1334 + $0x650] sm:$0xff]
        %v1615 = vld [vmem:[%s1334 + $0x658] sm:$0xff]
        %v1616 = vld [vmem:[%s1334 + $0x660] sm:$0xff]
        %v1617 = vld [vmem:[%s1334 + $0x668] sm:$0xff]
        %v1618 = vld [vmem:[%s1334 + $0x670] sm:$0xff]
        %v1619 = vld [vmem:[%s1334 + $0x678] sm:$0xff]
        %v1620 = vld [vmem:[%s1334 + $0x680] sm:$0xff]
        %v1621 = vld [vmem:[%s1334 + $0x688] sm:$0xff]
        %v1622 = vld [vmem:[%s1334 + $0x690] sm:$0xff]
        %v1623 = vld [vmem:[%s1334 + $0x698] sm:$0xff]
        %v1624 = vld [vmem:[%s1334 + $0x6a0] sm:$0xff]
        %v1625 = vld [vmem:[%s1334 + $0x6a8] sm:$0xff]
        %v1626 = vld [vmem:[%s1334 + $0x6b0] sm:$0xff]
        %v1627 = vld [vmem:[%s1334 + $0x6b8] sm:$0xff]
        %v1628 = vld [vmem:[%s1334 + $0x6c0] sm:$0xff]
        %v1629 = vld [vmem:[%s1334 + $0x6c8] sm:$0xff]
        %v1630 = vld [vmem:[%s1334 + $0x6d0] sm:$0xff]
        %v1631 = vld [vmem:[%s1334 + $0x6d8] sm:$0xff]
        %v1632 = vld [vmem:[%s1334 + $0x6e0] sm:$0xff]
        %v1633 = vld [vmem:[%s1334 + $0x6e8] sm:$0xff]
        %v1634 = vld [vmem:[%s1334 + $0x6f0] sm:$0xff]
        %v1635 = vld [vmem:[%s1334 + $0x6f8] sm:$0xff]
        %v1636 = vld [vmem:[%s1334 + $0x700] sm:$0xff]
        %v1637 = vld [vmem:[%s1334 + $0x708] sm:$0xff]
        %v1638 = vld [vmem:[%s1334 + $0x710] sm:$0xff]
        %v1639 = vld [vmem:[%s1334 + $0x718] sm:$0xff]
        %v1640 = vld [vmem:[%s1334 + $0x720] sm:$0xff]
        %v1641 = vld [vmem:[%s1334 + $0x728] sm:$0xff]
        %v1642 = vld [vmem:[%s1334 + $0x730] sm:$0xff]
        %v1643 = vld [vmem:[%s1334 + $0x738] sm:$0xff]
        %v1644 = vld [vmem:[%s1334 + $0x740] sm:$0xff]
        %v1645 = vld [vmem:[%s1334 + $0x748] sm:$0xff]
        %v1646 = vld [vmem:[%s1334 + $0x750] sm:$0xff]
        %v1647 = vld [vmem:[%s1334 + $0x758] sm:$0xff]
        %v1648 = vld [vmem:[%s1334 + $0x760] sm:$0xff]
        %v1649 = vld [vmem:[%s1334 + $0x768] sm:$0xff]
        %v1650 = vld [vmem:[%s1334 + $0x770] sm:$0xff]
        %v1651 = vld [vmem:[%s1334 + $0x778] sm:$0xff]
        %v1652 = vld [vmem:[%s1334 + $0x780] sm:$0xff]
        %v1653 = vld [vmem:[%s1334 + $0x788] sm:$0xff]
        %v1654 = vld [vmem:[%s1334 + $0x790] sm:$0xff]
        %v1655 = vld [vmem:[%s1334 + $0x798] sm:$0xff]
        %v1656 = vld [vmem:[%s1334 + $0x7a0] sm:$0xff]
        %v1657 = vld [vmem:[%s1334 + $0x7a8] sm:$0xff]
        %v1658 = vld [vmem:[%s1334 + $0x7b0] sm:$0xff]
        %v1659 = vld [vmem:[%s1334 + $0x7b8] sm:$0xff]
        %v1660 = vld [vmem:[%s1334 + $0x7c0] sm:$0xff]
        %v1661 = vld [vmem:[%s1334 + $0x7c8] sm:$0xff]
        %v1662 = vld [vmem:[%s1334 + $0x7d0] sm:$0xff]
        %v1663 = vld [vmem:[%s1334 + $0x7d8] sm:$0xff]
        %v1664 = vld [vmem:[%s1334 + $0x7e0] sm:$0xff]
        %v1665 = vld [vmem:[%s1334 + $0x7e8] sm:$0xff]
        %v1666 = vld [vmem:[%s1334 + $0x7f0] sm:$0xff]
        %v1667 = vld [vmem:[%s1334 + $0x7f8] sm:$0xff]
        %1668 = vmatprep.subr.mxu0 %v1473
        %1669 = vmatpush1.xpose.msra.mxu0 %v1472
        %1670 = vmatprep.subr.mxu0 %v1469
        %1671 = vmatpush1.xpose.msra.mxu0 %v1468
        %1672 = vmatprep.subr.mxu0 %v1465
        %1673 = vmatpush1.xpose.msra.mxu0 %v1464
        %1674 = vmatprep.subr.mxu0 %v1461
        %1675 = vmatpush1.xpose.msra.mxu0 %v1460
        %1676 = vmatprep.subr.mxu0 %v1457
        %1677 = vmatpush1.xpose.msra.mxu0 %v1456
        %1678 = vmatprep.subr.mxu0 %v1453
        %1679 = vmatpush1.xpose.msra.mxu0 %v1452
        %1680 = vmatprep.subr.mxu0 %v1449
        %1681 = vmatpush1.xpose.msra.mxu0 %v1448
        %1682 = vmatprep.subr.mxu0 %v1445
        %1683 = vmatpush1.xpose.msra.mxu0 %v1444
        %1684 = vmatprep.subr.mxu0 %v1441
        %1685 = vmatpush1.xpose.msra.mxu0 %v1440
        %1686 = vmatprep.subr.mxu0 %v1437
        %1687 = vmatpush1.xpose.msra.mxu0 %v1436
        %1688 = vmatprep.subr.mxu0 %v1433
        %1689 = vmatpush1.xpose.msra.mxu0 %v1432
        %1690 = vmatprep.subr.mxu0 %v1429
        %1691 = vmatpush1.xpose.msra.mxu0 %v1428
        %1692 = vmatprep.subr.mxu0 %v1425
        %1693 = vmatpush1.xpose.msra.mxu0 %v1424
        %1694 = vmatprep.subr.mxu0 %v1421
        %1695 = vmatpush1.xpose.msra.mxu0 %v1420
        %1696 = vmatprep.subr.mxu0 %v1417
        %1697 = vmatpush1.xpose.msra.mxu0 %v1416
        %1698 = vmatprep.subr.mxu0 %v1413
        %1699 = vmatpush1.xpose.msra.mxu0 %v1412
        %1700 = vmatprep.subr.mxu0 %v1537
        %1701 = vmatpush2.xpose.msra.mxu0 %v1536
        %1702 = vmatprep.subr.mxu0 %v1533
        %1703 = vmatpush2.xpose.msra.mxu0 %v1532
        %1704 = vmatprep.subr.mxu0 %v1529
        %1705 = vmatpush2.xpose.msra.mxu0 %v1528
        %1706 = vmatprep.subr.mxu0 %v1525
        %1707 = vmatpush2.xpose.msra.mxu0 %v1524
        %1708 = vmatprep.subr.mxu0 %v1521
        %1709 = vmatpush2.xpose.msra.mxu0 %v1520
        %1710 = vmatprep.subr.mxu0 %v1517
        %1711 = vmatpush2.xpose.msra.mxu0 %v1516
        %1712 = vmatprep.subr.mxu0 %v1513
        %1713 = vmatpush2.xpose.msra.mxu0 %v1512
        %1714 = vmatprep.subr.mxu0 %v1509
        %1715 = vmatpush2.xpose.msra.mxu0 %v1508
        %1716 = vmatprep.subr.mxu0 %v1505
        %1717 = vmatpush2.xpose.msra.mxu0 %v1504
        %1718 = vmatprep.subr.mxu0 %v1501
        %1719 = vmatpush2.xpose.msra.mxu0 %v1500
        %1720 = vmatprep.subr.mxu0 %v1497
        %1721 = vmatpush2.xpose.msra.mxu0 %v1496
        %1722 = vmatprep.subr.mxu0 %v1493
        %1723 = vmatpush2.xpose.msra.mxu0 %v1492
        %1724 = vmatprep.subr.mxu0 %v1489
        %1725 = vmatpush2.xpose.msra.mxu0 %v1488
        %1726 = vmatprep.subr.mxu0 %v1485
        %1727 = vmatpush2.xpose.msra.mxu0 %v1484
        %1728 = vmatprep.subr.mxu0 %v1481
        %1729 = vmatpush2.xpose.msra.mxu0 %v1480
        %1730 = vmatprep.subr.mxu0 %v1477
        %1731 = vmatpush2.xpose.msra.mxu0 %v1476
        %1732 = vmatprep.mubr.f32.mxu0 %v1361
        %1733 = vmatmul.mubr.f32.gmra.mxu0 %v1360
        %v1734 = vpop.f32.mrf.mxu0
        %v1735 = vadd.f32 0.0, %v1734
        %v1736 = vpop.f32.mrf.mxu0
        %v1737 = vadd.f32 0.0, %v1736
        %1738 = vmatprep.mubr.f32.mxu0 %v1365
        %1739 = vmatmul.mubr.f32.gmra.mxu0 %v1364
        %v1740 = vpop.f32.mrf.mxu0
        %v1741 = vadd.f32 0.0, %v1740
        %v1742 = vpop.f32.mrf.mxu0
        %v1743 = vadd.f32 0.0, %v1742
        %1744 = vmatprep.mubr.f32.mxu0 %v1369
        %1745 = vmatmul.mubr.f32.gmra.mxu0 %v1368
        %v1746 = vpop.f32.mrf.mxu0
        %v1747 = vadd.f32 0.0, %v1746
        %v1748 = vpop.f32.mrf.mxu0
        %v1749 = vadd.f32 0.0, %v1748
        %1750 = vmatprep.mubr.f32.mxu0 %v1373
        %1751 = vmatmul.mubr.f32.gmra.mxu0 %v1372
        %v1752 = vpop.f32.mrf.mxu0
        %v1753 = vadd.f32 0.0, %v1752
        %v1754 = vpop.f32.mrf.mxu0
        %v1755 = vadd.f32 0.0, %v1754
        %1756 = vmatprep.mubr.f32.mxu0 %v1377
        %1757 = vmatmul.mubr.f32.gmra.mxu0 %v1376
        %v1758 = vpop.f32.mrf.mxu0
        %v1759 = vadd.f32 0.0, %v1758
        %v1760 = vpop.f32.mrf.mxu0
        %v1761 = vadd.f32 0.0, %v1760
        %1762 = vmatprep.mubr.f32.mxu0 %v1381
        %1763 = vmatmul.mubr.f32.gmra.mxu0 %v1380
        %v1764 = vpop.f32.mrf.mxu0
        %v1765 = vadd.f32 0.0, %v1764
        %v1766 = vpop.f32.mrf.mxu0
        %v1767 = vadd.f32 0.0, %v1766
        %1768 = vmatprep.mubr.f32.mxu0 %v1385
        %1769 = vmatmul.mubr.f32.gmra.mxu0 %v1384
        %v1770 = vpop.f32.mrf.mxu0
        %v1771 = vadd.f32 0.0, %v1770
        %v1772 = vpop.f32.mrf.mxu0
        %v1773 = vadd.f32 0.0, %v1772
        %1774 = vmatprep.mubr.f32.mxu0 %v1389
        %1775 = vmatmul.mubr.f32.gmra.mxu0 %v1388
        %v1776 = vpop.f32.mrf.mxu0
        %v1777 = vadd.f32 0.0, %v1776
        %v1778 = vpop.f32.mrf.mxu0
        %v1779 = vadd.f32 0.0, %v1778
        %1780 = vmatprep.mubr.f32.mxu0 %v1393
        %1781 = vmatmul.mubr.f32.gmra.mxu0 %v1392
        %v1782 = vpop.f32.mrf.mxu0
        %v1783 = vadd.f32 0.0, %v1782
        %v1784 = vpop.f32.mrf.mxu0
        %v1785 = vadd.f32 0.0, %v1784
        %1786 = vmatprep.mubr.f32.mxu0 %v1397
        %1787 = vmatmul.mubr.f32.gmra.mxu0 %v1396
        %v1788 = vpop.f32.mrf.mxu0
        %v1789 = vadd.f32 0.0, %v1788
        %v1790 = vpop.f32.mrf.mxu0
        %v1791 = vadd.f32 0.0, %v1790
        %1792 = vmatprep.mubr.f32.mxu0 %v1401
        %1793 = vmatmul.mubr.f32.gmra.mxu0 %v1400
        %v1794 = vpop.f32.mrf.mxu0
        %v1795 = vadd.f32 0.0, %v1794
        %v1796 = vpop.f32.mrf.mxu0
        %v1797 = vadd.f32 0.0, %v1796
        %1798 = vmatprep.mubr.f32.mxu0 %v1405
        %1799 = vmatmul.mubr.f32.gmra.mxu0 %v1404
        %v1800 = vpop.f32.mrf.mxu0
        %v1801 = vadd.f32 0.0, %v1800
        %v1802 = vpop.f32.mrf.mxu0
        %v1803 = vadd.f32 0.0, %v1802
        %1804 = vmatprep.mubr.f32.mxu0 %v1409
        %1805 = vmatmul.mubr.f32.gmra.mxu0 %v1408
        %v1806 = vpop.f32.mrf.mxu0
        %v1807 = vadd.f32 0.0, %v1806
        %v1808 = vpop.f32.mrf.mxu0
        %v1809 = vadd.f32 0.0, %v1808
        %1810 = vdwg.mxu0
        %1811 = vmatprep.subr.mxu0 %v1475
        %1812 = vmatpush1.xpose.msra.mxu0 %v1474
        %1813 = vmatprep.subr.mxu0 %v1471
        %1814 = vmatpush1.xpose.msra.mxu0 %v1470
        %1815 = vmatprep.subr.mxu0 %v1467
        %1816 = vmatpush1.xpose.msra.mxu0 %v1466
        %1817 = vmatprep.subr.mxu0 %v1463
        %1818 = vmatpush1.xpose.msra.mxu0 %v1462
        %1819 = vmatprep.subr.mxu0 %v1459
        %1820 = vmatpush1.xpose.msra.mxu0 %v1458
        %1821 = vmatprep.subr.mxu0 %v1455
        %1822 = vmatpush1.xpose.msra.mxu0 %v1454
        %1823 = vmatprep.subr.mxu0 %v1451
        %1824 = vmatpush1.xpose.msra.mxu0 %v1450
        %1825 = vmatprep.subr.mxu0 %v1447
        %1826 = vmatpush1.xpose.msra.mxu0 %v1446
        %1827 = vmatprep.subr.mxu0 %v1443
        %1828 = vmatpush1.xpose.msra.mxu0 %v1442
        %1829 = vmatprep.subr.mxu0 %v1439
        %1830 = vmatpush1.xpose.msra.mxu0 %v1438
        %1831 = vmatprep.subr.mxu0 %v1435
        %1832 = vmatpush1.xpose.msra.mxu0 %v1434
        %1833 = vmatprep.subr.mxu0 %v1431
        %1834 = vmatpush1.xpose.msra.mxu0 %v1430
        %1835 = vmatprep.subr.mxu0 %v1427
        %1836 = vmatpush1.xpose.msra.mxu0 %v1426
        %1837 = vmatprep.subr.mxu0 %v1423
        %1838 = vmatpush1.xpose.msra.mxu0 %v1422
        %1839 = vmatprep.subr.mxu0 %v1419
        %1840 = vmatpush1.xpose.msra.mxu0 %v1418
        %1841 = vmatprep.subr.mxu0 %v1415
        %1842 = vmatpush1.xpose.msra.mxu0 %v1414
        %1843 = vmatprep.subr.mxu0 %v1539
        %1844 = vmatpush2.xpose.msra.mxu0 %v1538
        %1845 = vmatprep.subr.mxu0 %v1535
        %1846 = vmatpush2.xpose.msra.mxu0 %v1534
        %1847 = vmatprep.subr.mxu0 %v1531
        %1848 = vmatpush2.xpose.msra.mxu0 %v1530
        %1849 = vmatprep.subr.mxu0 %v1527
        %1850 = vmatpush2.xpose.msra.mxu0 %v1526
        %1851 = vmatprep.subr.mxu0 %v1523
        %1852 = vmatpush2.xpose.msra.mxu0 %v1522
        %1853 = vmatprep.subr.mxu0 %v1519
        %1854 = vmatpush2.xpose.msra.mxu0 %v1518
        %1855 = vmatprep.subr.mxu0 %v1515
        %1856 = vmatpush2.xpose.msra.mxu0 %v1514
        %1857 = vmatprep.subr.mxu0 %v1511
        %1858 = vmatpush2.xpose.msra.mxu0 %v1510
        %1859 = vmatprep.subr.mxu0 %v1507
        %1860 = vmatpush2.xpose.msra.mxu0 %v1506
        %1861 = vmatprep.subr.mxu0 %v1503
        %1862 = vmatpush2.xpose.msra.mxu0 %v1502
        %1863 = vmatprep.subr.mxu0 %v1499
        %1864 = vmatpush2.xpose.msra.mxu0 %v1498
        %1865 = vmatprep.subr.mxu0 %v1495
        %1866 = vmatpush2.xpose.msra.mxu0 %v1494
        %1867 = vmatprep.subr.mxu0 %v1491
        %1868 = vmatpush2.xpose.msra.mxu0 %v1490
        %1869 = vmatprep.subr.mxu0 %v1487
        %1870 = vmatpush2.xpose.msra.mxu0 %v1486
        %1871 = vmatprep.subr.mxu0 %v1483
        %1872 = vmatpush2.xpose.msra.mxu0 %v1482
        %1873 = vmatprep.subr.mxu0 %v1479
        %1874 = vmatpush2.xpose.msra.mxu0 %v1478
        %1875 = vmatprep.mubr.f32.mxu0 %v1363
        %1876 = vmatmul.mubr.f32.gmra.mxu0 %v1362
        %v1877 = vpop.f32.mrf.mxu0
        %v1878 = vadd.f32 %v1735, %v1877
        %v1879 = vpop.f32.mrf.mxu0
        %v1880 = vadd.f32 %v1737, %v1879
        %1881 = vmatprep.mubr.f32.mxu0 %v1367
        %1882 = vmatmul.mubr.f32.gmra.mxu0 %v1366
        %v1883 = vpop.f32.mrf.mxu0
        %v1884 = vadd.f32 %v1741, %v1883
        %v1885 = vpop.f32.mrf.mxu0
        %v1886 = vadd.f32 %v1743, %v1885
        %1887 = vmatprep.mubr.f32.mxu0 %v1371
        %1888 = vmatmul.mubr.f32.gmra.mxu0 %v1370
        %v1889 = vpop.f32.mrf.mxu0
        %v1890 = vadd.f32 %v1747, %v1889
        %v1891 = vpop.f32.mrf.mxu0
        %v1892 = vadd.f32 %v1749, %v1891
        %1893 = vmatprep.mubr.f32.mxu0 %v1375
        %1894 = vmatmul.mubr.f32.gmra.mxu0 %v1374
        %v1895 = vpop.f32.mrf.mxu0
        %v1896 = vadd.f32 %v1753, %v1895
        %v1897 = vpop.f32.mrf.mxu0
        %v1898 = vadd.f32 %v1755, %v1897
        %1899 = vmatprep.mubr.f32.mxu0 %v1379
        %1900 = vmatmul.mubr.f32.gmra.mxu0 %v1378
        %v1901 = vpop.f32.mrf.mxu0
        %v1902 = vadd.f32 %v1759, %v1901
        %v1903 = vpop.f32.mrf.mxu0
        %v1904 = vadd.f32 %v1761, %v1903
        %1905 = vmatprep.mubr.f32.mxu0 %v1383
        %1906 = vmatmul.mubr.f32.gmra.mxu0 %v1382
        %v1907 = vpop.f32.mrf.mxu0
        %v1908 = vadd.f32 %v1765, %v1907
        %v1909 = vpop.f32.mrf.mxu0
        %v1910 = vadd.f32 %v1767, %v1909
        %1911 = vmatprep.mubr.f32.mxu0 %v1387
        %1912 = vmatmul.mubr.f32.gmra.mxu0 %v1386
        %v1913 = vpop.f32.mrf.mxu0
        %v1914 = vadd.f32 %v1771, %v1913
        %v1915 = vpop.f32.mrf.mxu0
        %v1916 = vadd.f32 %v1773, %v1915
        %1917 = vmatprep.mubr.f32.mxu0 %v1391
        %1918 = vmatmul.mubr.f32.gmra.mxu0 %v1390
        %v1919 = vpop.f32.mrf.mxu0
        %v1920 = vadd.f32 %v1777, %v1919
        %v1921 = vpop.f32.mrf.mxu0
        %v1922 = vadd.f32 %v1779, %v1921
        %1923 = vmatprep.mubr.f32.mxu0 %v1395
        %1924 = vmatmul.mubr.f32.gmra.mxu0 %v1394
        %v1925 = vpop.f32.mrf.mxu0
        %v1926 = vadd.f32 %v1783, %v1925
        %v1927 = vpop.f32.mrf.mxu0
        %v1928 = vadd.f32 %v1785, %v1927
        %1929 = vmatprep.mubr.f32.mxu0 %v1399
        %1930 = vmatmul.mubr.f32.gmra.mxu0 %v1398
        %v1931 = vpop.f32.mrf.mxu0
        %v1932 = vadd.f32 %v1789, %v1931
        %v1933 = vpop.f32.mrf.mxu0
        %v1934 = vadd.f32 %v1791, %v1933
        %1935 = vmatprep.mubr.f32.mxu0 %v1403
        %1936 = vmatmul.mubr.f32.gmra.mxu0 %v1402
        %v1937 = vpop.f32.mrf.mxu0
        %v1938 = vadd.f32 %v1795, %v1937
        %v1939 = vpop.f32.mrf.mxu0
        %v1940 = vadd.f32 %v1797, %v1939
        %1941 = vmatprep.mubr.f32.mxu0 %v1407
        %1942 = vmatmul.mubr.f32.gmra.mxu0 %v1406
        %v1943 = vpop.f32.mrf.mxu0
        %v1944 = vadd.f32 %v1801, %v1943
        %v1945 = vpop.f32.mrf.mxu0
        %v1946 = vadd.f32 %v1803, %v1945
        %1947 = vmatprep.mubr.f32.mxu0 %v1411
        %1948 = vmatmul.mubr.f32.gmra.mxu0 %v1410
        %v1949 = vpop.f32.mrf.mxu0
        %v1950 = vadd.f32 %v1807, %v1949
        %v1951 = vpop.f32.mrf.mxu0
        %v1952 = vadd.f32 %v1809, %v1951
        %1953 = vdwg.mxu0
        %1954 = vmatprep.subr.mxu0 %v1601
        %1955 = vmatpush1.xpose.msra.mxu0 %v1600
        %1956 = vmatprep.subr.mxu0 %v1597
        %1957 = vmatpush1.xpose.msra.mxu0 %v1596
        %1958 = vmatprep.subr.mxu0 %v1593
        %1959 = vmatpush1.xpose.msra.mxu0 %v1592
        %1960 = vmatprep.subr.mxu0 %v1589
        %1961 = vmatpush1.xpose.msra.mxu0 %v1588
        %1962 = vmatprep.subr.mxu0 %v1585
        %1963 = vmatpush1.xpose.msra.mxu0 %v1584
        %1964 = vmatprep.subr.mxu0 %v1581
        %1965 = vmatpush1.xpose.msra.mxu0 %v1580
        %1966 = vmatprep.subr.mxu0 %v1577
        %1967 = vmatpush1.xpose.msra.mxu0 %v1576
        %1968 = vmatprep.subr.mxu0 %v1573
        %1969 = vmatpush1.xpose.msra.mxu0 %v1572
        %1970 = vmatprep.subr.mxu0 %v1569
        %1971 = vmatpush1.xpose.msra.mxu0 %v1568
        %1972 = vmatprep.subr.mxu0 %v1565
        %1973 = vmatpush1.xpose.msra.mxu0 %v1564
        %1974 = vmatprep.subr.mxu0 %v1561
        %1975 = vmatpush1.xpose.msra.mxu0 %v1560
        %1976 = vmatprep.subr.mxu0 %v1557
        %1977 = vmatpush1.xpose.msra.mxu0 %v1556
        %1978 = vmatprep.subr.mxu0 %v1553
        %1979 = vmatpush1.xpose.msra.mxu0 %v1552
        %1980 = vmatprep.subr.mxu0 %v1549
        %1981 = vmatpush1.xpose.msra.mxu0 %v1548
        %1982 = vmatprep.subr.mxu0 %v1545
        %1983 = vmatpush1.xpose.msra.mxu0 %v1544
        %1984 = vmatprep.subr.mxu0 %v1541
        %1985 = vmatpush1.xpose.msra.mxu0 %v1540
        %1986 = vmatprep.subr.mxu0 %v1665
        %1987 = vmatpush2.xpose.msra.mxu0 %v1664
        %1988 = vmatprep.subr.mxu0 %v1661
        %1989 = vmatpush2.xpose.msra.mxu0 %v1660
        %1990 = vmatprep.subr.mxu0 %v1657
        %1991 = vmatpush2.xpose.msra.mxu0 %v1656
        %1992 = vmatprep.subr.mxu0 %v1653
        %1993 = vmatpush2.xpose.msra.mxu0 %v1652
        %1994 = vmatprep.subr.mxu0 %v1649
        %1995 = vmatpush2.xpose.msra.mxu0 %v1648
        %1996 = vmatprep.subr.mxu0 %v1645
        %1997 = vmatpush2.xpose.msra.mxu0 %v1644
        %1998 = vmatprep.subr.mxu0 %v1641
        %1999 = vmatpush2.xpose.msra.mxu0 %v1640
        %2000 = vmatprep.subr.mxu0 %v1637
        %2001 = vmatpush2.xpose.msra.mxu0 %v1636
        %2002 = vmatprep.subr.mxu0 %v1633
        %2003 = vmatpush2.xpose.msra.mxu0 %v1632
        %2004 = vmatprep.subr.mxu0 %v1629
        %2005 = vmatpush2.xpose.msra.mxu0 %v1628
        %2006 = vmatprep.subr.mxu0 %v1625
        %2007 = vmatpush2.xpose.msra.mxu0 %v1624
        %2008 = vmatprep.subr.mxu0 %v1621
        %2009 = vmatpush2.xpose.msra.mxu0 %v1620
        %2010 = vmatprep.subr.mxu0 %v1617
        %2011 = vmatpush2.xpose.msra.mxu0 %v1616
        %2012 = vmatprep.subr.mxu0 %v1613
        %2013 = vmatpush2.xpose.msra.mxu0 %v1612
        %2014 = vmatprep.subr.mxu0 %v1609
        %2015 = vmatpush2.xpose.msra.mxu0 %v1608
        %2016 = vmatprep.subr.mxu0 %v1605
        %2017 = vmatpush2.xpose.msra.mxu0 %v1604
        %2018 = vmatprep.mubr.f32.mxu0 %v1361
        %2019 = vmatmul.mubr.f32.gmra.mxu0 %v1360
        %v2020 = vpop.f32.mrf.mxu0
        %v2021 = vadd.f32 0.0, %v2020
        %v2022 = vpop.f32.mrf.mxu0
        %v2023 = vadd.f32 0.0, %v2022
        %2024 = vmatprep.mubr.f32.mxu0 %v1365
        %2025 = vmatmul.mubr.f32.gmra.mxu0 %v1364
        %v2026 = vpop.f32.mrf.mxu0
        %v2027 = vadd.f32 0.0, %v2026
        %v2028 = vpop.f32.mrf.mxu0
        %v2029 = vadd.f32 0.0, %v2028
        %2030 = vmatprep.mubr.f32.mxu0 %v1369
        %2031 = vmatmul.mubr.f32.gmra.mxu0 %v1368
        %v2032 = vpop.f32.mrf.mxu0
        %v2033 = vadd.f32 0.0, %v2032
        %v2034 = vpop.f32.mrf.mxu0
        %v2035 = vadd.f32 0.0, %v2034
        %2036 = vmatprep.mubr.f32.mxu0 %v1373
        %2037 = vmatmul.mubr.f32.gmra.mxu0 %v1372
        %v2038 = vpop.f32.mrf.mxu0
        %v2039 = vadd.f32 0.0, %v2038
        %v2040 = vpop.f32.mrf.mxu0
        %v2041 = vadd.f32 0.0, %v2040
        %2042 = vmatprep.mubr.f32.mxu0 %v1377
        %2043 = vmatmul.mubr.f32.gmra.mxu0 %v1376
        %v2044 = vpop.f32.mrf.mxu0
        %v2045 = vadd.f32 0.0, %v2044
        %v2046 = vpop.f32.mrf.mxu0
        %v2047 = vadd.f32 0.0, %v2046
        %2048 = vmatprep.mubr.f32.mxu0 %v1381
        %2049 = vmatmul.mubr.f32.gmra.mxu0 %v1380
        %v2050 = vpop.f32.mrf.mxu0
        %v2051 = vadd.f32 0.0, %v2050
        %v2052 = vpop.f32.mrf.mxu0
        %v2053 = vadd.f32 0.0, %v2052
        %2054 = vmatprep.mubr.f32.mxu0 %v1385
        %2055 = vmatmul.mubr.f32.gmra.mxu0 %v1384
        %v2056 = vpop.f32.mrf.mxu0
        %v2057 = vadd.f32 0.0, %v2056
        %v2058 = vpop.f32.mrf.mxu0
        %v2059 = vadd.f32 0.0, %v2058
        %2060 = vmatprep.mubr.f32.mxu0 %v1389
        %2061 = vmatmul.mubr.f32.gmra.mxu0 %v1388
        %v2062 = vpop.f32.mrf.mxu0
        %v2063 = vadd.f32 0.0, %v2062
        %v2064 = vpop.f32.mrf.mxu0
        %v2065 = vadd.f32 0.0, %v2064
        %2066 = vmatprep.mubr.f32.mxu0 %v1393
        %2067 = vmatmul.mubr.f32.gmra.mxu0 %v1392
        %v2068 = vpop.f32.mrf.mxu0
        %v2069 = vadd.f32 0.0, %v2068
        %v2070 = vpop.f32.mrf.mxu0
        %v2071 = vadd.f32 0.0, %v2070
        %2072 = vmatprep.mubr.f32.mxu0 %v1397
        %2073 = vmatmul.mubr.f32.gmra.mxu0 %v1396
        %v2074 = vpop.f32.mrf.mxu0
        %v2075 = vadd.f32 0.0, %v2074
        %v2076 = vpop.f32.mrf.mxu0
        %v2077 = vadd.f32 0.0, %v2076
        %2078 = vmatprep.mubr.f32.mxu0 %v1401
        %2079 = vmatmul.mubr.f32.gmra.mxu0 %v1400
        %v2080 = vpop.f32.mrf.mxu0
        %v2081 = vadd.f32 0.0, %v2080
        %v2082 = vpop.f32.mrf.mxu0
        %v2083 = vadd.f32 0.0, %v2082
        %2084 = vmatprep.mubr.f32.mxu0 %v1405
        %2085 = vmatmul.mubr.f32.gmra.mxu0 %v1404
        %v2086 = vpop.f32.mrf.mxu0
        %v2087 = vadd.f32 0.0, %v2086
        %v2088 = vpop.f32.mrf.mxu0
        %v2089 = vadd.f32 0.0, %v2088
        %2090 = vmatprep.mubr.f32.mxu0 %v1409
        %2091 = vmatmul.mubr.f32.gmra.mxu0 %v1408
        %v2092 = vpop.f32.mrf.mxu0
        %v2093 = vadd.f32 0.0, %v2092
        %v2094 = vpop.f32.mrf.mxu0
        %v2095 = vadd.f32 0.0, %v2094
        %2096 = vdwg.mxu0
        %2097 = vmatprep.subr.mxu0 %v1603
        %2098 = vmatpush1.xpose.msra.mxu0 %v1602
        %2099 = vmatprep.subr.mxu0 %v1599
        %2100 = vmatpush1.xpose.msra.mxu0 %v1598
        %2101 = vmatprep.subr.mxu0 %v1595
        %2102 = vmatpush1.xpose.msra.mxu0 %v1594
        %2103 = vmatprep.subr.mxu0 %v1591
        %2104 = vmatpush1.xpose.msra.mxu0 %v1590
        %2105 = vmatprep.subr.mxu0 %v1587
        %2106 = vmatpush1.xpose.msra.mxu0 %v1586
        %2107 = vmatprep.subr.mxu0 %v1583
        %2108 = vmatpush1.xpose.msra.mxu0 %v1582
        %2109 = vmatprep.subr.mxu0 %v1579
        %2110 = vmatpush1.xpose.msra.mxu0 %v1578
        %2111 = vmatprep.subr.mxu0 %v1575
        %2112 = vmatpush1.xpose.msra.mxu0 %v1574
        %2113 = vmatprep.subr.mxu0 %v1571
        %2114 = vmatpush1.xpose.msra.mxu0 %v1570
        %2115 = vmatprep.subr.mxu0 %v1567
        %2116 = vmatpush1.xpose.msra.mxu0 %v1566
        %2117 = vmatprep.subr.mxu0 %v1563
        %2118 = vmatpush1.xpose.msra.mxu0 %v1562
        %2119 = vmatprep.subr.mxu0 %v1559
        %2120 = vmatpush1.xpose.msra.mxu0 %v1558
        %2121 = vmatprep.subr.mxu0 %v1555
        %2122 = vmatpush1.xpose.msra.mxu0 %v1554
        %2123 = vmatprep.subr.mxu0 %v1551
        %2124 = vmatpush1.xpose.msra.mxu0 %v1550
        %2125 = vmatprep.subr.mxu0 %v1547
        %2126 = vmatpush1.xpose.msra.mxu0 %v1546
        %2127 = vmatprep.subr.mxu0 %v1543
        %2128 = vmatpush1.xpose.msra.mxu0 %v1542
        %2129 = vmatprep.subr.mxu0 %v1667
        %2130 = vmatpush2.xpose.msra.mxu0 %v1666
        %2131 = vmatprep.subr.mxu0 %v1663
        %2132 = vmatpush2.xpose.msra.mxu0 %v1662
        %2133 = vmatprep.subr.mxu0 %v1659
        %2134 = vmatpush2.xpose.msra.mxu0 %v1658
        %2135 = vmatprep.subr.mxu0 %v1655
        %2136 = vmatpush2.xpose.msra.mxu0 %v1654
        %2137 = vmatprep.subr.mxu0 %v1651
        %2138 = vmatpush2.xpose.msra.mxu0 %v1650
        %2139 = vmatprep.subr.mxu0 %v1647
        %2140 = vmatpush2.xpose.msra.mxu0 %v1646
        %2141 = vmatprep.subr.mxu0 %v1643
        %2142 = vmatpush2.xpose.msra.mxu0 %v1642
        %2143 = vmatprep.subr.mxu0 %v1639
        %2144 = vmatpush2.xpose.msra.mxu0 %v1638
        %2145 = vmatprep.subr.mxu0 %v1635
        %2146 = vmatpush2.xpose.msra.mxu0 %v1634
        %2147 = vmatprep.subr.mxu0 %v1631
        %2148 = vmatpush2.xpose.msra.mxu0 %v1630
        %2149 = vmatprep.subr.mxu0 %v1627
        %2150 = vmatpush2.xpose.msra.mxu0 %v1626
        %2151 = vmatprep.subr.mxu0 %v1623
        %2152 = vmatpush2.xpose.msra.mxu0 %v1622
        %2153 = vmatprep.subr.mxu0 %v1619
        %2154 = vmatpush2.xpose.msra.mxu0 %v1618
        %2155 = vmatprep.subr.mxu0 %v1615
        %2156 = vmatpush2.xpose.msra.mxu0 %v1614
        %2157 = vmatprep.subr.mxu0 %v1611
        %2158 = vmatpush2.xpose.msra.mxu0 %v1610
        %2159 = vmatprep.subr.mxu0 %v1607
        %2160 = vmatpush2.xpose.msra.mxu0 %v1606
        %2161 = vmatprep.mubr.f32.mxu0 %v1363
        %2162 = vmatmul.mubr.f32.gmra.mxu0 %v1362
        %v2163 = vpop.f32.mrf.mxu0
        %v2164 = vadd.f32 %v2021, %v2163
        %v2165 = vpop.f32.mrf.mxu0
        %v2166 = vadd.f32 %v2023, %v2165
        %2167 = vmatprep.mubr.f32.mxu0 %v1367
        %2168 = vmatmul.mubr.f32.gmra.mxu0 %v1366
        %v2169 = vpop.f32.mrf.mxu0
        %v2170 = vadd.f32 %v2027, %v2169
        %v2171 = vpop.f32.mrf.mxu0
        %v2172 = vadd.f32 %v2029, %v2171
        %2173 = vmatprep.mubr.f32.mxu0 %v1371
        %2174 = vmatmul.mubr.f32.gmra.mxu0 %v1370
        %v2175 = vpop.f32.mrf.mxu0
        %v2176 = vadd.f32 %v2033, %v2175
        %v2177 = vpop.f32.mrf.mxu0
        %v2178 = vadd.f32 %v2035, %v2177
        %2179 = vmatprep.mubr.f32.mxu0 %v1375
        %2180 = vmatmul.mubr.f32.gmra.mxu0 %v1374
        %v2181 = vpop.f32.mrf.mxu0
        %v2182 = vadd.f32 %v2039, %v2181
        %v2183 = vpop.f32.mrf.mxu0
        %v2184 = vadd.f32 %v2041, %v2183
        %2185 = vmatprep.mubr.f32.mxu0 %v1379
        %2186 = vmatmul.mubr.f32.gmra.mxu0 %v1378
        %v2187 = vpop.f32.mrf.mxu0
        %v2188 = vadd.f32 %v2045, %v2187
        %v2189 = vpop.f32.mrf.mxu0
        %v2190 = vadd.f32 %v2047, %v2189
        %2191 = vmatprep.mubr.f32.mxu0 %v1383
        %2192 = vmatmul.mubr.f32.gmra.mxu0 %v1382
        %v2193 = vpop.f32.mrf.mxu0
        %v2194 = vadd.f32 %v2051, %v2193
        %v2195 = vpop.f32.mrf.mxu0
        %v2196 = vadd.f32 %v2053, %v2195
        %2197 = vmatprep.mubr.f32.mxu0 %v1387
        %2198 = vmatmul.mubr.f32.gmra.mxu0 %v1386
        %v2199 = vpop.f32.mrf.mxu0
        %v2200 = vadd.f32 %v2057, %v2199
        %v2201 = vpop.f32.mrf.mxu0
        %v2202 = vadd.f32 %v2059, %v2201
        %2203 = vmatprep.mubr.f32.mxu0 %v1391
        %2204 = vmatmul.mubr.f32.gmra.mxu0 %v1390
        %v2205 = vpop.f32.mrf.mxu0
        %v2206 = vadd.f32 %v2063, %v2205
        %v2207 = vpop.f32.mrf.mxu0
        %v2208 = vadd.f32 %v2065, %v2207
        %2209 = vmatprep.mubr.f32.mxu0 %v1395
        %2210 = vmatmul.mubr.f32.gmra.mxu0 %v1394
        %v2211 = vpop.f32.mrf.mxu0
        %v2212 = vadd.f32 %v2069, %v2211
        %v2213 = vpop.f32.mrf.mxu0
        %v2214 = vadd.f32 %v2071, %v2213
        %2215 = vmatprep.mubr.f32.mxu0 %v1399
        %2216 = vmatmul.mubr.f32.gmra.mxu0 %v1398
        %v2217 = vpop.f32.mrf.mxu0
        %v2218 = vadd.f32 %v2075, %v2217
        %v2219 = vpop.f32.mrf.mxu0
        %v2220 = vadd.f32 %v2077, %v2219
        %2221 = vmatprep.mubr.f32.mxu0 %v1403
        %2222 = vmatmul.mubr.f32.gmra.mxu0 %v1402
        %v2223 = vpop.f32.mrf.mxu0
        %v2224 = vadd.f32 %v2081, %v2223
        %v2225 = vpop.f32.mrf.mxu0
        %v2226 = vadd.f32 %v2083, %v2225
        %2227 = vmatprep.mubr.f32.mxu0 %v1407
        %2228 = vmatmul.mubr.f32.gmra.mxu0 %v1406
        %v2229 = vpop.f32.mrf.mxu0
        %v2230 = vadd.f32 %v2087, %v2229
        %v2231 = vpop.f32.mrf.mxu0
        %v2232 = vadd.f32 %v2089, %v2231
        %2233 = vmatprep.mubr.f32.mxu0 %v1411
        %2234 = vmatmul.mubr.f32.gmra.mxu0 %v1410
        %v2235 = vpop.f32.mrf.mxu0
        %v2236 = vadd.f32 %v2093, %v2235
        %v2237 = vpop.f32.mrf.mxu0
        %v2238 = vadd.f32 %v2095, %v2237
        %2239 = vdwg.mxu0
        %v2240 = vadd.f32 %v1878, %v1884
        %v2241 = vadd.f32 %v2240, %v1890
        %v2242 = vadd.f32 %v2241, %v1896
        %v2243 = vadd.f32 %v2242, %v1902
        %v2244 = vadd.f32 %v2243, %v1908
        %v2245 = vadd.f32 %v2244, %v1914
        %v2246 = vadd.f32 %v2245, %v1920
        %v2247 = vadd.f32 %v2246, %v1926
        %v2248 = vadd.f32 %v2247, %v1932
        %v2249 = vadd.f32 %v2248, %v1938
        %v2250 = vadd.f32 %v2249, %v1944
        %vm2251 = vcmask 1041408
        %v2252 = vsel %vm2251, %v1950, 0.0
        %v2253 = vadd.f32 %v2250, %v2252
        %v2254 = vrot.slane %v2253, 4
        %v2255 = vadd.f32 %v2253, %v2254
        %v2256 = vrot.slane %v2255, 2
        %v2257 = vadd.f32 %v2255, %v2256
        %v2258 = vrot.slane %v2257, 1
        %v2259 = vadd.f32 %v2257, %v2258
        %v2260 = vadd.f32 %v1880, %v1886
        %v2261 = vadd.f32 %v2260, %v1892
        %v2262 = vadd.f32 %v2261, %v1898
        %v2263 = vadd.f32 %v2262, %v1904
        %v2264 = vadd.f32 %v2263, %v1910
        %v2265 = vadd.f32 %v2264, %v1916
        %v2266 = vadd.f32 %v2265, %v1922
        %v2267 = vadd.f32 %v2266, %v1928
        %v2268 = vadd.f32 %v2267, %v1934
        %v2269 = vadd.f32 %v2268, %v1940
        %v2270 = vadd.f32 %v2269, %v1946
        %v2271 = vsel %vm2251, %v1952, 0.0
        %v2272 = vadd.f32 %v2270, %v2271
        %v2273 = vrot.slane %v2272, 4
        %v2274 = vadd.f32 %v2272, %v2273
        %v2275 = vrot.slane %v2274, 2
        %v2276 = vadd.f32 %v2274, %v2275
        %v2277 = vrot.slane %v2276, 1
        %v2278 = vadd.f32 %v2276, %v2277
        %v2279 = vadd.f32 %v2164, %v2170
        %v2280 = vadd.f32 %v2279, %v2176
        %v2281 = vadd.f32 %v2280, %v2182
        %v2282 = vadd.f32 %v2281, %v2188
        %v2283 = vadd.f32 %v2282, %v2194
        %v2284 = vadd.f32 %v2283, %v2200
        %v2285 = vadd.f32 %v2284, %v2206
        %v2286 = vadd.f32 %v2285, %v2212
        %v2287 = vadd.f32 %v2286, %v2218
        %v2288 = vadd.f32 %v2287, %v2224
        %v2289 = vadd.f32 %v2288, %v2230
        %v2290 = vsel %vm2251, %v2236, 0.0
        %v2291 = vadd.f32 %v2289, %v2290
        %v2292 = vrot.slane %v2291, 4
        %v2293 = vadd.f32 %v2291, %v2292
        %v2294 = vrot.slane %v2293, 2
        %v2295 = vadd.f32 %v2293, %v2294
        %v2296 = vrot.slane %v2295, 1
        %v2297 = vadd.f32 %v2295, %v2296
        %v2298 = vadd.f32 %v2166, %v2172
        %v2299 = vadd.f32 %v2298, %v2178
        %v2300 = vadd.f32 %v2299, %v2184
        %v2301 = vadd.f32 %v2300, %v2190
        %v2302 = vadd.f32 %v2301, %v2196
        %v2303 = vadd.f32 %v2302, %v2202
        %v2304 = vadd.f32 %v2303, %v2208
        %v2305 = vadd.f32 %v2304, %v2214
        %v2306 = vadd.f32 %v2305, %v2220
        %v2307 = vadd.f32 %v2306, %v2226
        %v2308 = vadd.f32 %v2307, %v2232
        %v2309 = vsel %vm2251, %v2238, 0.0
        %v2310 = vadd.f32 %v2308, %v2309
        %v2311 = vrot.slane %v2310, 4
        %v2312 = vadd.f32 %v2310, %v2311
        %v2313 = vrot.slane %v2312, 2
        %v2314 = vadd.f32 %v2312, %v2313
        %v2315 = vrot.slane %v2314, 1
        %v2316 = vadd.f32 %v2314, %v2315
        %v2317 = vmul.f32 %v1878, %v1878
        %v2318 = vmul.f32 %v1880, %v1880
        %v2319 = vmul.f32 %v2164, %v2164
        %v2320 = vmul.f32 %v2166, %v2166
        %v2321 = vmul.f32 %v1884, %v1884
        %v2322 = vmul.f32 %v1886, %v1886
        %v2323 = vmul.f32 %v2170, %v2170
        %v2324 = vmul.f32 %v2172, %v2172
        %v2325 = vmul.f32 %v1890, %v1890
        %v2326 = vmul.f32 %v1892, %v1892
        %v2327 = vmul.f32 %v2176, %v2176
        %v2328 = vmul.f32 %v2178, %v2178
        %v2329 = vmul.f32 %v1896, %v1896
        %v2330 = vmul.f32 %v1898, %v1898
        %v2331 = vmul.f32 %v2182, %v2182
        %v2332 = vmul.f32 %v2184, %v2184
        %v2333 = vmul.f32 %v1902, %v1902
        %v2334 = vmul.f32 %v1904, %v1904
        %v2335 = vmul.f32 %v2188, %v2188
        %v2336 = vmul.f32 %v2190, %v2190
        %v2337 = vmul.f32 %v1908, %v1908
        %v2338 = vmul.f32 %v1910, %v1910
        %v2339 = vmul.f32 %v2194, %v2194
        %v2340 = vmul.f32 %v2196, %v2196
        %v2341 = vmul.f32 %v1914, %v1914
        %v2342 = vmul.f32 %v1916, %v1916
        %v2343 = vmul.f32 %v2200, %v2200
        %v2344 = vmul.f32 %v2202, %v2202
        %v2345 = vmul.f32 %v1920, %v1920
        %v2346 = vmul.f32 %v1922, %v1922
        %v2347 = vmul.f32 %v2206, %v2206
        %v2348 = vmul.f32 %v2208, %v2208
        %v2349 = vmul.f32 %v1926, %v1926
        %v2350 = vmul.f32 %v1928, %v1928
        %v2351 = vmul.f32 %v2212, %v2212
        %v2352 = vmul.f32 %v2214, %v2214
        %v2353 = vmul.f32 %v1932, %v1932
        %v2354 = vmul.f32 %v1934, %v1934
        %v2355 = vmul.f32 %v2218, %v2218
        %v2356 = vmul.f32 %v2220, %v2220
        %v2357 = vmul.f32 %v1938, %v1938
        %v2358 = vmul.f32 %v1940, %v1940
        %v2359 = vmul.f32 %v2224, %v2224
        %v2360 = vmul.f32 %v2226, %v2226
        %v2361 = vmul.f32 %v1944, %v1944
        %v2362 = vmul.f32 %v1946, %v1946
        %v2363 = vmul.f32 %v2230, %v2230
        %v2364 = vmul.f32 %v2232, %v2232
        %v2365 = vmul.f32 %v1950, %v1950
        %v2366 = vmul.f32 %v1952, %v1952
        %v2367 = vmul.f32 %v2236, %v2236
        %v2368 = vmul.f32 %v2238, %v2238
        %v2369 = vadd.f32 %v2317, %v2321
        %v2370 = vadd.f32 %v2369, %v2325
        %v2371 = vadd.f32 %v2370, %v2329
        %v2372 = vadd.f32 %v2371, %v2333
        %v2373 = vadd.f32 %v2372, %v2337
        %v2374 = vadd.f32 %v2373, %v2341
        %v2375 = vadd.f32 %v2374, %v2345
        %v2376 = vadd.f32 %v2375, %v2349
        %v2377 = vadd.f32 %v2376, %v2353
        %v2378 = vadd.f32 %v2377, %v2357
        %v2379 = vadd.f32 %v2378, %v2361
        %v2380 = vsel %vm2251, %v2365, 0.0
        %v2381 = vadd.f32 %v2379, %v2380
        %v2382 = vrot.slane %v2381, 4
        %v2383 = vadd.f32 %v2381, %v2382
        %v2384 = vrot.slane %v2383, 2
        %v2385 = vadd.f32 %v2383, %v2384
        %v2386 = vrot.slane %v2385, 1
        %v2387 = vadd.f32 %v2385, %v2386
        %v2388 = vadd.f32 %v2318, %v2322
        %v2389 = vadd.f32 %v2388, %v2326
        %v2390 = vadd.f32 %v2389, %v2330
        %v2391 = vadd.f32 %v2390, %v2334
        %v2392 = vadd.f32 %v2391, %v2338
        %v2393 = vadd.f32 %v2392, %v2342
        %v2394 = vadd.f32 %v2393, %v2346
        %v2395 = vadd.f32 %v2394, %v2350
        %v2396 = vadd.f32 %v2395, %v2354
        %v2397 = vadd.f32 %v2396, %v2358
        %v2398 = vadd.f32 %v2397, %v2362
        %v2399 = vsel %vm2251, %v2366, 0.0
        %v2400 = vadd.f32 %v2398, %v2399
        %v2401 = vrot.slane %v2400, 4
        %v2402 = vadd.f32 %v2400, %v2401
        %v2403 = vrot.slane %v2402, 2
        %v2404 = vadd.f32 %v2402, %v2403
        %v2405 = vrot.slane %v2404, 1
        %v2406 = vadd.f32 %v2404, %v2405
        %v2407 = vadd.f32 %v2319, %v2323
        %v2408 = vadd.f32 %v2407, %v2327
        %v2409 = vadd.f32 %v2408, %v2331
        %v2410 = vadd.f32 %v2409, %v2335
        %v2411 = vadd.f32 %v2410, %v2339
        %v2412 = vadd.f32 %v2411, %v2343
        %v2413 = vadd.f32 %v2412, %v2347
        %v2414 = vadd.f32 %v2413, %v2351
        %v2415 = vadd.f32 %v2414, %v2355
        %v2416 = vadd.f32 %v2415, %v2359
        %v2417 = vadd.f32 %v2416, %v2363
        %v2418 = vsel %vm2251, %v2367, 0.0
        %v2419 = vadd.f32 %v2417, %v2418
        %v2420 = vrot.slane %v2419, 4
        %v2421 = vadd.f32 %v2419, %v2420
        %v2422 = vrot.slane %v2421, 2
        %v2423 = vadd.f32 %v2421, %v2422
        %v2424 = vrot.slane %v2423, 1
        %v2425 = vadd.f32 %v2423, %v2424
        %v2426 = vadd.f32 %v2320, %v2324
        %v2427 = vadd.f32 %v2426, %v2328
        %v2428 = vadd.f32 %v2427, %v2332
        %v2429 = vadd.f32 %v2428, %v2336
        %v2430 = vadd.f32 %v2429, %v2340
        %v2431 = vadd.f32 %v2430, %v2344
        %v2432 = vadd.f32 %v2431, %v2348
        %v2433 = vadd.f32 %v2432, %v2352
        %v2434 = vadd.f32 %v2433, %v2356
        %v2435 = vadd.f32 %v2434, %v2360
        %v2436 = vadd.f32 %v2435, %v2364
        %v2437 = vsel %vm2251, %v2368, 0.0
        %v2438 = vadd.f32 %v2436, %v2437
        %v2439 = vrot.slane %v2438, 4
        %v2440 = vadd.f32 %v2438, %v2439
        %v2441 = vrot.slane %v2440, 2
        %v2442 = vadd.f32 %v2440, %v2441
        %v2443 = vrot.slane %v2442, 1
        %v2444 = vadd.f32 %v2442, %v2443
        %v2445 = vmul.f32 %v2259, 0.010204081
        %v2446 = vmul.f32 %v2278, 0.010204081
        %v2447 = vmul.f32 %v2297, 0.010204081
        %v2448 = vmul.f32 %v2316, 0.010204081
        %v2449 = vmul.f32 %v2387, 0.010204081
        %v2450 = vmul.f32 %v2406, 0.010204081
        %v2451 = vmul.f32 %v2425, 0.010204081
        %v2452 = vmul.f32 %v2444, 0.010204081
        %v2453 = vmul.f32 %v2445, %v2445
        %v2454 = vmul.f32 %v2446, %v2446
        %v2455 = vmul.f32 %v2447, %v2447
        %v2456 = vmul.f32 %v2448, %v2448
        %v2457 = vsub.f32 %v2449, %v2453
        %v2458 = vsub.f32 %v2450, %v2454
        %v2459 = vsub.f32 %v2451, %v2455
        %v2460 = vsub.f32 %v2452, %v2456
        %v2461 = vld [vmem:[%s1339] sm:$0xf]
        %v2462 = vadd.f32 %v2457, 1e-05
        %v2463 = vadd.f32 %v2458, 1e-05
        %v2464 = vadd.f32 %v2459, 1e-05
        %v2465 = vadd.f32 %v2460, 1e-05
        %v2466 = vrsqrt.pop %v2462
        %v2467 = vrsqrt.pop %v2463
        %v2468 = vrsqrt.pop %v2464
        %v2469 = vrsqrt.pop %v2465
        %v2474 = vcombine.low %v2466, %v2467
        %v2475 = vcombine.low %v2468, %v2469
        %v2477 = vunpack.c.l.s4 1966171168
        %v2478 = vunpack.c.0.s8 %v2477
        %v2479 = vlaneseq
        %v2480 = vshrl.u32 %v2479, 7
        %v2481 = vsub.s32 %v2478, %v2480
        %v2482 = vrot.slane %v2474, %v2481
        %v2484 = vunpack.c.l.s4 1966171168
        %v2485 = vunpack.c.0.s8 %v2484
        %v2486 = vlaneseq
        %v2487 = vshrl.u32 %v2486, 7
        %v2488 = vsub.s32 %v2485, %v2487
        %v2489 = vrot.slane %v2475, %v2488
        %v2490 = vcombine.low %v2482, %v2489
        %v2492 = vunpack.c.l.s4 1966171168
        %v2493 = vunpack.c.0.s8 %v2492
        %v2494 = vlaneseq
        %v2495 = vshrl.u32 %v2494, 7
        %v2496 = vsub.s32 %v2493, %v2495
        %v2497 = vrot.slane %v2490, %v2496
        %v2499 = vmul.f32 %v2461, %v2497
        %v2500 = vld [vmem:[%s1344] sm:$0xf]
        %v2502 = vlaneseq
        %v2503 = vshrl.u32 %v2502, 7
        %v2504 = vsub.s32 0, %v2503
        %v2505 = vrot.slane %v2499, %v2504
        %v2506 = vlaneseq
        %v2507 = vshrl.u32 %v2506, 7
        %v2508 = vsub.s32 1, %v2507
        %v2509 = vrot.slane %v2499, %v2508
        %v2510 = vlaneseq
        %v2511 = vshrl.u32 %v2510, 7
        %v2512 = vsub.s32 2, %v2511
        %v2513 = vrot.slane %v2499, %v2512
        %v2514 = vlaneseq
        %v2515 = vshrl.u32 %v2514, 7
        %v2516 = vsub.s32 3, %v2515
        %v2517 = vrot.slane %v2499, %v2516
        %v2522 = vmul.f32 %v2445, %v2505
        %v2523 = vmul.f32 %v2446, %v2509
        %v2524 = vmul.f32 %v2447, %v2513
        %v2525 = vmul.f32 %v2448, %v2517
        %v2530 = vcombine.low %v2522, %v2523
        %v2531 = vcombine.low %v2524, %v2525
        %v2533 = vunpack.c.l.s4 1966171168
        %v2534 = vunpack.c.0.s8 %v2533
        %v2535 = vlaneseq
        %v2536 = vshrl.u32 %v2535, 7
        %v2537 = vsub.s32 %v2534, %v2536
        %v2538 = vrot.slane %v2530, %v2537
        %v2540 = vunpack.c.l.s4 1966171168
        %v2541 = vunpack.c.0.s8 %v2540
        %v2542 = vlaneseq
        %v2543 = vshrl.u32 %v2542, 7
        %v2544 = vsub.s32 %v2541, %v2543
        %v2545 = vrot.slane %v2531, %v2544
        %v2546 = vcombine.low %v2538, %v2545
        %v2548 = vunpack.c.l.s4 1966171168
        %v2549 = vunpack.c.0.s8 %v2548
        %v2550 = vlaneseq
        %v2551 = vshrl.u32 %v2550, 7
        %v2552 = vsub.s32 %v2549, %v2551
        %v2553 = vrot.slane %v2546, %v2552
        %v2555 = vsub.f32 %v2500, %v2553
        %v2556 = vmul.f32 %v1878, %v2505
        %v2557 = vmul.f32 %v1880, %v2509
        %v2558 = vmul.f32 %v2164, %v2513
        %v2559 = vmul.f32 %v2166, %v2517
        %v2560 = vmul.f32 %v1884, %v2505
        %v2561 = vmul.f32 %v1886, %v2509
        %v2562 = vmul.f32 %v2170, %v2513
        %v2563 = vmul.f32 %v2172, %v2517
        %v2564 = vmul.f32 %v1890, %v2505
        %v2565 = vmul.f32 %v1892, %v2509
        %v2566 = vmul.f32 %v2176, %v2513
        %v2567 = vmul.f32 %v2178, %v2517
        %v2568 = vmul.f32 %v1896, %v2505
        %v2569 = vmul.f32 %v1898, %v2509
        %v2570 = vmul.f32 %v2182, %v2513
        %v2571 = vmul.f32 %v2184, %v2517
        %v2572 = vmul.f32 %v1902, %v2505
        %v2573 = vmul.f32 %v1904, %v2509
        %v2574 = vmul.f32 %v2188, %v2513
        %v2575 = vmul.f32 %v2190, %v2517
        %v2576 = vmul.f32 %v1908, %v2505
        %v2577 = vmul.f32 %v1910, %v2509
        %v2578 = vmul.f32 %v2194, %v2513
        %v2579 = vmul.f32 %v2196, %v2517
        %v2580 = vmul.f32 %v1914, %v2505
        %v2581 = vmul.f32 %v1916, %v2509
        %v2582 = vmul.f32 %v2200, %v2513
        %v2583 = vmul.f32 %v2202, %v2517
        %v2584 = vmul.f32 %v1920, %v2505
        %v2585 = vmul.f32 %v1922, %v2509
        %v2586 = vmul.f32 %v2206, %v2513
        %v2587 = vmul.f32 %v2208, %v2517
        %v2588 = vmul.f32 %v1926, %v2505
        %v2589 = vmul.f32 %v1928, %v2509
        %v2590 = vmul.f32 %v2212, %v2513
        %v2591 = vmul.f32 %v2214, %v2517
        %v2592 = vmul.f32 %v1932, %v2505
        %v2593 = vmul.f32 %v1934, %v2509
        %v2594 = vmul.f32 %v2218, %v2513
        %v2595 = vmul.f32 %v2220, %v2517
        %v2596 = vmul.f32 %v1938, %v2505
        %v2597 = vmul.f32 %v1940, %v2509
        %v2598 = vmul.f32 %v2224, %v2513
        %v2599 = vmul.f32 %v2226, %v2517
        %v2600 = vmul.f32 %v1944, %v2505
        %v2601 = vmul.f32 %v1946, %v2509
        %v2602 = vmul.f32 %v2230, %v2513
        %v2603 = vmul.f32 %v2232, %v2517
        %v2604 = vmul.f32 %v1950, %v2505
        %v2605 = vmul.f32 %v1952, %v2509
        %v2606 = vmul.f32 %v2236, %v2513
        %v2607 = vmul.f32 %v2238, %v2517
        %v2609 = vlaneseq
        %v2610 = vshrl.u32 %v2609, 7
        %v2611 = vsub.s32 0, %v2610
        %v2612 = vrot.slane %v2555, %v2611
        %v2613 = vlaneseq
        %v2614 = vshrl.u32 %v2613, 7
        %v2615 = vsub.s32 1, %v2614
        %v2616 = vrot.slane %v2555, %v2615
        %v2617 = vlaneseq
        %v2618 = vshrl.u32 %v2617, 7
        %v2619 = vsub.s32 2, %v2618
        %v2620 = vrot.slane %v2555, %v2619
        %v2621 = vlaneseq
        %v2622 = vshrl.u32 %v2621, 7
        %v2623 = vsub.s32 3, %v2622
        %v2624 = vrot.slane %v2555, %v2623
        %v2629 = vadd.f32 %v2556, %v2612
        %v2630 = vadd.f32 %v2557, %v2616
        %v2631 = vadd.f32 %v2558, %v2620
        %v2632 = vadd.f32 %v2559, %v2624
        %v2633 = vadd.f32 %v2560, %v2612
        %v2634 = vadd.f32 %v2561, %v2616
        %v2635 = vadd.f32 %v2562, %v2620
        %v2636 = vadd.f32 %v2563, %v2624
        %v2637 = vadd.f32 %v2564, %v2612
        %v2638 = vadd.f32 %v2565, %v2616
        %v2639 = vadd.f32 %v2566, %v2620
        %v2640 = vadd.f32 %v2567, %v2624
        %v2641 = vadd.f32 %v2568, %v2612
        %v2642 = vadd.f32 %v2569, %v2616
        %v2643 = vadd.f32 %v2570, %v2620
        %v2644 = vadd.f32 %v2571, %v2624
        %v2645 = vadd.f32 %v2572, %v2612
        %v2646 = vadd.f32 %v2573, %v2616
        %v2647 = vadd.f32 %v2574, %v2620
        %v2648 = vadd.f32 %v2575, %v2624
        %v2649 = vadd.f32 %v2576, %v2612
        %v2650 = vadd.f32 %v2577, %v2616
        %v2651 = vadd.f32 %v2578, %v2620
        %v2652 = vadd.f32 %v2579, %v2624
        %v2653 = vadd.f32 %v2580, %v2612
        %v2654 = vadd.f32 %v2581, %v2616
        %v2655 = vadd.f32 %v2582, %v2620
        %v2656 = vadd.f32 %v2583, %v2624
        %v2657 = vadd.f32 %v2584, %v2612
        %v2658 = vadd.f32 %v2585, %v2616
        %v2659 = vadd.f32 %v2586, %v2620
        %v2660 = vadd.f32 %v2587, %v2624
        %v2661 = vadd.f32 %v2588, %v2612
        %v2662 = vadd.f32 %v2589, %v2616
        %v2663 = vadd.f32 %v2590, %v2620
        %v2664 = vadd.f32 %v2591, %v2624
        %v2665 = vadd.f32 %v2592, %v2612
        %v2666 = vadd.f32 %v2593, %v2616
        %v2667 = vadd.f32 %v2594, %v2620
        %v2668 = vadd.f32 %v2595, %v2624
        %v2669 = vadd.f32 %v2596, %v2612
        %v2670 = vadd.f32 %v2597, %v2616
        %v2671 = vadd.f32 %v2598, %v2620
        %v2672 = vadd.f32 %v2599, %v2624
        %v2673 = vadd.f32 %v2600, %v2612
        %v2674 = vadd.f32 %v2601, %v2616
        %v2675 = vadd.f32 %v2602, %v2620
        %v2676 = vadd.f32 %v2603, %v2624
        %v2677 = vadd.f32 %v2604, %v2612
        %v2678 = vadd.f32 %v2605, %v2616
        %v2679 = vadd.f32 %v2606, %v2620
        %v2680 = vadd.f32 %v2607, %v2624
        %v2681 = vmax.f32 %v2629, 0.0
        %v2682 = vmax.f32 %v2630, 0.0
        %v2683 = vmax.f32 %v2631, 0.0
        %v2684 = vmax.f32 %v2632, 0.0
        %v2685 = vmax.f32 %v2633, 0.0
        %v2686 = vmax.f32 %v2634, 0.0
        %v2687 = vmax.f32 %v2635, 0.0
        %v2688 = vmax.f32 %v2636, 0.0
        %v2689 = vmax.f32 %v2637, 0.0
        %v2690 = vmax.f32 %v2638, 0.0
        %v2691 = vmax.f32 %v2639, 0.0
        %v2692 = vmax.f32 %v2640, 0.0
        %v2693 = vmax.f32 %v2641, 0.0
        %v2694 = vmax.f32 %v2642, 0.0
        %v2695 = vmax.f32 %v2643, 0.0
        %v2696 = vmax.f32 %v2644, 0.0
        %v2697 = vmax.f32 %v2645, 0.0
        %v2698 = vmax.f32 %v2646, 0.0
        %v2699 = vmax.f32 %v2647, 0.0
        %v2700 = vmax.f32 %v2648, 0.0
        %v2701 = vmax.f32 %v2649, 0.0
        %v2702 = vmax.f32 %v2650, 0.0
        %v2703 = vmax.f32 %v2651, 0.0
        %v2704 = vmax.f32 %v2652, 0.0
        %v2705 = vmax.f32 %v2653, 0.0
        %v2706 = vmax.f32 %v2654, 0.0
        %v2707 = vmax.f32 %v2655, 0.0
        %v2708 = vmax.f32 %v2656, 0.0
        %v2709 = vmax.f32 %v2657, 0.0
        %v2710 = vmax.f32 %v2658, 0.0
        %v2711 = vmax.f32 %v2659, 0.0
        %v2712 = vmax.f32 %v2660, 0.0
        %v2713 = vmax.f32 %v2661, 0.0
        %v2714 = vmax.f32 %v2662, 0.0
        %v2715 = vmax.f32 %v2663, 0.0
        %v2716 = vmax.f32 %v2664, 0.0
        %v2717 = vmax.f32 %v2665, 0.0
        %v2718 = vmax.f32 %v2666, 0.0
        %v2719 = vmax.f32 %v2667, 0.0
        %v2720 = vmax.f32 %v2668, 0.0
        %v2721 = vmax.f32 %v2669, 0.0
        %v2722 = vmax.f32 %v2670, 0.0
        %v2723 = vmax.f32 %v2671, 0.0
        %v2724 = vmax.f32 %v2672, 0.0
        %v2725 = vmax.f32 %v2673, 0.0
        %v2726 = vmax.f32 %v2674, 0.0
        %v2727 = vmax.f32 %v2675, 0.0
        %v2728 = vmax.f32 %v2676, 0.0
        %v2729 = vmax.f32 %v2677, 0.0
        %v2730 = vmax.f32 %v2678, 0.0
        %v2731 = vmax.f32 %v2679, 0.0
        %v2732 = vmax.f32 %v2680, 0.0
        %v2733 = vld [vmem:[%s4] sm:$0x3]
        %vm2734 = vcmask 801792
        %v2736 = vsel %vm2734, %v2733, 0
        %v2739 = vsel %vm2251, %v2729, 0
        %v2742 = vsel %vm2251, %v2730, 0
        %v2745 = vsel %vm2251, %v2731, 0
        %v2748 = vsel %vm2251, %v2732, 0
        %2750 = vmatprep.subr.mxu0 0.0
        %2751 = vmatpush1.msra.mxu0 0.0
        %2752 = vmatprep.subr.mxu0 0.0
        %2753 = vmatpush1.msra.mxu0 0.0
        %2754 = vmatprep.subr.mxu0 0.0
        %2755 = vmatpush1.msra.mxu0 0.0
        %2756 = vmatprep.subr.mxu0 %v2742
        %2757 = vmatpush1.msra.mxu0 %v2739
        %2758 = vmatprep.subr.mxu0 %v2726
        %2759 = vmatpush1.msra.mxu0 %v2725
        %2760 = vmatprep.subr.mxu0 %v2722
        %2761 = vmatpush1.msra.mxu0 %v2721
        %2762 = vmatprep.subr.mxu0 %v2718
        %2763 = vmatpush1.msra.mxu0 %v2717
        %2764 = vmatprep.subr.mxu0 %v2714
        %2765 = vmatpush1.msra.mxu0 %v2713
        %2766 = vmatprep.subr.mxu0 %v2710
        %2767 = vmatpush1.msra.mxu0 %v2709
        %2768 = vmatprep.subr.mxu0 %v2706
        %2769 = vmatpush1.msra.mxu0 %v2705
        %2770 = vmatprep.subr.mxu0 %v2702
        %2771 = vmatpush1.msra.mxu0 %v2701
        %2772 = vmatprep.subr.mxu0 %v2698
        %2773 = vmatpush1.msra.mxu0 %v2697
        %2774 = vmatprep.subr.mxu0 %v2694
        %2775 = vmatpush1.msra.mxu0 %v2693
        %2776 = vmatprep.subr.mxu0 %v2690
        %2777 = vmatpush1.msra.mxu0 %v2689
        %2778 = vmatprep.subr.mxu0 %v2686
        %2779 = vmatpush1.msra.mxu0 %v2685
        %2780 = vmatprep.subr.mxu0 %v2682
        %2781 = vmatpush1.msra.mxu0 %v2681
        %2782 = vmatprep.subr.mxu0 0.0
        %2783 = vmatpush2.msra.mxu0 0.0
        %2784 = vmatprep.subr.mxu0 0.0
        %2785 = vmatpush2.msra.mxu0 0.0
        %2786 = vmatprep.subr.mxu0 0.0
        %2787 = vmatpush2.msra.mxu0 0.0
        %2788 = vmatprep.subr.mxu0 0.0
        %2789 = vmatpush2.msra.mxu0 0.0
        %2790 = vmatprep.subr.mxu0 0.0
        %2791 = vmatpush2.msra.mxu0 0.0
        %2792 = vmatprep.subr.mxu0 0.0
        %2793 = vmatpush2.msra.mxu0 0.0
        %2794 = vmatprep.subr.mxu0 0.0
        %2795 = vmatpush2.msra.mxu0 0.0
        %2796 = vmatprep.subr.mxu0 0.0
        %2797 = vmatpush2.msra.mxu0 0.0
        %2798 = vmatprep.subr.mxu0 0.0
        %2799 = vmatpush2.msra.mxu0 0.0
        %2800 = vmatprep.subr.mxu0 0.0
        %2801 = vmatpush2.msra.mxu0 0.0
        %2802 = vmatprep.subr.mxu0 0.0
        %2803 = vmatpush2.msra.mxu0 0.0
        %2804 = vmatprep.subr.mxu0 0.0
        %2805 = vmatpush2.msra.mxu0 0.0
        %2806 = vmatprep.subr.mxu0 0.0
        %2807 = vmatpush2.msra.mxu0 0.0
        %2808 = vmatprep.subr.mxu0 0.0
        %2809 = vmatpush2.msra.mxu0 0.0
        %2810 = vmatprep.subr.mxu0 0.0
        %2811 = vmatpush2.msra.mxu0 0.0
        %2812 = vmatprep.subr.mxu0 0.0
        %2813 = vmatpush2.msra.mxu0 0.0
        %2814 = vmatprep.mubr.f32.mxu0 0.0
        %2815 = vmatmul.mubr.f32.gmra.mxu0 %v2736
        %v2816 = vpop.f32.mrf.mxu0
        %v2817 = vadd.f32 0.0, %v2816
        %v2818 = vpop.f32.mrf.mxu0
        %v2819 = vadd.f32 0.0, %v2818
        %2820 = vdwg.mxu0
        %2821 = vmatprep.subr.mxu0 0.0
        %2822 = vmatpush1.msra.mxu0 0.0
        %2823 = vmatprep.subr.mxu0 0.0
        %2824 = vmatpush1.msra.mxu0 0.0
        %2825 = vmatprep.subr.mxu0 0.0
        %2826 = vmatpush1.msra.mxu0 0.0
        %2827 = vmatprep.subr.mxu0 %v2748
        %2828 = vmatpush1.msra.mxu0 %v2745
        %2829 = vmatprep.subr.mxu0 %v2728
        %2830 = vmatpush1.msra.mxu0 %v2727
        %2831 = vmatprep.subr.mxu0 %v2724
        %2832 = vmatpush1.msra.mxu0 %v2723
        %2833 = vmatprep.subr.mxu0 %v2720
        %2834 = vmatpush1.msra.mxu0 %v2719
        %2835 = vmatprep.subr.mxu0 %v2716
        %2836 = vmatpush1.msra.mxu0 %v2715
        %2837 = vmatprep.subr.mxu0 %v2712
        %2838 = vmatpush1.msra.mxu0 %v2711
        %2839 = vmatprep.subr.mxu0 %v2708
        %2840 = vmatpush1.msra.mxu0 %v2707
        %2841 = vmatprep.subr.mxu0 %v2704
        %2842 = vmatpush1.msra.mxu0 %v2703
        %2843 = vmatprep.subr.mxu0 %v2700
        %2844 = vmatpush1.msra.mxu0 %v2699
        %2845 = vmatprep.subr.mxu0 %v2696
        %2846 = vmatpush1.msra.mxu0 %v2695
        %2847 = vmatprep.subr.mxu0 %v2692
        %2848 = vmatpush1.msra.mxu0 %v2691
        %2849 = vmatprep.subr.mxu0 %v2688
        %2850 = vmatpush1.msra.mxu0 %v2687
        %2851 = vmatprep.subr.mxu0 %v2684
        %2852 = vmatpush1.msra.mxu0 %v2683
        %2853 = vmatprep.subr.mxu0 0.0
        %2854 = vmatpush2.msra.mxu0 0.0
        %2855 = vmatprep.subr.mxu0 0.0
        %2856 = vmatpush2.msra.mxu0 0.0
        %2857 = vmatprep.subr.mxu0 0.0
        %2858 = vmatpush2.msra.mxu0 0.0
        %2859 = vmatprep.subr.mxu0 0.0
        %2860 = vmatpush2.msra.mxu0 0.0
        %2861 = vmatprep.subr.mxu0 0.0
        %2862 = vmatpush2.msra.mxu0 0.0
        %2863 = vmatprep.subr.mxu0 0.0
        %2864 = vmatpush2.msra.mxu0 0.0
        %2865 = vmatprep.subr.mxu0 0.0
        %2866 = vmatpush2.msra.mxu0 0.0
        %2867 = vmatprep.subr.mxu0 0.0
        %2868 = vmatpush2.msra.mxu0 0.0
        %2869 = vmatprep.subr.mxu0 0.0
        %2870 = vmatpush2.msra.mxu0 0.0
        %2871 = vmatprep.subr.mxu0 0.0
        %2872 = vmatpush2.msra.mxu0 0.0
        %2873 = vmatprep.subr.mxu0 0.0
        %2874 = vmatpush2.msra.mxu0 0.0
        %2875 = vmatprep.subr.mxu0 0.0
        %2876 = vmatpush2.msra.mxu0 0.0
        %2877 = vmatprep.subr.mxu0 0.0
        %2878 = vmatpush2.msra.mxu0 0.0
        %2879 = vmatprep.subr.mxu0 0.0
        %2880 = vmatpush2.msra.mxu0 0.0
        %2881 = vmatprep.subr.mxu0 0.0
        %2882 = vmatpush2.msra.mxu0 0.0
        %2883 = vmatprep.subr.mxu0 0.0
        %2884 = vmatpush2.msra.mxu0 0.0
        %2885 = vmatprep.mubr.f32.mxu0 0.0
        %2886 = vmatmul.mubr.f32.gmra.mxu0 %v2736
        %v2887 = vpop.f32.mrf.mxu0
        %v2888 = vadd.f32 0.0, %v2887
        %v2889 = vpop.f32.mrf.mxu0
        %v2890 = vadd.f32 0.0, %v2889
        %2891 = vdwg.mxu0
        %v2892 = vld [vmem:[#allocation3] sm:$0xff]
        %v2893 = vld [vmem:[#allocation3 + $0x8] sm:$0xff]
        %v2894 = vld [vmem:[%s1291] sm:$0xff]
        %v2895 = vld [vmem:[%s1291 + $0x8] sm:$0xff]
        %v2896 = vld [vmem:[%s1291 + $0x10] sm:$0xff]
        %v2897 = vld [vmem:[%s1291 + $0x18] sm:$0xff]
        %v2898 = vld [vmem:[%s1291 + $0x20] sm:$0xff]
        %v2899 = vld [vmem:[%s1291 + $0x28] sm:$0xff]
        %v2900 = vld [vmem:[%s1291 + $0x30] sm:$0xff]
        %v2901 = vld [vmem:[%s1291 + $0x38] sm:$0xff]
        %v2902 = vld [vmem:[%s1291 + $0x40] sm:$0xff]
        %v2903 = vld [vmem:[%s1291 + $0x48] sm:$0xff]
        %v2904 = vld [vmem:[%s1291 + $0x50] sm:$0xff]
        %v2905 = vld [vmem:[%s1291 + $0x58] sm:$0xff]
        %v2906 = vld [vmem:[%s1291 + $0x60] sm:$0xff]
        %v2907 = vld [vmem:[%s1291 + $0x68] sm:$0xff]
        %v2908 = vld [vmem:[%s1291 + $0x70] sm:$0xff]
        %v2909 = vld [vmem:[%s1291 + $0x78] sm:$0xff]
        %v2910 = vld [vmem:[%s1291 + $0x80] sm:$0xff]
        %v2911 = vld [vmem:[%s1291 + $0x88] sm:$0xff]
        %v2912 = vld [vmem:[%s1291 + $0x90] sm:$0xff]
        %v2913 = vld [vmem:[%s1291 + $0x98] sm:$0xff]
        %v2914 = vld [vmem:[%s1291 + $0xa0] sm:$0xff]
        %v2915 = vld [vmem:[%s1291 + $0xa8] sm:$0xff]
        %v2916 = vld [vmem:[%s1291 + $0xb0] sm:$0xff]
        %v2917 = vld [vmem:[%s1291 + $0xb8] sm:$0xff]
        %v2918 = vld [vmem:[%s1291 + $0xc0] sm:$0xff]
        %v2919 = vld [vmem:[%s1291 + $0xc8] sm:$0xff]
        %v2920 = vld [vmem:[%s1291 + $0xd0] sm:$0xff]
        %v2921 = vld [vmem:[%s1291 + $0xd8] sm:$0xff]
        %v2922 = vld [vmem:[%s1291 + $0xe0] sm:$0xff]
        %v2923 = vld [vmem:[%s1291 + $0xe8] sm:$0xff]
        %v2924 = vld [vmem:[%s1291 + $0xf0] sm:$0xff]
        %v2925 = vld [vmem:[%s1291 + $0xf8] sm:$0xff]
        %v2926 = vld [vmem:[%s1291 + $0x100] sm:$0xff]
        %v2927 = vld [vmem:[%s1291 + $0x108] sm:$0xff]
        %v2928 = vld [vmem:[%s1291 + $0x110] sm:$0xff]
        %v2929 = vld [vmem:[%s1291 + $0x118] sm:$0xff]
        %v2930 = vld [vmem:[%s1291 + $0x120] sm:$0xff]
        %v2931 = vld [vmem:[%s1291 + $0x128] sm:$0xff]
        %v2932 = vld [vmem:[%s1291 + $0x130] sm:$0xff]
        %v2933 = vld [vmem:[%s1291 + $0x138] sm:$0xff]
        %v2934 = vld [vmem:[%s1291 + $0x140] sm:$0xff]
        %v2935 = vld [vmem:[%s1291 + $0x148] sm:$0xff]
        %v2936 = vld [vmem:[%s1291 + $0x150] sm:$0xff]
        %v2937 = vld [vmem:[%s1291 + $0x158] sm:$0xff]
        %v2938 = vld [vmem:[%s1291 + $0x160] sm:$0xff]
        %v2939 = vld [vmem:[%s1291 + $0x168] sm:$0xff]
        %v2940 = vld [vmem:[%s1291 + $0x170] sm:$0xff]
        %v2941 = vld [vmem:[%s1291 + $0x178] sm:$0xff]
        %v2942 = vld [vmem:[%s1291 + $0x180] sm:$0xff]
        %v2943 = vld [vmem:[%s1291 + $0x188] sm:$0xff]
        %v2944 = vld [vmem:[%s1291 + $0x190] sm:$0xff]
        %v2945 = vld [vmem:[%s1291 + $0x198] sm:$0xff]
        %v2946 = vld [vmem:[%s1291 + $0x1a0] sm:$0xff]
        %v2947 = vld [vmem:[%s1291 + $0x1a8] sm:$0xff]
        %v2948 = vld [vmem:[%s1291 + $0x1b0] sm:$0xff]
        %v2949 = vld [vmem:[%s1291 + $0x1b8] sm:$0xff]
        %v2950 = vld [vmem:[%s1291 + $0x1c0] sm:$0xff]
        %v2951 = vld [vmem:[%s1291 + $0x1c8] sm:$0xff]
        %v2952 = vld [vmem:[%s1291 + $0x1d0] sm:$0xff]
        %v2953 = vld [vmem:[%s1291 + $0x1d8] sm:$0xff]
        %v2954 = vld [vmem:[%s1291 + $0x1e0] sm:$0xff]
        %v2955 = vld [vmem:[%s1291 + $0x1e8] sm:$0xff]
        %v2956 = vld [vmem:[%s1291 + $0x1f0] sm:$0xff]
        %v2957 = vld [vmem:[%s1291 + $0x1f8] sm:$0xff]
        %v2958 = vld [vmem:[%s1291 + $0x200] sm:$0xff]
        %v2959 = vld [vmem:[%s1291 + $0x208] sm:$0xff]
        %v2960 = vld [vmem:[%s1291 + $0x210] sm:$0xff]
        %v2961 = vld [vmem:[%s1291 + $0x218] sm:$0xff]
        %v2962 = vld [vmem:[%s1291 + $0x220] sm:$0xff]
        %v2963 = vld [vmem:[%s1291 + $0x228] sm:$0xff]
        %v2964 = vld [vmem:[%s1291 + $0x230] sm:$0xff]
        %v2965 = vld [vmem:[%s1291 + $0x238] sm:$0xff]
        %v2966 = vld [vmem:[%s1291 + $0x240] sm:$0xff]
        %v2967 = vld [vmem:[%s1291 + $0x248] sm:$0xff]
        %v2968 = vld [vmem:[%s1291 + $0x250] sm:$0xff]
        %v2969 = vld [vmem:[%s1291 + $0x258] sm:$0xff]
        %v2970 = vld [vmem:[%s1291 + $0x260] sm:$0xff]
        %v2971 = vld [vmem:[%s1291 + $0x268] sm:$0xff]
        %v2972 = vld [vmem:[%s1291 + $0x270] sm:$0xff]
        %v2973 = vld [vmem:[%s1291 + $0x278] sm:$0xff]
        %v2974 = vld [vmem:[%s1291 + $0x280] sm:$0xff]
        %v2975 = vld [vmem:[%s1291 + $0x288] sm:$0xff]
        %v2976 = vld [vmem:[%s1291 + $0x290] sm:$0xff]
        %v2977 = vld [vmem:[%s1291 + $0x298] sm:$0xff]
        %v2978 = vld [vmem:[%s1291 + $0x2a0] sm:$0xff]
        %v2979 = vld [vmem:[%s1291 + $0x2a8] sm:$0xff]
        %v2980 = vld [vmem:[%s1291 + $0x2b0] sm:$0xff]
        %v2981 = vld [vmem:[%s1291 + $0x2b8] sm:$0xff]
        %v2982 = vld [vmem:[%s1291 + $0x2c0] sm:$0xff]
        %v2983 = vld [vmem:[%s1291 + $0x2c8] sm:$0xff]
        %v2984 = vld [vmem:[%s1291 + $0x2d0] sm:$0xff]
        %v2985 = vld [vmem:[%s1291 + $0x2d8] sm:$0xff]
        %v2986 = vld [vmem:[%s1291 + $0x2e0] sm:$0xff]
        %v2987 = vld [vmem:[%s1291 + $0x2e8] sm:$0xff]
        %v2988 = vld [vmem:[%s1291 + $0x2f0] sm:$0xff]
        %v2989 = vld [vmem:[%s1291 + $0x2f8] sm:$0xff]
        %v2990 = vld [vmem:[%s1291 + $0x300] sm:$0xff]
        %v2991 = vld [vmem:[%s1291 + $0x308] sm:$0xff]
        %v2992 = vld [vmem:[%s1291 + $0x310] sm:$0xff]
        %v2993 = vld [vmem:[%s1291 + $0x318] sm:$0xff]
        %v2994 = vld [vmem:[%s1291 + $0x320] sm:$0xff]
        %v2995 = vld [vmem:[%s1291 + $0x328] sm:$0xff]
        %v2996 = vld [vmem:[%s1291 + $0x330] sm:$0xff]
        %v2997 = vld [vmem:[%s1291 + $0x338] sm:$0xff]
        %v2998 = vld [vmem:[%s1291 + $0x340] sm:$0xff]
        %v2999 = vld [vmem:[%s1291 + $0x348] sm:$0xff]
        %v3000 = vld [vmem:[%s1291 + $0x350] sm:$0xff]
        %v3001 = vld [vmem:[%s1291 + $0x358] sm:$0xff]
        %v3002 = vld [vmem:[%s1291 + $0x360] sm:$0xff]
        %v3003 = vld [vmem:[%s1291 + $0x368] sm:$0xff]
        %v3004 = vld [vmem:[%s1291 + $0x370] sm:$0xff]
        %v3005 = vld [vmem:[%s1291 + $0x378] sm:$0xff]
        %v3006 = vld [vmem:[%s1291 + $0x380] sm:$0xff]
        %v3007 = vld [vmem:[%s1291 + $0x388] sm:$0xff]
        %v3008 = vld [vmem:[%s1291 + $0x390] sm:$0xff]
        %v3009 = vld [vmem:[%s1291 + $0x398] sm:$0xff]
        %v3010 = vld [vmem:[%s1291 + $0x3a0] sm:$0xff]
        %v3011 = vld [vmem:[%s1291 + $0x3a8] sm:$0xff]
        %v3012 = vld [vmem:[%s1291 + $0x3b0] sm:$0xff]
        %v3013 = vld [vmem:[%s1291 + $0x3b8] sm:$0xff]
        %v3014 = vld [vmem:[%s1291 + $0x3c0] sm:$0xff]
        %v3015 = vld [vmem:[%s1291 + $0x3c8] sm:$0xff]
        %v3016 = vld [vmem:[%s1291 + $0x3d0] sm:$0xff]
        %v3017 = vld [vmem:[%s1291 + $0x3d8] sm:$0xff]
        %v3018 = vld [vmem:[%s1291 + $0x3e0] sm:$0xff]
        %v3019 = vld [vmem:[%s1291 + $0x3e8] sm:$0xff]
        %v3020 = vld [vmem:[%s1291 + $0x3f0] sm:$0xff]
        %v3021 = vld [vmem:[%s1291 + $0x3f8] sm:$0xff]
        %v3022 = vld [vmem:[%s1291 + $0x400] sm:$0xff]
        %v3023 = vld [vmem:[%s1291 + $0x408] sm:$0xff]
        %v3024 = vld [vmem:[%s1291 + $0x410] sm:$0xff]
        %v3025 = vld [vmem:[%s1291 + $0x418] sm:$0xff]
        %v3026 = vld [vmem:[%s1291 + $0x420] sm:$0xff]
        %v3027 = vld [vmem:[%s1291 + $0x428] sm:$0xff]
        %v3028 = vld [vmem:[%s1291 + $0x430] sm:$0xff]
        %v3029 = vld [vmem:[%s1291 + $0x438] sm:$0xff]
        %v3030 = vld [vmem:[%s1291 + $0x440] sm:$0xff]
        %v3031 = vld [vmem:[%s1291 + $0x448] sm:$0xff]
        %v3032 = vld [vmem:[%s1291 + $0x450] sm:$0xff]
        %v3033 = vld [vmem:[%s1291 + $0x458] sm:$0xff]
        %v3034 = vld [vmem:[%s1291 + $0x460] sm:$0xff]
        %v3035 = vld [vmem:[%s1291 + $0x468] sm:$0xff]
        %v3036 = vld [vmem:[%s1291 + $0x470] sm:$0xff]
        %v3037 = vld [vmem:[%s1291 + $0x478] sm:$0xff]
        %v3038 = vld [vmem:[%s1291 + $0x480] sm:$0xff]
        %v3039 = vld [vmem:[%s1291 + $0x488] sm:$0xff]
        %v3040 = vld [vmem:[%s1291 + $0x490] sm:$0xff]
        %v3041 = vld [vmem:[%s1291 + $0x498] sm:$0xff]
        %v3042 = vld [vmem:[%s1291 + $0x4a0] sm:$0xff]
        %v3043 = vld [vmem:[%s1291 + $0x4a8] sm:$0xff]
        %v3044 = vld [vmem:[%s1291 + $0x4b0] sm:$0xff]
        %v3045 = vld [vmem:[%s1291 + $0x4b8] sm:$0xff]
        %v3046 = vld [vmem:[%s1291 + $0x4c0] sm:$0xff]
        %v3047 = vld [vmem:[%s1291 + $0x4c8] sm:$0xff]
        %v3048 = vld [vmem:[%s1291 + $0x4d0] sm:$0xff]
        %v3049 = vld [vmem:[%s1291 + $0x4d8] sm:$0xff]
        %v3050 = vld [vmem:[%s1291 + $0x4e0] sm:$0xff]
        %v3051 = vld [vmem:[%s1291 + $0x4e8] sm:$0xff]
        %v3052 = vld [vmem:[%s1291 + $0x4f0] sm:$0xff]
        %v3053 = vld [vmem:[%s1291 + $0x4f8] sm:$0xff]
        %v3054 = vld [vmem:[%s1291 + $0x500] sm:$0xff]
        %v3055 = vld [vmem:[%s1291 + $0x508] sm:$0xff]
        %v3056 = vld [vmem:[%s1291 + $0x510] sm:$0xff]
        %v3057 = vld [vmem:[%s1291 + $0x518] sm:$0xff]
        %v3058 = vld [vmem:[%s1291 + $0x520] sm:$0xff]
        %v3059 = vld [vmem:[%s1291 + $0x528] sm:$0xff]
        %v3060 = vld [vmem:[%s1291 + $0x530] sm:$0xff]
        %v3061 = vld [vmem:[%s1291 + $0x538] sm:$0xff]
        %v3062 = vld [vmem:[%s1291 + $0x540] sm:$0xff]
        %v3063 = vld [vmem:[%s1291 + $0x548] sm:$0xff]
        %v3064 = vld [vmem:[%s1291 + $0x550] sm:$0xff]
        %v3065 = vld [vmem:[%s1291 + $0x558] sm:$0xff]
        %v3066 = vld [vmem:[%s1291 + $0x560] sm:$0xff]
        %v3067 = vld [vmem:[%s1291 + $0x568] sm:$0xff]
        %v3068 = vld [vmem:[%s1291 + $0x570] sm:$0xff]
        %v3069 = vld [vmem:[%s1291 + $0x578] sm:$0xff]
        %v3070 = vld [vmem:[%s1291 + $0x580] sm:$0xff]
        %v3071 = vld [vmem:[%s1291 + $0x588] sm:$0xff]
        %v3072 = vld [vmem:[%s1291 + $0x590] sm:$0xff]
        %v3073 = vld [vmem:[%s1291 + $0x598] sm:$0xff]
        %v3074 = vld [vmem:[%s1291 + $0x5a0] sm:$0xff]
        %v3075 = vld [vmem:[%s1291 + $0x5a8] sm:$0xff]
        %v3076 = vld [vmem:[%s1291 + $0x5b0] sm:$0xff]
        %v3077 = vld [vmem:[%s1291 + $0x5b8] sm:$0xff]
        %v3078 = vld [vmem:[%s1291 + $0x5c0] sm:$0xff]
        %v3079 = vld [vmem:[%s1291 + $0x5c8] sm:$0xff]
        %v3080 = vld [vmem:[%s1291 + $0x5d0] sm:$0xff]
        %v3081 = vld [vmem:[%s1291 + $0x5d8] sm:$0xff]
        %v3082 = vld [vmem:[%s1291 + $0x5e0] sm:$0xff]
        %v3083 = vld [vmem:[%s1291 + $0x5e8] sm:$0xff]
        %v3084 = vld [vmem:[%s1291 + $0x5f0] sm:$0xff]
        %v3085 = vld [vmem:[%s1291 + $0x5f8] sm:$0xff]
        %v3086 = vld [vmem:[%s1291 + $0x600] sm:$0xff]
        %v3087 = vld [vmem:[%s1291 + $0x608] sm:$0xff]
        %v3088 = vld [vmem:[%s1291 + $0x610] sm:$0xff]
        %v3089 = vld [vmem:[%s1291 + $0x618] sm:$0xff]
        %v3090 = vld [vmem:[%s1291 + $0x620] sm:$0xff]
        %v3091 = vld [vmem:[%s1291 + $0x628] sm:$0xff]
        %v3092 = vld [vmem:[%s1291 + $0x630] sm:$0xff]
        %v3093 = vld [vmem:[%s1291 + $0x638] sm:$0xff]
        %v3094 = vld [vmem:[%s1291 + $0x640] sm:$0xff]
        %v3095 = vld [vmem:[%s1291 + $0x648] sm:$0xff]
        %v3096 = vld [vmem:[%s1291 + $0x650] sm:$0xff]
        %v3097 = vld [vmem:[%s1291 + $0x658] sm:$0xff]
        %v3098 = vld [vmem:[%s1291 + $0x660] sm:$0xff]
        %v3099 = vld [vmem:[%s1291 + $0x668] sm:$0xff]
        %v3100 = vld [vmem:[%s1291 + $0x670] sm:$0xff]
        %v3101 = vld [vmem:[%s1291 + $0x678] sm:$0xff]
        %v3102 = vld [vmem:[%s1291 + $0x680] sm:$0xff]
        %v3103 = vld [vmem:[%s1291 + $0x688] sm:$0xff]
        %v3104 = vld [vmem:[%s1291 + $0x690] sm:$0xff]
        %v3105 = vld [vmem:[%s1291 + $0x698] sm:$0xff]
        %v3106 = vld [vmem:[%s1291 + $0x6a0] sm:$0xff]
        %v3107 = vld [vmem:[%s1291 + $0x6a8] sm:$0xff]
        %v3108 = vld [vmem:[%s1291 + $0x6b0] sm:$0xff]
        %v3109 = vld [vmem:[%s1291 + $0x6b8] sm:$0xff]
        %v3110 = vld [vmem:[%s1291 + $0x6c0] sm:$0xff]
        %v3111 = vld [vmem:[%s1291 + $0x6c8] sm:$0xff]
        %v3112 = vld [vmem:[%s1291 + $0x6d0] sm:$0xff]
        %v3113 = vld [vmem:[%s1291 + $0x6d8] sm:$0xff]
        %v3114 = vld [vmem:[%s1291 + $0x6e0] sm:$0xff]
        %v3115 = vld [vmem:[%s1291 + $0x6e8] sm:$0xff]
        %v3116 = vld [vmem:[%s1291 + $0x6f0] sm:$0xff]
        %v3117 = vld [vmem:[%s1291 + $0x6f8] sm:$0xff]
        %v3118 = vld [vmem:[%s1291 + $0x700] sm:$0xff]
        %v3119 = vld [vmem:[%s1291 + $0x708] sm:$0xff]
        %v3120 = vld [vmem:[%s1291 + $0x710] sm:$0xff]
        %v3121 = vld [vmem:[%s1291 + $0x718] sm:$0xff]
        %v3122 = vld [vmem:[%s1291 + $0x720] sm:$0xff]
        %v3123 = vld [vmem:[%s1291 + $0x728] sm:$0xff]
        %v3124 = vld [vmem:[%s1291 + $0x730] sm:$0xff]
        %v3125 = vld [vmem:[%s1291 + $0x738] sm:$0xff]
        %v3126 = vld [vmem:[%s1291 + $0x740] sm:$0xff]
        %v3127 = vld [vmem:[%s1291 + $0x748] sm:$0xff]
        %v3128 = vld [vmem:[%s1291 + $0x750] sm:$0xff]
        %v3129 = vld [vmem:[%s1291 + $0x758] sm:$0xff]
        %v3130 = vld [vmem:[%s1291 + $0x760] sm:$0xff]
        %v3131 = vld [vmem:[%s1291 + $0x768] sm:$0xff]
        %v3132 = vld [vmem:[%s1291 + $0x770] sm:$0xff]
        %v3133 = vld [vmem:[%s1291 + $0x778] sm:$0xff]
        %v3134 = vld [vmem:[%s1291 + $0x780] sm:$0xff]
        %v3135 = vld [vmem:[%s1291 + $0x788] sm:$0xff]
        %v3136 = vld [vmem:[%s1291 + $0x790] sm:$0xff]
        %v3137 = vld [vmem:[%s1291 + $0x798] sm:$0xff]
        %v3138 = vld [vmem:[%s1291 + $0x7a0] sm:$0xff]
        %v3139 = vld [vmem:[%s1291 + $0x7a8] sm:$0xff]
        %v3140 = vld [vmem:[%s1291 + $0x7b0] sm:$0xff]
        %v3141 = vld [vmem:[%s1291 + $0x7b8] sm:$0xff]
        %v3142 = vld [vmem:[%s1291 + $0x7c0] sm:$0xff]
        %v3143 = vld [vmem:[%s1291 + $0x7c8] sm:$0xff]
        %v3144 = vld [vmem:[%s1291 + $0x7d0] sm:$0xff]
        %v3145 = vld [vmem:[%s1291 + $0x7d8] sm:$0xff]
        %v3146 = vld [vmem:[%s1291 + $0x7e0] sm:$0xff]
        %v3147 = vld [vmem:[%s1291 + $0x7e8] sm:$0xff]
        %v3148 = vld [vmem:[%s1291 + $0x7f0] sm:$0xff]
        %v3149 = vld [vmem:[%s1291 + $0x7f8] sm:$0xff]
        %v3150 = vld [vmem:[%s1291 + $0x800] sm:$0xff]
        %v3151 = vld [vmem:[%s1291 + $0x808] sm:$0xff]
        %v3152 = vld [vmem:[%s1291 + $0x810] sm:$0xff]
        %v3153 = vld [vmem:[%s1291 + $0x818] sm:$0xff]
        %v3154 = vld [vmem:[%s1291 + $0x820] sm:$0xff]
        %v3155 = vld [vmem:[%s1291 + $0x828] sm:$0xff]
        %v3156 = vld [vmem:[%s1291 + $0x830] sm:$0xff]
        %v3157 = vld [vmem:[%s1291 + $0x838] sm:$0xff]
        %v3158 = vld [vmem:[%s1291 + $0x840] sm:$0xff]
        %v3159 = vld [vmem:[%s1291 + $0x848] sm:$0xff]
        %v3160 = vld [vmem:[%s1291 + $0x850] sm:$0xff]
        %v3161 = vld [vmem:[%s1291 + $0x858] sm:$0xff]
        %v3162 = vld [vmem:[%s1291 + $0x860] sm:$0xff]
        %v3163 = vld [vmem:[%s1291 + $0x868] sm:$0xff]
        %v3164 = vld [vmem:[%s1291 + $0x870] sm:$0xff]
        %v3165 = vld [vmem:[%s1291 + $0x878] sm:$0xff]
        %v3166 = vld [vmem:[%s1291 + $0x880] sm:$0xff]
        %v3167 = vld [vmem:[%s1291 + $0x888] sm:$0xff]
        %v3168 = vld [vmem:[%s1291 + $0x890] sm:$0xff]
        %v3169 = vld [vmem:[%s1291 + $0x898] sm:$0xff]
        %v3170 = vld [vmem:[%s1291 + $0x8a0] sm:$0xff]
        %v3171 = vld [vmem:[%s1291 + $0x8a8] sm:$0xff]
        %v3172 = vld [vmem:[%s1291 + $0x8b0] sm:$0xff]
        %v3173 = vld [vmem:[%s1291 + $0x8b8] sm:$0xff]
        %v3174 = vld [vmem:[%s1291 + $0x8c0] sm:$0xff]
        %v3175 = vld [vmem:[%s1291 + $0x8c8] sm:$0xff]
        %v3176 = vld [vmem:[%s1291 + $0x8d0] sm:$0xff]
        %v3177 = vld [vmem:[%s1291 + $0x8d8] sm:$0xff]
        %v3178 = vld [vmem:[%s1291 + $0x8e0] sm:$0xff]
        %v3179 = vld [vmem:[%s1291 + $0x8e8] sm:$0xff]
        %v3180 = vld [vmem:[%s1291 + $0x8f0] sm:$0xff]
        %v3181 = vld [vmem:[%s1291 + $0x8f8] sm:$0xff]
        %v3182 = vld [vmem:[%s1291 + $0x900] sm:$0xff]
        %v3183 = vld [vmem:[%s1291 + $0x908] sm:$0xff]
        %v3184 = vld [vmem:[%s1291 + $0x910] sm:$0xff]
        %v3185 = vld [vmem:[%s1291 + $0x918] sm:$0xff]
        %v3186 = vld [vmem:[%s1291 + $0x920] sm:$0xff]
        %v3187 = vld [vmem:[%s1291 + $0x928] sm:$0xff]
        %v3188 = vld [vmem:[%s1291 + $0x930] sm:$0xff]
        %v3189 = vld [vmem:[%s1291 + $0x938] sm:$0xff]
        %v3190 = vld [vmem:[%s1291 + $0x940] sm:$0xff]
        %v3191 = vld [vmem:[%s1291 + $0x948] sm:$0xff]
        %v3192 = vld [vmem:[%s1291 + $0x950] sm:$0xff]
        %v3193 = vld [vmem:[%s1291 + $0x958] sm:$0xff]
        %v3194 = vld [vmem:[%s1291 + $0x960] sm:$0xff]
        %v3195 = vld [vmem:[%s1291 + $0x968] sm:$0xff]
        %v3196 = vld [vmem:[%s1291 + $0x970] sm:$0xff]
        %v3197 = vld [vmem:[%s1291 + $0x978] sm:$0xff]
        %v3198 = vld [vmem:[%s1291 + $0x980] sm:$0xff]
        %v3199 = vld [vmem:[%s1291 + $0x988] sm:$0xff]
        %v3200 = vld [vmem:[%s1291 + $0x990] sm:$0xff]
        %v3201 = vld [vmem:[%s1291 + $0x998] sm:$0xff]
        %v3202 = vld [vmem:[%s1291 + $0x9a0] sm:$0xff]
        %v3203 = vld [vmem:[%s1291 + $0x9a8] sm:$0xff]
        %v3204 = vld [vmem:[%s1291 + $0x9b0] sm:$0xff]
        %v3205 = vld [vmem:[%s1291 + $0x9b8] sm:$0xff]
        %v3206 = vld [vmem:[%s1291 + $0x9c0] sm:$0xff]
        %v3207 = vld [vmem:[%s1291 + $0x9c8] sm:$0xff]
        %v3208 = vld [vmem:[%s1291 + $0x9d0] sm:$0xff]
        %v3209 = vld [vmem:[%s1291 + $0x9d8] sm:$0xff]
        %v3210 = vld [vmem:[%s1291 + $0x9e0] sm:$0xff]
        %v3211 = vld [vmem:[%s1291 + $0x9e8] sm:$0xff]
        %v3212 = vld [vmem:[%s1291 + $0x9f0] sm:$0xff]
        %v3213 = vld [vmem:[%s1291 + $0x9f8] sm:$0xff]
        %v3214 = vld [vmem:[%s1291 + $0xa00] sm:$0xff]
        %v3215 = vld [vmem:[%s1291 + $0xa08] sm:$0xff]
        %v3216 = vld [vmem:[%s1291 + $0xa10] sm:$0xff]
        %v3217 = vld [vmem:[%s1291 + $0xa18] sm:$0xff]
        %v3218 = vld [vmem:[%s1291 + $0xa20] sm:$0xff]
        %v3219 = vld [vmem:[%s1291 + $0xa28] sm:$0xff]
        %v3220 = vld [vmem:[%s1291 + $0xa30] sm:$0xff]
        %v3221 = vld [vmem:[%s1291 + $0xa38] sm:$0xff]
        %v3222 = vld [vmem:[%s1291 + $0xa40] sm:$0xff]
        %v3223 = vld [vmem:[%s1291 + $0xa48] sm:$0xff]
        %v3224 = vld [vmem:[%s1291 + $0xa50] sm:$0xff]
        %v3225 = vld [vmem:[%s1291 + $0xa58] sm:$0xff]
        %v3226 = vld [vmem:[%s1291 + $0xa60] sm:$0xff]
        %v3227 = vld [vmem:[%s1291 + $0xa68] sm:$0xff]
        %v3228 = vld [vmem:[%s1291 + $0xa70] sm:$0xff]
        %v3229 = vld [vmem:[%s1291 + $0xa78] sm:$0xff]
        %v3230 = vld [vmem:[%s1291 + $0xa80] sm:$0xff]
        %v3231 = vld [vmem:[%s1291 + $0xa88] sm:$0xff]
        %v3232 = vld [vmem:[%s1291 + $0xa90] sm:$0xff]
        %v3233 = vld [vmem:[%s1291 + $0xa98] sm:$0xff]
        %v3234 = vld [vmem:[%s1291 + $0xaa0] sm:$0xff]
        %v3235 = vld [vmem:[%s1291 + $0xaa8] sm:$0xff]
        %v3236 = vld [vmem:[%s1291 + $0xab0] sm:$0xff]
        %v3237 = vld [vmem:[%s1291 + $0xab8] sm:$0xff]
        %v3238 = vld [vmem:[%s1291 + $0xac0] sm:$0xff]
        %v3239 = vld [vmem:[%s1291 + $0xac8] sm:$0xff]
        %v3240 = vld [vmem:[%s1291 + $0xad0] sm:$0xff]
        %v3241 = vld [vmem:[%s1291 + $0xad8] sm:$0xff]
        %v3242 = vld [vmem:[%s1291 + $0xae0] sm:$0xff]
        %v3243 = vld [vmem:[%s1291 + $0xae8] sm:$0xff]
        %v3244 = vld [vmem:[%s1291 + $0xaf0] sm:$0xff]
        %v3245 = vld [vmem:[%s1291 + $0xaf8] sm:$0xff]
        %v3246 = vld [vmem:[%s1291 + $0xb00] sm:$0xff]
        %v3247 = vld [vmem:[%s1291 + $0xb08] sm:$0xff]
        %v3248 = vld [vmem:[%s1291 + $0xb10] sm:$0xff]
        %v3249 = vld [vmem:[%s1291 + $0xb18] sm:$0xff]
        %v3250 = vld [vmem:[%s1291 + $0xb20] sm:$0xff]
        %v3251 = vld [vmem:[%s1291 + $0xb28] sm:$0xff]
        %v3252 = vld [vmem:[%s1291 + $0xb30] sm:$0xff]
        %v3253 = vld [vmem:[%s1291 + $0xb38] sm:$0xff]
        %v3254 = vld [vmem:[%s1291 + $0xb40] sm:$0xff]
        %v3255 = vld [vmem:[%s1291 + $0xb48] sm:$0xff]
        %v3256 = vld [vmem:[%s1291 + $0xb50] sm:$0xff]
        %v3257 = vld [vmem:[%s1291 + $0xb58] sm:$0xff]
        %v3258 = vld [vmem:[%s1291 + $0xb60] sm:$0xff]
        %v3259 = vld [vmem:[%s1291 + $0xb68] sm:$0xff]
        %v3260 = vld [vmem:[%s1291 + $0xb70] sm:$0xff]
        %v3261 = vld [vmem:[%s1291 + $0xb78] sm:$0xff]
        %v3262 = vld [vmem:[%s1291 + $0xb80] sm:$0xff]
        %v3263 = vld [vmem:[%s1291 + $0xb88] sm:$0xff]
        %v3264 = vld [vmem:[%s1291 + $0xb90] sm:$0xff]
        %v3265 = vld [vmem:[%s1291 + $0xb98] sm:$0xff]
        %v3266 = vld [vmem:[%s1291 + $0xba0] sm:$0xff]
        %v3267 = vld [vmem:[%s1291 + $0xba8] sm:$0xff]
        %v3268 = vld [vmem:[%s1291 + $0xbb0] sm:$0xff]
        %v3269 = vld [vmem:[%s1291 + $0xbb8] sm:$0xff]
        %v3270 = vld [vmem:[%s1291 + $0xbc0] sm:$0xff]
        %v3271 = vld [vmem:[%s1291 + $0xbc8] sm:$0xff]
        %v3272 = vld [vmem:[%s1291 + $0xbd0] sm:$0xff]
        %v3273 = vld [vmem:[%s1291 + $0xbd8] sm:$0xff]
        %v3274 = vld [vmem:[%s1291 + $0xbe0] sm:$0xff]
        %v3275 = vld [vmem:[%s1291 + $0xbe8] sm:$0xff]
        %v3276 = vld [vmem:[%s1291 + $0xbf0] sm:$0xff]
        %v3277 = vld [vmem:[%s1291 + $0xbf8] sm:$0xff]
        %v3278 = vld [vmem:[%s1291 + $0xc00] sm:$0xff]
        %v3279 = vld [vmem:[%s1291 + $0xc08] sm:$0xff]
        %v3280 = vld [vmem:[%s1291 + $0xc10] sm:$0xff]
        %v3281 = vld [vmem:[%s1291 + $0xc18] sm:$0xff]
        %v3282 = vld [vmem:[%s1291 + $0xc20] sm:$0xff]
        %v3283 = vld [vmem:[%s1291 + $0xc28] sm:$0xff]
        %v3284 = vld [vmem:[%s1291 + $0xc30] sm:$0xff]
        %v3285 = vld [vmem:[%s1291 + $0xc38] sm:$0xff]
        %v3286 = vld [vmem:[%s1291 + $0xc40] sm:$0xff]
        %v3287 = vld [vmem:[%s1291 + $0xc48] sm:$0xff]
        %v3288 = vld [vmem:[%s1291 + $0xc50] sm:$0xff]
        %v3289 = vld [vmem:[%s1291 + $0xc58] sm:$0xff]
        %v3290 = vld [vmem:[%s1291 + $0xc60] sm:$0xff]
        %v3291 = vld [vmem:[%s1291 + $0xc68] sm:$0xff]
        %v3292 = vld [vmem:[%s1291 + $0xc70] sm:$0xff]
        %v3293 = vld [vmem:[%s1291 + $0xc78] sm:$0xff]
        %v3294 = vld [vmem:[%s1291 + $0xc80] sm:$0xff]
        %v3295 = vld [vmem:[%s1291 + $0xc88] sm:$0xff]
        %v3296 = vld [vmem:[%s1291 + $0xc90] sm:$0xff]
        %v3297 = vld [vmem:[%s1291 + $0xc98] sm:$0xff]
        %v3298 = vld [vmem:[%s1291 + $0xca0] sm:$0xff]
        %v3299 = vld [vmem:[%s1291 + $0xca8] sm:$0xff]
        %v3300 = vld [vmem:[%s1291 + $0xcb0] sm:$0xff]
        %v3301 = vld [vmem:[%s1291 + $0xcb8] sm:$0xff]
        %v3302 = vld [vmem:[%s1291 + $0xcc0] sm:$0xff]
        %v3303 = vld [vmem:[%s1291 + $0xcc8] sm:$0xff]
        %v3304 = vld [vmem:[%s1291 + $0xcd0] sm:$0xff]
        %v3305 = vld [vmem:[%s1291 + $0xcd8] sm:$0xff]
        %v3306 = vld [vmem:[%s1291 + $0xce0] sm:$0xff]
        %v3307 = vld [vmem:[%s1291 + $0xce8] sm:$0xff]
        %v3308 = vld [vmem:[%s1291 + $0xcf0] sm:$0xff]
        %v3309 = vld [vmem:[%s1291 + $0xcf8] sm:$0xff]
        %v3310 = vld [vmem:[%s1291 + $0xd00] sm:$0xff]
        %v3311 = vld [vmem:[%s1291 + $0xd08] sm:$0xff]
        %v3312 = vld [vmem:[%s1291 + $0xd10] sm:$0xff]
        %v3313 = vld [vmem:[%s1291 + $0xd18] sm:$0xff]
        %v3314 = vld [vmem:[%s1291 + $0xd20] sm:$0xff]
        %v3315 = vld [vmem:[%s1291 + $0xd28] sm:$0xff]
        %v3316 = vld [vmem:[%s1291 + $0xd30] sm:$0xff]
        %v3317 = vld [vmem:[%s1291 + $0xd38] sm:$0xff]
        %v3318 = vld [vmem:[%s1291 + $0xd40] sm:$0xff]
        %v3319 = vld [vmem:[%s1291 + $0xd48] sm:$0xff]
        %v3320 = vld [vmem:[%s1291 + $0xd50] sm:$0xff]
        %v3321 = vld [vmem:[%s1291 + $0xd58] sm:$0xff]
        %v3322 = vld [vmem:[%s1291 + $0xd60] sm:$0xff]
        %v3323 = vld [vmem:[%s1291 + $0xd68] sm:$0xff]
        %v3324 = vld [vmem:[%s1291 + $0xd70] sm:$0xff]
        %v3325 = vld [vmem:[%s1291 + $0xd78] sm:$0xff]
        %v3326 = vld [vmem:[%s1291 + $0xd80] sm:$0xff]
        %v3327 = vld [vmem:[%s1291 + $0xd88] sm:$0xff]
        %v3328 = vld [vmem:[%s1291 + $0xd90] sm:$0xff]
        %v3329 = vld [vmem:[%s1291 + $0xd98] sm:$0xff]
        %v3330 = vld [vmem:[%s1291 + $0xda0] sm:$0xff]
        %v3331 = vld [vmem:[%s1291 + $0xda8] sm:$0xff]
        %v3332 = vld [vmem:[%s1291 + $0xdb0] sm:$0xff]
        %v3333 = vld [vmem:[%s1291 + $0xdb8] sm:$0xff]
        %v3334 = vld [vmem:[%s1291 + $0xdc0] sm:$0xff]
        %v3335 = vld [vmem:[%s1291 + $0xdc8] sm:$0xff]
        %v3336 = vld [vmem:[%s1291 + $0xdd0] sm:$0xff]
        %v3337 = vld [vmem:[%s1291 + $0xdd8] sm:$0xff]
        %v3338 = vld [vmem:[%s1291 + $0xde0] sm:$0xff]
        %v3339 = vld [vmem:[%s1291 + $0xde8] sm:$0xff]
        %v3340 = vld [vmem:[%s1291 + $0xdf0] sm:$0xff]
        %v3341 = vld [vmem:[%s1291 + $0xdf8] sm:$0xff]
        %v3342 = vld [vmem:[%s1291 + $0xe00] sm:$0xff]
        %v3343 = vld [vmem:[%s1291 + $0xe08] sm:$0xff]
        %v3344 = vld [vmem:[%s1291 + $0xe10] sm:$0xff]
        %v3345 = vld [vmem:[%s1291 + $0xe18] sm:$0xff]
        %v3346 = vld [vmem:[%s1291 + $0xe20] sm:$0xff]
        %v3347 = vld [vmem:[%s1291 + $0xe28] sm:$0xff]
        %v3348 = vld [vmem:[%s1291 + $0xe30] sm:$0xff]
        %v3349 = vld [vmem:[%s1291 + $0xe38] sm:$0xff]
        %v3350 = vld [vmem:[%s1291 + $0xe40] sm:$0xff]
        %v3351 = vld [vmem:[%s1291 + $0xe48] sm:$0xff]
        %v3352 = vld [vmem:[%s1291 + $0xe50] sm:$0xff]
        %v3353 = vld [vmem:[%s1291 + $0xe58] sm:$0xff]
        %v3354 = vld [vmem:[%s1291 + $0xe60] sm:$0xff]
        %v3355 = vld [vmem:[%s1291 + $0xe68] sm:$0xff]
        %v3356 = vld [vmem:[%s1291 + $0xe70] sm:$0xff]
        %v3357 = vld [vmem:[%s1291 + $0xe78] sm:$0xff]
        %v3358 = vld [vmem:[%s1291 + $0xe80] sm:$0xff]
        %v3359 = vld [vmem:[%s1291 + $0xe88] sm:$0xff]
        %v3360 = vld [vmem:[%s1291 + $0xe90] sm:$0xff]
        %v3361 = vld [vmem:[%s1291 + $0xe98] sm:$0xff]
        %v3362 = vld [vmem:[%s1291 + $0xea0] sm:$0xff]
        %v3363 = vld [vmem:[%s1291 + $0xea8] sm:$0xff]
        %v3364 = vld [vmem:[%s1291 + $0xeb0] sm:$0xff]
        %v3365 = vld [vmem:[%s1291 + $0xeb8] sm:$0xff]
        %v3366 = vld [vmem:[%s1291 + $0xec0] sm:$0xff]
        %v3367 = vld [vmem:[%s1291 + $0xec8] sm:$0xff]
        %v3368 = vld [vmem:[%s1291 + $0xed0] sm:$0xff]
        %v3369 = vld [vmem:[%s1291 + $0xed8] sm:$0xff]
        %v3370 = vld [vmem:[%s1291 + $0xee0] sm:$0xff]
        %v3371 = vld [vmem:[%s1291 + $0xee8] sm:$0xff]
        %v3372 = vld [vmem:[%s1291 + $0xef0] sm:$0xff]
        %v3373 = vld [vmem:[%s1291 + $0xef8] sm:$0xff]
        %v3374 = vld [vmem:[%s1291 + $0xf00] sm:$0xff]
        %v3375 = vld [vmem:[%s1291 + $0xf08] sm:$0xff]
        %v3376 = vld [vmem:[%s1291 + $0xf10] sm:$0xff]
        %v3377 = vld [vmem:[%s1291 + $0xf18] sm:$0xff]
        %v3378 = vld [vmem:[%s1291 + $0xf20] sm:$0xff]
        %v3379 = vld [vmem:[%s1291 + $0xf28] sm:$0xff]
        %v3380 = vld [vmem:[%s1291 + $0xf30] sm:$0xff]
        %v3381 = vld [vmem:[%s1291 + $0xf38] sm:$0xff]
        %v3382 = vld [vmem:[%s1291 + $0xf40] sm:$0xff]
        %v3383 = vld [vmem:[%s1291 + $0xf48] sm:$0xff]
        %v3384 = vld [vmem:[%s1291 + $0xf50] sm:$0xff]
        %v3385 = vld [vmem:[%s1291 + $0xf58] sm:$0xff]
        %v3386 = vld [vmem:[%s1291 + $0xf60] sm:$0xff]
        %v3387 = vld [vmem:[%s1291 + $0xf68] sm:$0xff]
        %v3388 = vld [vmem:[%s1291 + $0xf70] sm:$0xff]
        %v3389 = vld [vmem:[%s1291 + $0xf78] sm:$0xff]
        %v3390 = vld [vmem:[%s1291 + $0xf80] sm:$0xff]
        %v3391 = vld [vmem:[%s1291 + $0xf88] sm:$0xff]
        %v3392 = vld [vmem:[%s1291 + $0xf90] sm:$0xff]
        %v3393 = vld [vmem:[%s1291 + $0xf98] sm:$0xff]
        %3394 = vmatprep.subr.mxu0 %v2955
        %3395 = vmatpush1.xpose.msra.mxu0 %v2954
        %3396 = vmatprep.subr.mxu0 %v2951
        %3397 = vmatpush1.xpose.msra.mxu0 %v2950
        %3398 = vmatprep.subr.mxu0 %v2947
        %3399 = vmatpush1.xpose.msra.mxu0 %v2946
        %3400 = vmatprep.subr.mxu0 %v2943
        %3401 = vmatpush1.xpose.msra.mxu0 %v2942
        %3402 = vmatprep.subr.mxu0 %v2939
        %3403 = vmatpush1.xpose.msra.mxu0 %v2938
        %3404 = vmatprep.subr.mxu0 %v2935
        %3405 = vmatpush1.xpose.msra.mxu0 %v2934
        %3406 = vmatprep.subr.mxu0 %v2931
        %3407 = vmatpush1.xpose.msra.mxu0 %v2930
        %3408 = vmatprep.subr.mxu0 %v2927
        %3409 = vmatpush1.xpose.msra.mxu0 %v2926
        %3410 = vmatprep.subr.mxu0 %v2923
        %3411 = vmatpush1.xpose.msra.mxu0 %v2922
        %3412 = vmatprep.subr.mxu0 %v2919
        %3413 = vmatpush1.xpose.msra.mxu0 %v2918
        %3414 = vmatprep.subr.mxu0 %v2915
        %3415 = vmatpush1.xpose.msra.mxu0 %v2914
        %3416 = vmatprep.subr.mxu0 %v2911
        %3417 = vmatpush1.xpose.msra.mxu0 %v2910
        %3418 = vmatprep.subr.mxu0 %v2907
        %3419 = vmatpush1.xpose.msra.mxu0 %v2906
        %3420 = vmatprep.subr.mxu0 %v2903
        %3421 = vmatpush1.xpose.msra.mxu0 %v2902
        %3422 = vmatprep.subr.mxu0 %v2899
        %3423 = vmatpush1.xpose.msra.mxu0 %v2898
        %3424 = vmatprep.subr.mxu0 %v2895
        %3425 = vmatpush1.xpose.msra.mxu0 %v2894
        %3426 = vmatprep.subr.mxu0 %v3019
        %3427 = vmatpush2.xpose.msra.mxu0 %v3018
        %3428 = vmatprep.subr.mxu0 %v3015
        %3429 = vmatpush2.xpose.msra.mxu0 %v3014
        %3430 = vmatprep.subr.mxu0 %v3011
        %3431 = vmatpush2.xpose.msra.mxu0 %v3010
        %3432 = vmatprep.subr.mxu0 %v3007
        %3433 = vmatpush2.xpose.msra.mxu0 %v3006
        %3434 = vmatprep.subr.mxu0 %v3003
        %3435 = vmatpush2.xpose.msra.mxu0 %v3002
        %3436 = vmatprep.subr.mxu0 %v2999
        %3437 = vmatpush2.xpose.msra.mxu0 %v2998
        %3438 = vmatprep.subr.mxu0 %v2995
        %3439 = vmatpush2.xpose.msra.mxu0 %v2994
        %3440 = vmatprep.subr.mxu0 %v2991
        %3441 = vmatpush2.xpose.msra.mxu0 %v2990
        %3442 = vmatprep.subr.mxu0 %v2987
        %3443 = vmatpush2.xpose.msra.mxu0 %v2986
        %3444 = vmatprep.subr.mxu0 %v2983
        %3445 = vmatpush2.xpose.msra.mxu0 %v2982
        %3446 = vmatprep.subr.mxu0 %v2979
        %3447 = vmatpush2.xpose.msra.mxu0 %v2978
        %3448 = vmatprep.subr.mxu0 %v2975
        %3449 = vmatpush2.xpose.msra.mxu0 %v2974
        %3450 = vmatprep.subr.mxu0 %v2971
        %3451 = vmatpush2.xpose.msra.mxu0 %v2970
        %3452 = vmatprep.subr.mxu0 %v2967
        %3453 = vmatpush2.xpose.msra.mxu0 %v2966
        %3454 = vmatprep.subr.mxu0 %v2963
        %3455 = vmatpush2.xpose.msra.mxu0 %v2962
        %3456 = vmatprep.subr.mxu0 %v2959
        %3457 = vmatpush2.xpose.msra.mxu0 %v2958
        %3458 = vmatprep.mubr.f32.mxu0 %v2819
        %3459 = vmatmul.mubr.f32.gmra.mxu0 %v2817
        %v3460 = vpop.f32.mrf.mxu0
        %v3461 = vadd.f32 0.0, %v3460
        %v3462 = vpop.f32.mrf.mxu0
        %v3463 = vadd.f32 0.0, %v3462
        %3464 = vdwg.mxu0
        %3465 = vmatprep.subr.mxu0 %v2957
        %3466 = vmatpush1.xpose.msra.mxu0 %v2956
        %3467 = vmatprep.subr.mxu0 %v2953
        %3468 = vmatpush1.xpose.msra.mxu0 %v2952
        %3469 = vmatprep.subr.mxu0 %v2949
        %3470 = vmatpush1.xpose.msra.mxu0 %v2948
        %3471 = vmatprep.subr.mxu0 %v2945
        %3472 = vmatpush1.xpose.msra.mxu0 %v2944
        %3473 = vmatprep.subr.mxu0 %v2941
        %3474 = vmatpush1.xpose.msra.mxu0 %v2940
        %3475 = vmatprep.subr.mxu0 %v2937
        %3476 = vmatpush1.xpose.msra.mxu0 %v2936
        %3477 = vmatprep.subr.mxu0 %v2933
        %3478 = vmatpush1.xpose.msra.mxu0 %v2932
        %3479 = vmatprep.subr.mxu0 %v2929
        %3480 = vmatpush1.xpose.msra.mxu0 %v2928
        %3481 = vmatprep.subr.mxu0 %v2925
        %3482 = vmatpush1.xpose.msra.mxu0 %v2924
        %3483 = vmatprep.subr.mxu0 %v2921
        %3484 = vmatpush1.xpose.msra.mxu0 %v2920
        %3485 = vmatprep.subr.mxu0 %v2917
        %3486 = vmatpush1.xpose.msra.mxu0 %v2916
        %3487 = vmatprep.subr.mxu0 %v2913
        %3488 = vmatpush1.xpose.msra.mxu0 %v2912
        %3489 = vmatprep.subr.mxu0 %v2909
        %3490 = vmatpush1.xpose.msra.mxu0 %v2908
        %3491 = vmatprep.subr.mxu0 %v2905
        %3492 = vmatpush1.xpose.msra.mxu0 %v2904
        %3493 = vmatprep.subr.mxu0 %v2901
        %3494 = vmatpush1.xpose.msra.mxu0 %v2900
        %3495 = vmatprep.subr.mxu0 %v2897
        %3496 = vmatpush1.xpose.msra.mxu0 %v2896
        %3497 = vmatprep.subr.mxu0 %v3021
        %3498 = vmatpush2.xpose.msra.mxu0 %v3020
        %3499 = vmatprep.subr.mxu0 %v3017
        %3500 = vmatpush2.xpose.msra.mxu0 %v3016
        %3501 = vmatprep.subr.mxu0 %v3013
        %3502 = vmatpush2.xpose.msra.mxu0 %v3012
        %3503 = vmatprep.subr.mxu0 %v3009
        %3504 = vmatpush2.xpose.msra.mxu0 %v3008
        %3505 = vmatprep.subr.mxu0 %v3005
        %3506 = vmatpush2.xpose.msra.mxu0 %v3004
        %3507 = vmatprep.subr.mxu0 %v3001
        %3508 = vmatpush2.xpose.msra.mxu0 %v3000
        %3509 = vmatprep.subr.mxu0 %v2997
        %3510 = vmatpush2.xpose.msra.mxu0 %v2996
        %3511 = vmatprep.subr.mxu0 %v2993
        %3512 = vmatpush2.xpose.msra.mxu0 %v2992
        %3513 = vmatprep.subr.mxu0 %v2989
        %3514 = vmatpush2.xpose.msra.mxu0 %v2988
        %3515 = vmatprep.subr.mxu0 %v2985
        %3516 = vmatpush2.xpose.msra.mxu0 %v2984
        %3517 = vmatprep.subr.mxu0 %v2981
        %3518 = vmatpush2.xpose.msra.mxu0 %v2980
        %3519 = vmatprep.subr.mxu0 %v2977
        %3520 = vmatpush2.xpose.msra.mxu0 %v2976
        %3521 = vmatprep.subr.mxu0 %v2973
        %3522 = vmatpush2.xpose.msra.mxu0 %v2972
        %3523 = vmatprep.subr.mxu0 %v2969
        %3524 = vmatpush2.xpose.msra.mxu0 %v2968
        %3525 = vmatprep.subr.mxu0 %v2965
        %3526 = vmatpush2.xpose.msra.mxu0 %v2964
        %3527 = vmatprep.subr.mxu0 %v2961
        %3528 = vmatpush2.xpose.msra.mxu0 %v2960
        %3529 = vmatprep.mubr.f32.mxu0 %v2890
        %3530 = vmatmul.mubr.f32.gmra.mxu0 %v2888
        %v3531 = vpop.f32.mrf.mxu0
        %v3532 = vadd.f32 %v3461, %v3531
        %v3533 = vpop.f32.mrf.mxu0
        %v3534 = vadd.f32 %v3463, %v3533
        %3535 = vdwg.mxu0
        %3536 = vmatprep.subr.mxu0 %v3083
        %3537 = vmatpush1.xpose.msra.mxu0 %v3082
        %3538 = vmatprep.subr.mxu0 %v3079
        %3539 = vmatpush1.xpose.msra.mxu0 %v3078
        %3540 = vmatprep.subr.mxu0 %v3075
        %3541 = vmatpush1.xpose.msra.mxu0 %v3074
        %3542 = vmatprep.subr.mxu0 %v3071
        %3543 = vmatpush1.xpose.msra.mxu0 %v3070
        %3544 = vmatprep.subr.mxu0 %v3067
        %3545 = vmatpush1.xpose.msra.mxu0 %v3066
        %3546 = vmatprep.subr.mxu0 %v3063
        %3547 = vmatpush1.xpose.msra.mxu0 %v3062
        %3548 = vmatprep.subr.mxu0 %v3059
        %3549 = vmatpush1.xpose.msra.mxu0 %v3058
        %3550 = vmatprep.subr.mxu0 %v3055
        %3551 = vmatpush1.xpose.msra.mxu0 %v3054
        %3552 = vmatprep.subr.mxu0 %v3051
        %3553 = vmatpush1.xpose.msra.mxu0 %v3050
        %3554 = vmatprep.subr.mxu0 %v3047
        %3555 = vmatpush1.xpose.msra.mxu0 %v3046
        %3556 = vmatprep.subr.mxu0 %v3043
        %3557 = vmatpush1.xpose.msra.mxu0 %v3042
        %3558 = vmatprep.subr.mxu0 %v3039
        %3559 = vmatpush1.xpose.msra.mxu0 %v3038
        %3560 = vmatprep.subr.mxu0 %v3035
        %3561 = vmatpush1.xpose.msra.mxu0 %v3034
        %3562 = vmatprep.subr.mxu0 %v3031
        %3563 = vmatpush1.xpose.msra.mxu0 %v3030
        %3564 = vmatprep.subr.mxu0 %v3027
        %3565 = vmatpush1.xpose.msra.mxu0 %v3026
        %3566 = vmatprep.subr.mxu0 %v3023
        %3567 = vmatpush1.xpose.msra.mxu0 %v3022
        %3568 = vmatprep.subr.mxu0 %v3147
        %3569 = vmatpush2.xpose.msra.mxu0 %v3146
        %3570 = vmatprep.subr.mxu0 %v3143
        %3571 = vmatpush2.xpose.msra.mxu0 %v3142
        %3572 = vmatprep.subr.mxu0 %v3139
        %3573 = vmatpush2.xpose.msra.mxu0 %v3138
        %3574 = vmatprep.subr.mxu0 %v3135
        %3575 = vmatpush2.xpose.msra.mxu0 %v3134
        %3576 = vmatprep.subr.mxu0 %v3131
        %3577 = vmatpush2.xpose.msra.mxu0 %v3130
        %3578 = vmatprep.subr.mxu0 %v3127
        %3579 = vmatpush2.xpose.msra.mxu0 %v3126
        %3580 = vmatprep.subr.mxu0 %v3123
        %3581 = vmatpush2.xpose.msra.mxu0 %v3122
        %3582 = vmatprep.subr.mxu0 %v3119
        %3583 = vmatpush2.xpose.msra.mxu0 %v3118
        %3584 = vmatprep.subr.mxu0 %v3115
        %3585 = vmatpush2.xpose.msra.mxu0 %v3114
        %3586 = vmatprep.subr.mxu0 %v3111
        %3587 = vmatpush2.xpose.msra.mxu0 %v3110
        %3588 = vmatprep.subr.mxu0 %v3107
        %3589 = vmatpush2.xpose.msra.mxu0 %v3106
        %3590 = vmatprep.subr.mxu0 %v3103
        %3591 = vmatpush2.xpose.msra.mxu0 %v3102
        %3592 = vmatprep.subr.mxu0 %v3099
        %3593 = vmatpush2.xpose.msra.mxu0 %v3098
        %3594 = vmatprep.subr.mxu0 %v3095
        %3595 = vmatpush2.xpose.msra.mxu0 %v3094
        %3596 = vmatprep.subr.mxu0 %v3091
        %3597 = vmatpush2.xpose.msra.mxu0 %v3090
        %3598 = vmatprep.subr.mxu0 %v3087
        %3599 = vmatpush2.xpose.msra.mxu0 %v3086
        %3600 = vmatprep.mubr.f32.mxu0 %v2819
        %3601 = vmatmul.mubr.f32.gmra.mxu0 %v2817
        %v3602 = vpop.f32.mrf.mxu0
        %v3603 = vadd.f32 0.0, %v3602
        %v3604 = vpop.f32.mrf.mxu0
        %v3605 = vadd.f32 0.0, %v3604
        %3606 = vdwg.mxu0
        %3607 = vmatprep.subr.mxu0 %v3085
        %3608 = vmatpush1.xpose.msra.mxu0 %v3084
        %3609 = vmatprep.subr.mxu0 %v3081
        %3610 = vmatpush1.xpose.msra.mxu0 %v3080
        %3611 = vmatprep.subr.mxu0 %v3077
        %3612 = vmatpush1.xpose.msra.mxu0 %v3076
        %3613 = vmatprep.subr.mxu0 %v3073
        %3614 = vmatpush1.xpose.msra.mxu0 %v3072
        %3615 = vmatprep.subr.mxu0 %v3069
        %3616 = vmatpush1.xpose.msra.mxu0 %v3068
        %3617 = vmatprep.subr.mxu0 %v3065
        %3618 = vmatpush1.xpose.msra.mxu0 %v3064
        %3619 = vmatprep.subr.mxu0 %v3061
        %3620 = vmatpush1.xpose.msra.mxu0 %v3060
        %3621 = vmatprep.subr.mxu0 %v3057
        %3622 = vmatpush1.xpose.msra.mxu0 %v3056
        %3623 = vmatprep.subr.mxu0 %v3053
        %3624 = vmatpush1.xpose.msra.mxu0 %v3052
        %3625 = vmatprep.subr.mxu0 %v3049
        %3626 = vmatpush1.xpose.msra.mxu0 %v3048
        %3627 = vmatprep.subr.mxu0 %v3045
        %3628 = vmatpush1.xpose.msra.mxu0 %v3044
        %3629 = vmatprep.subr.mxu0 %v3041
        %3630 = vmatpush1.xpose.msra.mxu0 %v3040
        %3631 = vmatprep.subr.mxu0 %v3037
        %3632 = vmatpush1.xpose.msra.mxu0 %v3036
        %3633 = vmatprep.subr.mxu0 %v3033
        %3634 = vmatpush1.xpose.msra.mxu0 %v3032
        %3635 = vmatprep.subr.mxu0 %v3029
        %3636 = vmatpush1.xpose.msra.mxu0 %v3028
        %3637 = vmatprep.subr.mxu0 %v3025
        %3638 = vmatpush1.xpose.msra.mxu0 %v3024
        %3639 = vmatprep.subr.mxu0 %v3149
        %3640 = vmatpush2.xpose.msra.mxu0 %v3148
        %3641 = vmatprep.subr.mxu0 %v3145
        %3642 = vmatpush2.xpose.msra.mxu0 %v3144
        %3643 = vmatprep.subr.mxu0 %v3141
        %3644 = vmatpush2.xpose.msra.mxu0 %v3140
        %3645 = vmatprep.subr.mxu0 %v3137
        %3646 = vmatpush2.xpose.msra.mxu0 %v3136
        %3647 = vmatprep.subr.mxu0 %v3133
        %3648 = vmatpush2.xpose.msra.mxu0 %v3132
        %3649 = vmatprep.subr.mxu0 %v3129
        %3650 = vmatpush2.xpose.msra.mxu0 %v3128
        %3651 = vmatprep.subr.mxu0 %v3125
        %3652 = vmatpush2.xpose.msra.mxu0 %v3124
        %3653 = vmatprep.subr.mxu0 %v3121
        %3654 = vmatpush2.xpose.msra.mxu0 %v3120
        %3655 = vmatprep.subr.mxu0 %v3117
        %3656 = vmatpush2.xpose.msra.mxu0 %v3116
        %3657 = vmatprep.subr.mxu0 %v3113
        %3658 = vmatpush2.xpose.msra.mxu0 %v3112
        %3659 = vmatprep.subr.mxu0 %v3109
        %3660 = vmatpush2.xpose.msra.mxu0 %v3108
        %3661 = vmatprep.subr.mxu0 %v3105
        %3662 = vmatpush2.xpose.msra.mxu0 %v3104
        %3663 = vmatprep.subr.mxu0 %v3101
        %3664 = vmatpush2.xpose.msra.mxu0 %v3100
        %3665 = vmatprep.subr.mxu0 %v3097
        %3666 = vmatpush2.xpose.msra.mxu0 %v3096
        %3667 = vmatprep.subr.mxu0 %v3093
        %3668 = vmatpush2.xpose.msra.mxu0 %v3092
        %3669 = vmatprep.subr.mxu0 %v3089
        %3670 = vmatpush2.xpose.msra.mxu0 %v3088
        %3671 = vmatprep.mubr.f32.mxu0 %v2890
        %3672 = vmatmul.mubr.f32.gmra.mxu0 %v2888
        %v3673 = vpop.f32.mrf.mxu0
        %v3674 = vadd.f32 %v3603, %v3673
        %v3675 = vpop.f32.mrf.mxu0
        %v3676 = vadd.f32 %v3605, %v3675
        %3677 = vdwg.mxu0
        %3678 = vmatprep.subr.mxu0 %v3211
        %3679 = vmatpush1.xpose.msra.mxu0 %v3210
        %3680 = vmatprep.subr.mxu0 %v3207
        %3681 = vmatpush1.xpose.msra.mxu0 %v3206
        %3682 = vmatprep.subr.mxu0 %v3203
        %3683 = vmatpush1.xpose.msra.mxu0 %v3202
        %3684 = vmatprep.subr.mxu0 %v3199
        %3685 = vmatpush1.xpose.msra.mxu0 %v3198
        %3686 = vmatprep.subr.mxu0 %v3195
        %3687 = vmatpush1.xpose.msra.mxu0 %v3194
        %3688 = vmatprep.subr.mxu0 %v3191
        %3689 = vmatpush1.xpose.msra.mxu0 %v3190
        %3690 = vmatprep.subr.mxu0 %v3187
        %3691 = vmatpush1.xpose.msra.mxu0 %v3186
        %3692 = vmatprep.subr.mxu0 %v3183
        %3693 = vmatpush1.xpose.msra.mxu0 %v3182
        %3694 = vmatprep.subr.mxu0 %v3179
        %3695 = vmatpush1.xpose.msra.mxu0 %v3178
        %3696 = vmatprep.subr.mxu0 %v3175
        %3697 = vmatpush1.xpose.msra.mxu0 %v3174
        %3698 = vmatprep.subr.mxu0 %v3171
        %3699 = vmatpush1.xpose.msra.mxu0 %v3170
        %3700 = vmatprep.subr.mxu0 %v3167
        %3701 = vmatpush1.xpose.msra.mxu0 %v3166
        %3702 = vmatprep.subr.mxu0 %v3163
        %3703 = vmatpush1.xpose.msra.mxu0 %v3162
        %3704 = vmatprep.subr.mxu0 %v3159
        %3705 = vmatpush1.xpose.msra.mxu0 %v3158
        %3706 = vmatprep.subr.mxu0 %v3155
        %3707 = vmatpush1.xpose.msra.mxu0 %v3154
        %3708 = vmatprep.subr.mxu0 %v3151
        %3709 = vmatpush1.xpose.msra.mxu0 %v3150
        %3710 = vmatprep.subr.mxu0 %v3275
        %3711 = vmatpush2.xpose.msra.mxu0 %v3274
        %3712 = vmatprep.subr.mxu0 %v3271
        %3713 = vmatpush2.xpose.msra.mxu0 %v3270
        %3714 = vmatprep.subr.mxu0 %v3267
        %3715 = vmatpush2.xpose.msra.mxu0 %v3266
        %3716 = vmatprep.subr.mxu0 %v3263
        %3717 = vmatpush2.xpose.msra.mxu0 %v3262
        %3718 = vmatprep.subr.mxu0 %v3259
        %3719 = vmatpush2.xpose.msra.mxu0 %v3258
        %3720 = vmatprep.subr.mxu0 %v3255
        %3721 = vmatpush2.xpose.msra.mxu0 %v3254
        %3722 = vmatprep.subr.mxu0 %v3251
        %3723 = vmatpush2.xpose.msra.mxu0 %v3250
        %3724 = vmatprep.subr.mxu0 %v3247
        %3725 = vmatpush2.xpose.msra.mxu0 %v3246
        %3726 = vmatprep.subr.mxu0 %v3243
        %3727 = vmatpush2.xpose.msra.mxu0 %v3242
        %3728 = vmatprep.subr.mxu0 %v3239
        %3729 = vmatpush2.xpose.msra.mxu0 %v3238
        %3730 = vmatprep.subr.mxu0 %v3235
        %3731 = vmatpush2.xpose.msra.mxu0 %v3234
        %3732 = vmatprep.subr.mxu0 %v3231
        %3733 = vmatpush2.xpose.msra.mxu0 %v3230
        %3734 = vmatprep.subr.mxu0 %v3227
        %3735 = vmatpush2.xpose.msra.mxu0 %v3226
        %3736 = vmatprep.subr.mxu0 %v3223
        %3737 = vmatpush2.xpose.msra.mxu0 %v3222
        %3738 = vmatprep.subr.mxu0 %v3219
        %3739 = vmatpush2.xpose.msra.mxu0 %v3218
        %3740 = vmatprep.subr.mxu0 %v3215
        %3741 = vmatpush2.xpose.msra.mxu0 %v3214
        %3742 = vmatprep.mubr.f32.mxu0 %v2819
        %3743 = vmatmul.mubr.f32.gmra.mxu0 %v2817
        %v3744 = vpop.f32.mrf.mxu0
        %v3745 = vadd.f32 0.0, %v3744
        %v3746 = vpop.f32.mrf.mxu0
        %v3747 = vadd.f32 0.0, %v3746
        %3748 = vdwg.mxu0
        %3749 = vmatprep.subr.mxu0 %v3213
        %3750 = vmatpush1.xpose.msra.mxu0 %v3212
        %3751 = vmatprep.subr.mxu0 %v3209
        %3752 = vmatpush1.xpose.msra.mxu0 %v3208
        %3753 = vmatprep.subr.mxu0 %v3205
        %3754 = vmatpush1.xpose.msra.mxu0 %v3204
        %3755 = vmatprep.subr.mxu0 %v3201
        %3756 = vmatpush1.xpose.msra.mxu0 %v3200
        %3757 = vmatprep.subr.mxu0 %v3197
        %3758 = vmatpush1.xpose.msra.mxu0 %v3196
        %3759 = vmatprep.subr.mxu0 %v3193
        %3760 = vmatpush1.xpose.msra.mxu0 %v3192
        %3761 = vmatprep.subr.mxu0 %v3189
        %3762 = vmatpush1.xpose.msra.mxu0 %v3188
        %3763 = vmatprep.subr.mxu0 %v3185
        %3764 = vmatpush1.xpose.msra.mxu0 %v3184
        %3765 = vmatprep.subr.mxu0 %v3181
        %3766 = vmatpush1.xpose.msra.mxu0 %v3180
        %3767 = vmatprep.subr.mxu0 %v3177
        %3768 = vmatpush1.xpose.msra.mxu0 %v3176
        %3769 = vmatprep.subr.mxu0 %v3173
        %3770 = vmatpush1.xpose.msra.mxu0 %v3172
        %3771 = vmatprep.subr.mxu0 %v3169
        %3772 = vmatpush1.xpose.msra.mxu0 %v3168
        %3773 = vmatprep.subr.mxu0 %v3165
        %3774 = vmatpush1.xpose.msra.mxu0 %v3164
        %3775 = vmatprep.subr.mxu0 %v3161
        %3776 = vmatpush1.xpose.msra.mxu0 %v3160
        %3777 = vmatprep.subr.mxu0 %v3157
        %3778 = vmatpush1.xpose.msra.mxu0 %v3156
        %3779 = vmatprep.subr.mxu0 %v3153
        %3780 = vmatpush1.xpose.msra.mxu0 %v3152
        %3781 = vmatprep.subr.mxu0 %v3277
        %3782 = vmatpush2.xpose.msra.mxu0 %v3276
        %3783 = vmatprep.subr.mxu0 %v3273
        %3784 = vmatpush2.xpose.msra.mxu0 %v3272
        %3785 = vmatprep.subr.mxu0 %v3269
        %3786 = vmatpush2.xpose.msra.mxu0 %v3268
        %3787 = vmatprep.subr.mxu0 %v3265
        %3788 = vmatpush2.xpose.msra.mxu0 %v3264
        %3789 = vmatprep.subr.mxu0 %v3261
        %3790 = vmatpush2.xpose.msra.mxu0 %v3260
        %3791 = vmatprep.subr.mxu0 %v3257
        %3792 = vmatpush2.xpose.msra.mxu0 %v3256
        %3793 = vmatprep.subr.mxu0 %v3253
        %3794 = vmatpush2.xpose.msra.mxu0 %v3252
        %3795 = vmatprep.subr.mxu0 %v3249
        %3796 = vmatpush2.xpose.msra.mxu0 %v3248
        %3797 = vmatprep.subr.mxu0 %v3245
        %3798 = vmatpush2.xpose.msra.mxu0 %v3244
        %3799 = vmatprep.subr.mxu0 %v3241
        %3800 = vmatpush2.xpose.msra.mxu0 %v3240
        %3801 = vmatprep.subr.mxu0 %v3237
        %3802 = vmatpush2.xpose.msra.mxu0 %v3236
        %3803 = vmatprep.subr.mxu0 %v3233
        %3804 = vmatpush2.xpose.msra.mxu0 %v3232
        %3805 = vmatprep.subr.mxu0 %v3229
        %3806 = vmatpush2.xpose.msra.mxu0 %v3228
        %3807 = vmatprep.subr.mxu0 %v3225
        %3808 = vmatpush2.xpose.msra.mxu0 %v3224
        %3809 = vmatprep.subr.mxu0 %v3221
        %3810 = vmatpush2.xpose.msra.mxu0 %v3220
        %3811 = vmatprep.subr.mxu0 %v3217
        %3812 = vmatpush2.xpose.msra.mxu0 %v3216
        %3813 = vmatprep.mubr.f32.mxu0 %v2890
        %3814 = vmatmul.mubr.f32.gmra.mxu0 %v2888
        %v3815 = vpop.f32.mrf.mxu0
        %v3816 = vadd.f32 %v3745, %v3815
        %v3817 = vpop.f32.mrf.mxu0
        %v3818 = vadd.f32 %v3747, %v3817
        %3819 = vdwg.mxu0
        %3820 = vmatprep.subr.mxu0 %v3339
        %3821 = vmatpush1.xpose.msra.mxu0 %v3338
        %3822 = vmatprep.subr.mxu0 %v3335
        %3823 = vmatpush1.xpose.msra.mxu0 %v3334
        %3824 = vmatprep.subr.mxu0 %v3331
        %3825 = vmatpush1.xpose.msra.mxu0 %v3330
        %3826 = vmatprep.subr.mxu0 %v3327
        %3827 = vmatpush1.xpose.msra.mxu0 %v3326
        %3828 = vmatprep.subr.mxu0 %v3323
        %3829 = vmatpush1.xpose.msra.mxu0 %v3322
        %3830 = vmatprep.subr.mxu0 %v3319
        %3831 = vmatpush1.xpose.msra.mxu0 %v3318
        %3832 = vmatprep.subr.mxu0 %v3315
        %3833 = vmatpush1.xpose.msra.mxu0 %v3314
        %3834 = vmatprep.subr.mxu0 %v3311
        %3835 = vmatpush1.xpose.msra.mxu0 %v3310
        %3836 = vmatprep.subr.mxu0 %v3307
        %3837 = vmatpush1.xpose.msra.mxu0 %v3306
        %3838 = vmatprep.subr.mxu0 %v3303
        %3839 = vmatpush1.xpose.msra.mxu0 %v3302
        %3840 = vmatprep.subr.mxu0 %v3299
        %3841 = vmatpush1.xpose.msra.mxu0 %v3298
        %3842 = vmatprep.subr.mxu0 %v3295
        %3843 = vmatpush1.xpose.msra.mxu0 %v3294
        %3844 = vmatprep.subr.mxu0 %v3291
        %3845 = vmatpush1.xpose.msra.mxu0 %v3290
        %3846 = vmatprep.subr.mxu0 %v3287
        %3847 = vmatpush1.xpose.msra.mxu0 %v3286
        %3848 = vmatprep.subr.mxu0 %v3283
        %3849 = vmatpush1.xpose.msra.mxu0 %v3282
        %3850 = vmatprep.subr.mxu0 %v3279
        %3851 = vmatpush1.xpose.msra.mxu0 %v3278
        %3852 = vmatprep.subr.mxu0 0.0
        %3853 = vmatpush2.xpose.msra.mxu0 0.0
        %3854 = vmatprep.subr.mxu0 0.0
        %3855 = vmatpush2.xpose.msra.mxu0 0.0
        %3856 = vmatprep.subr.mxu0 0.0
        %3857 = vmatpush2.xpose.msra.mxu0 0.0
        %3858 = vmatprep.subr.mxu0 %v3391
        %3859 = vmatpush2.xpose.msra.mxu0 %v3390
        %3860 = vmatprep.subr.mxu0 %v3387
        %3861 = vmatpush2.xpose.msra.mxu0 %v3386
        %3862 = vmatprep.subr.mxu0 %v3383
        %3863 = vmatpush2.xpose.msra.mxu0 %v3382
        %3864 = vmatprep.subr.mxu0 %v3379
        %3865 = vmatpush2.xpose.msra.mxu0 %v3378
        %3866 = vmatprep.subr.mxu0 %v3375
        %3867 = vmatpush2.xpose.msra.mxu0 %v3374
        %3868 = vmatprep.subr.mxu0 %v3371
        %3869 = vmatpush2.xpose.msra.mxu0 %v3370
        %3870 = vmatprep.subr.mxu0 %v3367
        %3871 = vmatpush2.xpose.msra.mxu0 %v3366
        %3872 = vmatprep.subr.mxu0 %v3363
        %3873 = vmatpush2.xpose.msra.mxu0 %v3362
        %3874 = vmatprep.subr.mxu0 %v3359
        %3875 = vmatpush2.xpose.msra.mxu0 %v3358
        %3876 = vmatprep.subr.mxu0 %v3355
        %3877 = vmatpush2.xpose.msra.mxu0 %v3354
        %3878 = vmatprep.subr.mxu0 %v3351
        %3879 = vmatpush2.xpose.msra.mxu0 %v3350
        %3880 = vmatprep.subr.mxu0 %v3347
        %3881 = vmatpush2.xpose.msra.mxu0 %v3346
        %3882 = vmatprep.subr.mxu0 %v3343
        %3883 = vmatpush2.xpose.msra.mxu0 %v3342
        %3884 = vmatprep.mubr.f32.mxu0 %v2819
        %3885 = vmatmul.mubr.f32.gmra.mxu0 %v2817
        %v3886 = vpop.f32.mrf.mxu0
        %v3887 = vadd.f32 0.0, %v3886
        %v3888 = vpop.f32.mrf.mxu0
        %v3889 = vadd.f32 0.0, %v3888
        %3890 = vdwg.mxu0
        %3891 = vmatprep.subr.mxu0 %v3341
        %3892 = vmatpush1.xpose.msra.mxu0 %v3340
        %3893 = vmatprep.subr.mxu0 %v3337
        %3894 = vmatpush1.xpose.msra.mxu0 %v3336
        %3895 = vmatprep.subr.mxu0 %v3333
        %3896 = vmatpush1.xpose.msra.mxu0 %v3332
        %3897 = vmatprep.subr.mxu0 %v3329
        %3898 = vmatpush1.xpose.msra.mxu0 %v3328
        %3899 = vmatprep.subr.mxu0 %v3325
        %3900 = vmatpush1.xpose.msra.mxu0 %v3324
        %3901 = vmatprep.subr.mxu0 %v3321
        %3902 = vmatpush1.xpose.msra.mxu0 %v3320
        %3903 = vmatprep.subr.mxu0 %v3317
        %3904 = vmatpush1.xpose.msra.mxu0 %v3316
        %3905 = vmatprep.subr.mxu0 %v3313
        %3906 = vmatpush1.xpose.msra.mxu0 %v3312
        %3907 = vmatprep.subr.mxu0 %v3309
        %3908 = vmatpush1.xpose.msra.mxu0 %v3308
        %3909 = vmatprep.subr.mxu0 %v3305
        %3910 = vmatpush1.xpose.msra.mxu0 %v3304
        %3911 = vmatprep.subr.mxu0 %v3301
        %3912 = vmatpush1.xpose.msra.mxu0 %v3300
        %3913 = vmatprep.subr.mxu0 %v3297
        %3914 = vmatpush1.xpose.msra.mxu0 %v3296
        %3915 = vmatprep.subr.mxu0 %v3293
        %3916 = vmatpush1.xpose.msra.mxu0 %v3292
        %3917 = vmatprep.subr.mxu0 %v3289
        %3918 = vmatpush1.xpose.msra.mxu0 %v3288
        %3919 = vmatprep.subr.mxu0 %v3285
        %3920 = vmatpush1.xpose.msra.mxu0 %v3284
        %3921 = vmatprep.subr.mxu0 %v3281
        %3922 = vmatpush1.xpose.msra.mxu0 %v3280
        %3923 = vmatprep.subr.mxu0 0.0
        %3924 = vmatpush2.xpose.msra.mxu0 0.0
        %3925 = vmatprep.subr.mxu0 0.0
        %3926 = vmatpush2.xpose.msra.mxu0 0.0
        %3927 = vmatprep.subr.mxu0 0.0
        %3928 = vmatpush2.xpose.msra.mxu0 0.0
        %3929 = vmatprep.subr.mxu0 %v3393
        %3930 = vmatpush2.xpose.msra.mxu0 %v3392
        %3931 = vmatprep.subr.mxu0 %v3389
        %3932 = vmatpush2.xpose.msra.mxu0 %v3388
        %3933 = vmatprep.subr.mxu0 %v3385
        %3934 = vmatpush2.xpose.msra.mxu0 %v3384
        %3935 = vmatprep.subr.mxu0 %v3381
        %3936 = vmatpush2.xpose.msra.mxu0 %v3380
        %3937 = vmatprep.subr.mxu0 %v3377
        %3938 = vmatpush2.xpose.msra.mxu0 %v3376
        %3939 = vmatprep.subr.mxu0 %v3373
        %3940 = vmatpush2.xpose.msra.mxu0 %v3372
        %3941 = vmatprep.subr.mxu0 %v3369
        %3942 = vmatpush2.xpose.msra.mxu0 %v3368
        %3943 = vmatprep.subr.mxu0 %v3365
        %3944 = vmatpush2.xpose.msra.mxu0 %v3364
        %3945 = vmatprep.subr.mxu0 %v3361
        %3946 = vmatpush2.xpose.msra.mxu0 %v3360
        %3947 = vmatprep.subr.mxu0 %v3357
        %3948 = vmatpush2.xpose.msra.mxu0 %v3356
        %3949 = vmatprep.subr.mxu0 %v3353
        %3950 = vmatpush2.xpose.msra.mxu0 %v3352
        %3951 = vmatprep.subr.mxu0 %v3349
        %3952 = vmatpush2.xpose.msra.mxu0 %v3348
        %3953 = vmatprep.subr.mxu0 %v3345
        %3954 = vmatpush2.xpose.msra.mxu0 %v3344
        %3955 = vmatprep.mubr.f32.mxu0 %v2890
        %3956 = vmatmul.mubr.f32.gmra.mxu0 %v2888
        %v3957 = vpop.f32.mrf.mxu0
        %v3958 = vadd.f32 %v3887, %v3957
        %v3959 = vpop.f32.mrf.mxu0
        %v3960 = vadd.f32 %v3889, %v3959
        %3961 = vdwg.mxu0
        %v3970 = vcombine.low %v3532, %v3534
        %v3971 = vcombine.low %v3674, %v3676
        %v3973 = vunpack.c.l.s4 1983009808
        %v3974 = vunpack.c.0.s8 %v3973
        %v3975 = vlaneseq
        %v3976 = vshrl.u32 %v3975, 7
        %v3977 = vsub.s32 %v3974, %v3976
        %v3978 = vrot.slane %v3970, %v3977
        %v3980 = vunpack.c.l.s4 1983009808
        %v3981 = vunpack.c.0.s8 %v3980
        %v3982 = vlaneseq
        %v3983 = vshrl.u32 %v3982, 7
        %v3984 = vsub.s32 %v3981, %v3983
        %v3985 = vrot.slane %v3971, %v3984
        %v3986 = vcombine.low %v3978, %v3985
        %v3987 = vcombine.low %v3816, %v3818
        %v3988 = vcombine.low %v3958, %v3960
        %v3990 = vunpack.c.l.s4 1983009808
        %v3991 = vunpack.c.0.s8 %v3990
        %v3992 = vlaneseq
        %v3993 = vshrl.u32 %v3992, 7
        %v3994 = vsub.s32 %v3991, %v3993
        %v3995 = vrot.slane %v3987, %v3994
        %v3997 = vunpack.c.l.s4 1983009808
        %v3998 = vunpack.c.0.s8 %v3997
        %v3999 = vlaneseq
        %v4000 = vshrl.u32 %v3999, 7
        %v4001 = vsub.s32 %v3998, %v4000
        %v4002 = vrot.slane %v3988, %v4001
        %v4003 = vcombine.low %v3995, %v4002
        %v4006 = vadd.f32 %v2892, %v3986
        %v4007 = vadd.f32 %v2893, %v4003
        %4008 = vst [vmem:[#allocation3] sm:$0xff] %v4006
        %vm4009 = vcmask 1043458
        %vm4010 = vmor %vm4009, %vm2251
        %vm4011 = vcmask 1045508
        %vm4012 = vmor %vm4011, %vm4010
        %vm4013 = vcmask 850950
        %vm4014 = vmor %vm4013, %vm4012
        %4015 = vst.msk [vmem:[#allocation3 + $0x8] sm:$0xff] %vm4014, %v4007
        %p4016 = scmp.eq.s32.totalorder %s19, 3
        // Predicated region
        $region76: #{mini50_forward.1} parent=66 // pred_check
          %p4017 = pneg %p4016
        $region77: #{mini50_forward.1} parent=66 // pred_check_branch
          %4019 = sbr.rel (%p4017) target = $region79
        $region78: #{mini50_forward.1} parent=66 // pred_region
          %v4020 = vld [vmem:[#allocation3] sm:$0xff]
          %v4021 = vld [vmem:[#allocation3 + $0x8] sm:$0xff]
          %v4022 = vld [vmem:[%s6] sm:$0xff]
          %v4024 = vlaneseq
          %v4025 = vshrl.u32 %v4024, 7
          %v4026 = vsub.s32 0, %v4025
          %v4027 = vrot.slane %v4022, %v4026
          %v4028 = vlaneseq
          %v4029 = vshrl.u32 %v4028, 7
          %v4030 = vsub.s32 1, %v4029
          %v4031 = vrot.slane %v4022, %v4030
          %v4032 = vlaneseq
          %v4033 = vshrl.u32 %v4032, 7
          %v4034 = vsub.s32 2, %v4033
          %v4035 = vrot.slane %v4022, %v4034
          %v4036 = vlaneseq
          %v4037 = vshrl.u32 %v4036, 7
          %v4038 = vsub.s32 3, %v4037
          %v4039 = vrot.slane %v4022, %v4038
          %v4040 = vlaneseq
          %v4041 = vshrl.u32 %v4040, 7
          %v4042 = vsub.s32 4, %v4041
          %v4043 = vrot.slane %v4022, %v4042
          %v4044 = vlaneseq
          %v4045 = vshrl.u32 %v4044, 7
          %v4046 = vsub.s32 5, %v4045
          %v4047 = vrot.slane %v4022, %v4046
          %v4048 = vlaneseq
          %v4049 = vshrl.u32 %v4048, 7
          %v4050 = vsub.s32 6, %v4049
          %v4051 = vrot.slane %v4022, %v4050
          %v4052 = vlaneseq
          %v4053 = vshrl.u32 %v4052, 7
          %v4054 = vsub.s32 7, %v4053
          %v4055 = vrot.slane %v4022, %v4054
          %v4056 = vcombine.low %v4027, %v4031
          %v4057 = vcombine.low %v4035, %v4039
          %v4059 = vunpack.c.l.s4 1983009808
          %v4060 = vunpack.c.0.s8 %v4059
          %v4061 = vlaneseq
          %v4062 = vshrl.u32 %v4061, 7
          %v4063 = vsub.s32 %v4060, %v4062
          %v4064 = vrot.slane %v4056, %v4063
          %v4066 = vunpack.c.l.s4 1983009808
          %v4067 = vunpack.c.0.s8 %v4066
          %v4068 = vlaneseq
          %v4069 = vshrl.u32 %v4068, 7
          %v4070 = vsub.s32 %v4067, %v4069
          %v4071 = vrot.slane %v4057, %v4070
          %v4072 = vcombine.low %v4064, %v4071
          %v4073 = vcombine.low %v4043, %v4047
          %v4074 = vcombine.low %v4051, %v4055
          %v4076 = vunpack.c.l.s4 1983009808
          %v4077 = vunpack.c.0.s8 %v4076
          %v4078 = vlaneseq
          %v4079 = vshrl.u32 %v4078, 7
          %v4080 = vsub.s32 %v4077, %v4079
          %v4081 = vrot.slane %v4073, %v4080
          %v4083 = vunpack.c.l.s4 1983009808
          %v4084 = vunpack.c.0.s8 %v4083
          %v4085 = vlaneseq
          %v4086 = vshrl.u32 %v4085, 7
          %v4087 = vsub.s32 %v4084, %v4086
          %v4088 = vrot.slane %v4074, %v4087
          %v4089 = vcombine.low %v4081, %v4088
          %v4092 = vadd.f32 %v4020, %v4072
          %v4093 = vadd.f32 %v4021, %v4089
          %4094 = vst [vmem:[#allocation3] sm:$0xff] %v4092
          %4095 = vst.msk [vmem:[#allocation3 + $0x8] sm:$0xff] %vm4014, %v4093
        $region79: #{mini50_forward.1} parent=66 // pred_fallthru
          _
        // Predicated region
        $region80: #{mini50_forward.1} parent=66 // pred_check
          %p4096 = pneg %p199
        $region81: #{mini50_forward.1} parent=66 // pred_check_branch
          %4098 = sbr.rel (%p4096) target = $region83
        $region82: #{mini50_forward.1} parent=66 // pred_region
          %s4100 = ssub.s32 256, 256
          %4101 = vsyncadd [#allocation4], %s4100
          %s4103 = sshll.u32 [#allocation3], 4
          %s4104 = int_to_ptr.vmem [resolvable:$true] %s4103
          %4106 = dma.vmem_to_hbm [thread:$0]  %s4104, 256, %s7, [#allocation4]
        $region83: #{mini50_forward.1} parent=66 // pred_fallthru
          _
        // Predicated region
        $region84: #{mini50_forward.1} parent=66 // pred_check
          %p4107 = pneg %p199
        $region85: #{mini50_forward.1} parent=66 // pred_check_branch
          %4109 = sbr.rel (%p4107) target = $region87
        $region86: #{mini50_forward.1} parent=66 // pred_region
          %4110 = dma.done [#allocation4], 256
        $region87: #{mini50_forward.1} parent=66 // pred_fallthru
          _
      $region67: #{mini50_forward.1} parent=5 // pred_fallthru
        _
      %p4111 = scmp.le.s32.totalorder 2, %s14
      // Predicated region
      $region88: #{mini50_forward.1} parent=5 // pred_check
        %p4112 = pneg %p4111
      $region89: #{mini50_forward.1} parent=5 // pred_check_branch
        %4114 = sbr.rel (%p4112) target = $region91
      $region90: #{mini50_forward.1} parent=5 // pred_region
        %s4115 = ssub.s32 %s14, 2
      $region91: #{mini50_forward.1} parent=5 // pred_fallthru
        _
    $region6: #{mini50_forward.1} parent=1 // loop_footer
      %s18 = sadd.s32 1, %s14
    $region7: #{mini50_forward.1} parent=1 // loop_footer_branch
      %13 = sbr.rel target = $region3
    $region8: #{mini50_forward.1} parent=1 // loop_exit
      _
    %4116 = vsyncpa [#allocation4], 1
    %s4117 = scalar_lea.sflag [#allocation4], 1
    %4118 = vsyncpa %s4117, 1

</llo_original>
